<compile_context>
chip_gen: v7x
topology: tpu7x:2x2x1
jax: 0.10.0
libtpu: 0.0.40
codegen_flags: <defaults>
</compile_context>

<pallas_src>
import jax
import jax.numpy as jnp
from jax.experimental import pallas as pl
from jax.experimental.pallas import tpu as pltpu

K = 7
PAD = (K - 1) // 2

# MXU operand dtype for the two big 1x1-conv matmuls (f32 accumulation via
# preferred_element_type).  Set to jnp.float32 for bit-tight numerics.
MATMUL_DTYPE = jnp.bfloat16


def _make_kernel(C):
    """Kernel closure over the (static) channel count C."""

    def kernel(x_ref,                   # (1, H, W*C)
               taps1_ref, taps2_ref,    # (K*K, W*C) depthwise taps, tiled over w
               vecs_ref,                # (8, W*C): bn1_s, bn1_b, bng_s, bng_b,
                                        #           dw2_b, hw, se_b2, se_b1(pad)
               se_w1_ref,               # (W*C, CR)  (includes the /W avg fold)
               se_w2_ref,               # (CR, W*C)  (tiled over w)
               f12_w_ref,               # (W*C, 2*W*M) block-diag f1|f2, bf16
               f12_b_ref,               # (1, 2*W*M)
               g_w_ref,                 # (W*M, W*C) block-diag g, bf16
               out_ref,                 # (1, H, W*C)
               pad_ref):                # scratch (HP, WPC) f32, shared by both convs
        H, WC = x_ref.shape[1], x_ref.shape[2]
        WPC = pad_ref.shape[1]
        CR = se_w1_ref.shape[1]
        WM = f12_w_ref.shape[1] // 2

        x_in = x_ref[0]                                  # (H, WC), lane-dense

        # Padded scratch layout: image rows live at [PAD, PAD+H), lanes [0, WC);
        # everything else stays zero.  The left/right conv halo is realized via
        # the zero lanes [WC, WPC) through modular lane rotation (pltpu.roll),
        # so all loads/stores below are lane-aligned.  Zeroed every grid step
        # (one aligned full store; megacore-safe — do NOT gate on program_id).
        pad_ref[...] = jnp.zeros(pad_ref.shape, jnp.float32)

        def dwconv7x7(src, taps_ref):
            # zero-padded depthwise "same" 7x7 conv on the (w,c)-packed image:
            # 49 shifted multiply-adds; kw shift = XLU lane rotation.
            pad_ref[PAD:PAD + H, 0:WC] = src
            acc = jnp.zeros((H, WC), jnp.float32)
            for kh in range(K):
                rows = pad_ref[kh:kh + H, :]             # (H, WPC)
                for kw in range(K):
                    shift = ((PAD - kw) * C) % WPC       # static int
                    shifted = pltpu.roll(rows, shift=shift, axis=1) if shift else rows
                    idx = kh * K + kw
                    acc = acc + shifted[:, 0:WC] * taps_ref[idx:idx + 1, :]
            return acc

        # 1) depthwise 7x7 (bias=False); eval-mode BN is folded into the
        #    single per-(w,c) affine sweep together with the SE gate below.
        acc1 = dwconv7x7(x_in, taps1_ref)                # (H, WC)

        bn1_s = vecs_ref[0:1, :]
        bn1_b = vecs_ref[1:2, :]

        # 2) SE gate.  mean∘BN == BN∘mean (eval BN is affine); the average over
        #    the packed w positions is folded into se_w1 (rows pre-divided by W).
        colmean = jnp.mean(acc1, axis=0, keepdims=True)  # (1, WC)
        pooled_y = colmean * bn1_s + bn1_b
        h1 = jnp.dot(pooled_y, se_w1_ref[...], preferred_element_type=jnp.float32)
        h1 = jnp.maximum(h1 + vecs_ref[7:8, 0:CR], 0.0)  # (1, CR)
        gate = jax.nn.sigmoid(
            jnp.dot(h1, se_w2_ref[...], preferred_element_type=jnp.float32)
            + vecs_ref[6:7, :])                          # (1, WC), constant over w

        # BN + SE gate as ONE affine: gate*(s*x + b) == x*(s*gate) + b*gate
        yf = acc1 * (bn1_s * gate) + bn1_b * gate        # (H, WC)

        # 3) fused f1|f2 as one block-diagonal matmul (bf16 operands, f32 acc);
        #    output columns: [f1 packed (W*M) | f2 packed (W*M)] -> aligned slices.
        x12 = jnp.dot(yf.astype(MATMUL_DTYPE), f12_w_ref[...],
                      preferred_element_type=jnp.float32) + f12_b_ref[...]
        z = jnp.clip(x12[:, :WM], 0.0, 6.0) * x12[:, WM:]          # (H, W*M)

        # 4) g (1x1, no bias) as a block-diagonal matmul + folded BN.
        z = jnp.dot(z.astype(MATMUL_DTYPE), g_w_ref[...],
                    preferred_element_type=jnp.float32)            # (H, WC)
        z = z * vecs_ref[2:3, :] + vecs_ref[3:4, :]

        # 5) dwconv2 (with bias), hidden_weight scale, residual (drop_path = Id).
        z = dwconv7x7(z, taps2_ref) + vecs_ref[4:5, :]
        out_ref[0] = (x_in + z * vecs_ref[5:6, :]).astype(out_ref.dtype)

    return kernel


def _prepare_params(p, W):
    """Fuse / repack raw parameters for the packed (w*C + c) lane layout."""
    f32 = jnp.float32
    C = p["hw"].shape[0]
    M = p["f1_w"].shape[1]
    CR = p["se_w1"].shape[1]
    WC = W * C

    def tile_c(v):                                  # per-channel -> (1, W*C)
        return jnp.tile(jnp.asarray(v, f32).reshape(1, C), (1, W))

    taps1 = jnp.tile(p["dw1_w"].reshape(K * K, C).astype(f32), (1, W))
    taps2 = jnp.tile(p["dw2_w"].reshape(K * K, C).astype(f32), (1, W))

    se_b1_row = jnp.zeros((1, WC), f32).at[0, :CR].set(p["se_b1"].astype(f32))
    vecs = jnp.concatenate([
        tile_c(p["bn1_s"]), tile_c(p["bn1_b"]),
        tile_c(p["bng_s"]), tile_c(p["bng_b"]),
        tile_c(p["dw2_b"]), tile_c(p["hw"]),
        tile_c(p["se_b2"]), se_b1_row,
    ], axis=0)                                      # (8, WC) -- one vreg

    se_w1_fold = jnp.tile(p["se_w1"].astype(f32) / W, (W, 1))    # (WC, CR)
    se_w2_t = jnp.tile(p["se_w2"].astype(f32), (1, W))           # (CR, WC)

    eye_w = jnp.eye(W, dtype=f32)
    big_f1 = jnp.einsum("wv,cm->wcvm", eye_w, p["f1_w"].astype(f32)).reshape(WC, W * M)
    big_f2 = jnp.einsum("wv,cm->wcvm", eye_w, p["f2_w"].astype(f32)).reshape(WC, W * M)
    f12_w_big = jnp.concatenate([big_f1, big_f2], axis=1).astype(MATMUL_DTYPE)
    f12_b = jnp.concatenate(
        [jnp.tile(p["f1_b"].reshape(1, M).astype(f32), (1, W)),
         jnp.tile(p["f2_b"].reshape(1, M).astype(f32), (1, W))], axis=1)  # (1, 2WM)
    g_w_big = jnp.einsum("wv,mc->wmvc", eye_w, p["g_w"].astype(f32)
                         ).reshape(W * M, WC).astype(MATMUL_DTYPE)

    return [taps1, taps2, vecs, se_w1_fold, se_w2_t, f12_w_big, f12_b, g_w_big]


def adaptive_star_block(x_nchw, params):
    B, C, H, W = x_nchw.shape
    WC = W * C
    # Demo-size assumptions: packed width lane-dense; conv halo fits in one
    # extra 128-lane zero group.
    # TODO(synk): for W*C not a multiple of 128, or large H (v7x 64 MiB VMEM),
    # pad WC up to 128 and add an H row-tile "parallel" grid axis with halo
    # exchange + a two-pass SE mean.
    assert WC % 128 == 0 and 2 * PAD * C <= 128, "demo kernel expects W*C % 128 == 0"

    # NCHW -> (B, H, W*C) lane-dense packing.  The transposes are interface-
    # only (the module is NCHW); in an NHWC model they vanish and the reshape
    # is free.
    x = jnp.transpose(x_nchw, (0, 2, 3, 1)).reshape(B, H, WC).astype(jnp.float32)
    args = _prepare_params(params, W)

    WPC = WC + 128                          # zero lanes [WC, WPC) = conv halo via rotation
    HP = ((H + 2 * PAD + 7) // 8) * 8       # padded rows, rounded to a sublane tile

    kernel = _make_kernel(C)

    in_specs = [pl.BlockSpec((1, H, WC), lambda b: (b, 0, 0))]
    for a in args:
        in_specs.append(pl.BlockSpec(a.shape, lambda b, _nd=a.ndim: (0,) * _nd))

    out = pl.pallas_call(
        kernel,
        out_shape=jax.ShapeDtypeStruct((B, H, WC), jnp.float32),
        grid=(B,),
        in_specs=in_specs,
        out_specs=pl.BlockSpec((1, H, WC), lambda b: (b, 0, 0)),
        scratch_shapes=[pltpu.VMEM((HP, WPC), jnp.float32)],
        compiler_params=pltpu.CompilerParams(
            dimension_semantics=("parallel",),
            vmem_limit_bytes=32 * 1024 * 1024,
        ),
    )(x, *args)

    return jnp.transpose(out.reshape(B, H, W, C), (0, 3, 1, 2))    # -> NCHW


def init_params(key, dim, mlp_ratio=3, reduction=4, eps=1e-5):
    """Deterministic synthetic parameters (shapes from the module __init__);
    BatchNorm running stats folded into per-channel scale/bias (eval mode)."""
    cr = max(dim // reduction, 1)
    m = mlp_ratio * dim
    keys = jax.random.split(key, 20)

    def n(i, shape, s=0.1):
        return (s * jax.random.normal(keys[i], shape)).astype(jnp.float32)

    def fold_bn(gamma, beta, mean, var):
        scale = gamma / jnp.sqrt(var + eps)
        return scale.astype(jnp.float32), (beta - mean * scale).astype(jnp.float32)

    bn1_s, bn1_b = fold_bn(1.0 + n(1, (dim,)), n(2, (dim,)), n(3, (dim,)),
                           1.0 + 0.1 * jax.nn.sigmoid(jax.random.normal(keys[4], (dim,))))
    bng_s, bng_b = fold_bn(1.0 + n(10, (dim,)), n(11, (dim,)), n(12, (dim,)),
                           1.0 + 0.1 * jax.nn.sigmoid(jax.random.normal(keys[13], (dim,))))
    return dict(
        dw1_w=n(0, (K, K, dim), 0.2),
        bn1_s=bn1_s, bn1_b=bn1_b,
        se_w1=n(5, (dim, cr), 0.2), se_b1=n(6, (cr,)),
        se_w2=n(7, (cr, dim), 0.2), se_b2=n(8, (dim,)),
        f1_w=n(9, (dim, m), 0.2), f1_b=n(14, (m,)),
        f2_w=n(15, (dim, m), 0.2), f2_b=n(16, (m,)),
        g_w=n(17, (m, dim), 0.2),
        bng_s=bng_s, bng_b=bng_b,
        dw2_w=n(18, (K, K, dim), 0.2), dw2_b=n(19, (dim,)),
        hw=jnp.ones((dim,), jnp.float32),   # nn.Parameter(torch.ones(dim,1,1))
    )


def reference(x_nchw, p):
    """Pure-JAX f32 reference with the module's semantics (correctness check)."""
    x = jnp.transpose(x_nchw, (0, 2, 3, 1)).astype(jnp.float32)
    B, H, W, C = x.shape

    def dw(src, w):
        xp = jnp.pad(src, ((0, 0), (PAD, PAD), (PAD, PAD), (0, 0)))
        acc = jnp.zeros_like(src)
        for kh in range(K):
            for kw in range(K):
                acc = acc + xp[:, kh:kh + H, kw:kw + W, :] * w[kh, kw]
        return acc

    y = dw(x, p["dw1_w"]) * p["bn1_s"] + p["bn1_b"]
    pooled = jnp.mean(y, axis=(1, 2))                                   # (B, C)
    h1 = jnp.maximum(pooled @ p["se_w1"] + p["se_b1"], 0.0)
    gate = jax.nn.sigmoid(h1 @ p["se_w2"] + p["se_b2"])
    y = y * gate[:, None, None, :]
    x1 = jnp.einsum("bhwc,cm->bhwm", y, p["f1_w"]) + p["f1_b"]
    x2 = jnp.einsum("bhwc,cm->bhwm", y, p["f2_w"]) + p["f2_b"]
    z = jnp.clip(x1, 0.0, 6.0) * x2
    z = jnp.einsum("bhwm,mc->bhwc", z, p["g_w"]) * p["bng_s"] + p["bng_b"]
    z = dw(z, p["dw2_w"]) + p["dw2_b"]
    z = z * p["hw"]
    return jnp.transpose(x + z, (0, 3, 1, 2))


if __name__ == "__main__":
    key = jax.random.PRNGKey(0)
    kx, kp = jax.random.split(key)
    # dim=8, mlp_ratio=3 -> hidden=24, reduction=4 -> Cr=2; W*C = 128 (lane-dense)
    B, C, H, W = 2, 8, 16, 16
    x = jax.random.normal(kx, (B, C, H, W), jnp.float32)
    params = init_params(kp, C)

    out = jax.block_until_ready(adaptive_star_block(x, params))
    ref = reference(x, params)
    assert out.shape == (B, C, H, W)

    # bf16 MXU operands (f32 accumulation) vs. a pure-f32 reference: allow a
    # correspondingly looser tolerance; with MATMUL_DTYPE=f32 the 1e-3 bound holds.
    tol = 5e-2 if MATMUL_DTYPE == jnp.bfloat16 else 1e-3
    max_err = float(jnp.max(jnp.abs(out - ref)))
    if not jnp.allclose(out, ref, atol=tol, rtol=tol):
        raise AssertionError(f"mismatch vs f32 reference, max abs err = {max_err}")
    print("KERNEL_OK")
</pallas_src>

<mosaic_0001>
module attributes {stable_mosaic.version = 11 : i64} {
  func.func @kernel(%arg0: i32, %arg1: memref<1x16x128xf32, #tpu.memory_space<vmem>>, %arg2: memref<49x128xf32, #tpu.memory_space<vmem>>, %arg3: memref<49x128xf32, #tpu.memory_space<vmem>>, %arg4: memref<8x128xf32, #tpu.memory_space<vmem>>, %arg5: memref<128x2xf32, #tpu.memory_space<vmem>>, %arg6: memref<2x128xf32, #tpu.memory_space<vmem>>, %arg7: memref<128x768xbf16, #tpu.memory_space<vmem>>, %arg8: memref<1x768xf32, #tpu.memory_space<vmem>>, %arg9: memref<384x128xbf16, #tpu.memory_space<vmem>>, %arg10: memref<1x16x128xf32, #tpu.memory_space<vmem>>, %arg11: memref<24x256xf32, #tpu.memory_space<vmem>>) attributes {dimension_semantics = [#tpu.dimension_semantics<parallel>], iteration_bounds = array<i64: 2>, scalar_prefetch = 0 : i64, scratch_operands = 1 : i64, tpu.core_type = #tpu.core_type<tc>, window_params = [{transform_indices = @transform_0, window_bounds = array<i64: 1, 16, 128>}, {pipeline_mode = #tpu.pipeline_mode<synchronous>, transform_indices = @transform_1, window_bounds = array<i64: 49, 128>}, {pipeline_mode = #tpu.pipeline_mode<synchronous>, transform_indices = @transform_2, window_bounds = array<i64: 49, 128>}, {pipeline_mode = #tpu.pipeline_mode<synchronous>, transform_indices = @transform_3, window_bounds = array<i64: 8, 128>}, {pipeline_mode = #tpu.pipeline_mode<synchronous>, transform_indices = @transform_4, window_bounds = array<i64: 128, 2>}, {pipeline_mode = #tpu.pipeline_mode<synchronous>, transform_indices = @transform_5, window_bounds = array<i64: 2, 128>}, {pipeline_mode = #tpu.pipeline_mode<synchronous>, transform_indices = @transform_6, window_bounds = array<i64: 128, 768>}, {pipeline_mode = #tpu.pipeline_mode<synchronous>, transform_indices = @transform_7, window_bounds = array<i64: 1, 768>}, {pipeline_mode = #tpu.pipeline_mode<synchronous>, transform_indices = @transform_8, window_bounds = array<i64: 384, 128>}, {transform_indices = @transform_9, window_bounds = array<i64: 1, 16, 128>}]} {
    %c0 = arith.constant 0 : index
    %c0_0 = arith.constant 0 : index
    %c0_1 = arith.constant 0 : index
    %0 = vector.load %arg1[%c0, %c0_0, %c0_1] : memref<1x16x128xf32, #tpu.memory_space<vmem>>, vector<1x16x128xf32>
    %1 = vector.shape_cast %0 : vector<1x16x128xf32> to vector<16x128xf32>
    %cst = arith.constant 0.000000e+00 : f32
    %2 = vector.broadcast %cst : f32 to vector<24x256xf32>
    %c0_2 = arith.constant 0 : index
    %c0_3 = arith.constant 0 : index
    %3 = vector.load %arg11[%c0_2, %c0_3] : memref<24x256xf32, #tpu.memory_space<vmem>>, vector<24x256xf32>
    tpu.vector_store %arg11[%c0_2, %c0_3], %2 {strides = array<i32>} : memref<24x256xf32, #tpu.memory_space<vmem>>, vector<24x256xf32>,
    %c3 = arith.constant 3 : index
    %c0_4 = arith.constant 0 : index
    %4 = vector.load %arg11[%c3, %c0_4] : memref<24x256xf32, #tpu.memory_space<vmem>>, vector<16x128xf32>
    tpu.vector_store %arg11[%c3, %c0_4], %1 {strides = array<i32>} : memref<24x256xf32, #tpu.memory_space<vmem>>, vector<16x128xf32>,
    %cst_5 = arith.constant 0.000000e+00 : f32
    %5 = vector.broadcast %cst_5 : f32 to vector<16x128xf32>
    %c0_6 = arith.constant 0 : index
    %c0_7 = arith.constant 0 : index
    %6 = vector.load %arg11[%c0_6, %c0_7] : memref<24x256xf32, #tpu.memory_space<vmem>>, vector<16x256xf32>
    %c24_i32 = arith.constant 24 : i32
    %7 = tpu.dynamic_rotate %6 by %c24_i32 dim 1 : vector<16x256xf32>, i32 -> vector<16x256xf32>
    %8 = vector.extract_strided_slice %7 {offsets = [0, 0], sizes = [16, 128], strides = [1, 1]} : vector<16x256xf32> to vector<16x128xf32>
    %c0_8 = arith.constant 0 : index
    %c0_9 = arith.constant 0 : index
    %9 = vector.load %arg2[%c0_8, %c0_9] : memref<49x128xf32, #tpu.memory_space<vmem>>, vector<1x128xf32>
    %10 = vector.broadcast %9 : vector<1x128xf32> to vector<16x128xf32>
    %11 = arith.mulf %8, %10 : vector<16x128xf32>
    %12 = arith.addf %5, %11 : vector<16x128xf32>
    %c16_i32 = arith.constant 16 : i32
    %13 = tpu.dynamic_rotate %6 by %c16_i32 dim 1 : vector<16x256xf32>, i32 -> vector<16x256xf32>
    %14 = vector.extract_strided_slice %13 {offsets = [0, 0], sizes = [16, 128], strides = [1, 1]} : vector<16x256xf32> to vector<16x128xf32>
    %c1 = arith.constant 1 : index
    %c0_10 = arith.constant 0 : index
    %15 = vector.load %arg2[%c1, %c0_10] : memref<49x128xf32, #tpu.memory_space<vmem>>, vector<1x128xf32>
    %16 = vector.broadcast %15 : vector<1x128xf32> to vector<16x128xf32>
    %17 = arith.mulf %14, %16 : vector<16x128xf32>
    %18 = arith.addf %12, %17 : vector<16x128xf32>
    %c8_i32 = arith.constant 8 : i32
    %19 = tpu.dynamic_rotate %6 by %c8_i32 dim 1 : vector<16x256xf32>, i32 -> vector<16x256xf32>
    %20 = vector.extract_strided_slice %19 {offsets = [0, 0], sizes = [16, 128], strides = [1, 1]} : vector<16x256xf32> to vector<16x128xf32>
    %c2 = arith.constant 2 : index
    %c0_11 = arith.constant 0 : index
    %21 = vector.load %arg2[%c2, %c0_11] : memref<49x128xf32, #tpu.memory_space<vmem>>, vector<1x128xf32>
    %22 = vector.broadcast %21 : vector<1x128xf32> to vector<16x128xf32>
    %23 = arith.mulf %20, %22 : vector<16x128xf32>
    %24 = arith.addf %18, %23 : vector<16x128xf32>
    %25 = vector.extract_strided_slice %6 {offsets = [0, 0], sizes = [16, 128], strides = [1, 1]} : vector<16x256xf32> to vector<16x128xf32>
    %c3_12 = arith.constant 3 : index
    %c0_13 = arith.constant 0 : index
    %26 = vector.load %arg2[%c3_12, %c0_13] : memref<49x128xf32, #tpu.memory_space<vmem>>, vector<1x128xf32>
    %27 = vector.broadcast %26 : vector<1x128xf32> to vector<16x128xf32>
    %28 = arith.mulf %25, %27 : vector<16x128xf32>
    %29 = arith.addf %24, %28 : vector<16x128xf32>
    %c248_i32 = arith.constant 248 : i32
    %30 = tpu.dynamic_rotate %6 by %c248_i32 dim 1 : vector<16x256xf32>, i32 -> vector<16x256xf32>
    %31 = vector.extract_strided_slice %30 {offsets = [0, 0], sizes = [16, 128], strides = [1, 1]} : vector<16x256xf32> to vector<16x128xf32>
    %c4 = arith.constant 4 : index
    %c0_14 = arith.constant 0 : index
    %32 = vector.load %arg2[%c4, %c0_14] : memref<49x128xf32, #tpu.memory_space<vmem>>, vector<1x128xf32>
    %33 = vector.broadcast %32 : vector<1x128xf32> to vector<16x128xf32>
    %34 = arith.mulf %31, %33 : vector<16x128xf32>
    %35 = arith.addf %29, %34 : vector<16x128xf32>
    %c240_i32 = arith.constant 240 : i32
    %36 = tpu.dynamic_rotate %6 by %c240_i32 dim 1 : vector<16x256xf32>, i32 -> vector<16x256xf32>
    %37 = vector.extract_strided_slice %36 {offsets = [0, 0], sizes = [16, 128], strides = [1, 1]} : vector<16x256xf32> to vector<16x128xf32>
    %c5 = arith.constant 5 : index
    %c0_15 = arith.constant 0 : index
    %38 = vector.load %arg2[%c5, %c0_15] : memref<49x128xf32, #tpu.memory_space<vmem>>, vector<1x128xf32>
    %39 = vector.broadcast %38 : vector<1x128xf32> to vector<16x128xf32>
    %40 = arith.mulf %37, %39 : vector<16x128xf32>
    %41 = arith.addf %35, %40 : vector<16x128xf32>
    %c232_i32 = arith.constant 232 : i32
    %42 = tpu.dynamic_rotate %6 by %c232_i32 dim 1 : vector<16x256xf32>, i32 -> vector<16x256xf32>
    %43 = vector.extract_strided_slice %42 {offsets = [0, 0], sizes = [16, 128], strides = [1, 1]} : vector<16x256xf32> to vector<16x128xf32>
    %c6 = arith.constant 6 : index
    %c0_16 = arith.constant 0 : index
    %44 = vector.load %arg2[%c6, %c0_16] : memref<49x128xf32, #tpu.memory_space<vmem>>, vector<1x128xf32>
    %45 = vector.broadcast %44 : vector<1x128xf32> to vector<16x128xf32>
    %46 = arith.mulf %43, %45 : vector<16x128xf32>
    %47 = arith.addf %41, %46 : vector<16x128xf32>
    %c1_17 = arith.constant 1 : index
    %c0_18 = arith.constant 0 : index
    %48 = vector.load %arg11[%c1_17, %c0_18] : memref<24x256xf32, #tpu.memory_space<vmem>>, vector<16x256xf32>
    %c24_i32_19 = arith.constant 24 : i32
    %49 = tpu.dynamic_rotate %48 by %c24_i32_19 dim 1 : vector<16x256xf32>, i32 -> vector<16x256xf32>
    %50 = vector.extract_strided_slice %49 {offsets = [0, 0], sizes = [16, 128], strides = [1, 1]} : vector<16x256xf32> to vector<16x128xf32>
    %c7 = arith.constant 7 : index
    %c0_20 = arith.constant 0 : index
    %51 = vector.load %arg2[%c7, %c0_20] : memref<49x128xf32, #tpu.memory_space<vmem>>, vector<1x128xf32>
    %52 = vector.broadcast %51 : vector<1x128xf32> to vector<16x128xf32>
    %53 = arith.mulf %50, %52 : vector<16x128xf32>
    %54 = arith.addf %47, %53 : vector<16x128xf32>
    %c16_i32_21 = arith.constant 16 : i32
    %55 = tpu.dynamic_rotate %48 by %c16_i32_21 dim 1 : vector<16x256xf32>, i32 -> vector<16x256xf32>
    %56 = vector.extract_strided_slice %55 {offsets = [0, 0], sizes = [16, 128], strides = [1, 1]} : vector<16x256xf32> to vector<16x128xf32>
    %c8 = arith.constant 8 : index
    %c0_22 = arith.constant 0 : index
    %57 = vector.load %arg2[%c8, %c0_22] : memref<49x128xf32, #tpu.memory_space<vmem>>, vector<1x128xf32>
    %58 = vector.broadcast %57 : vector<1x128xf32> to vector<16x128xf32>
    %59 = arith.mulf %56, %58 : vector<16x128xf32>
    %60 = arith.addf %54, %59 : vector<16x128xf32>
    %c8_i32_23 = arith.constant 8 : i32
    %61 = tpu.dynamic_rotate %48 by %c8_i32_23 dim 1 : vector<16x256xf32>, i32 -> vector<16x256xf32>
    %62 = vector.extract_strided_slice %61 {offsets = [0, 0], sizes = [16, 128], strides = [1, 1]} : vector<16x256xf32> to vector<16x128xf32>
    %c9 = arith.constant 9 : index
    %c0_24 = arith.constant 0 : index
    %63 = vector.load %arg2[%c9, %c0_24] : memref<49x128xf32, #tpu.memory_space<vmem>>, vector<1x128xf32>
    %64 = vector.broadcast %63 : vector<1x128xf32> to vector<16x128xf32>
    %65 = arith.mulf %62, %64 : vector<16x128xf32>
    %66 = arith.addf %60, %65 : vector<16x128xf32>
    %67 = vector.extract_strided_slice %48 {offsets = [0, 0], sizes = [16, 128], strides = [1, 1]} : vector<16x256xf32> to vector<16x128xf32>
    %c10 = arith.constant 10 : index
    %c0_25 = arith.constant 0 : index
    %68 = vector.load %arg2[%c10, %c0_25] : memref<49x128xf32, #tpu.memory_space<vmem>>, vector<1x128xf32>
    %69 = vector.broadcast %68 : vector<1x128xf32> to vector<16x128xf32>
    %70 = arith.mulf %67, %69 : vector<16x128xf32>
    %71 = arith.addf %66, %70 : vector<16x128xf32>
    %c248_i32_26 = arith.constant 248 : i32
    %72 = tpu.dynamic_rotate %48 by %c248_i32_26 dim 1 : vector<16x256xf32>, i32 -> vector<16x256xf32>
    %73 = vector.extract_strided_slice %72 {offsets = [0, 0], sizes = [16, 128], strides = [1, 1]} : vector<16x256xf32> to vector<16x128xf32>
    %c11 = arith.constant 11 : index
    %c0_27 = arith.constant 0 : index
    %74 = vector.load %arg2[%c11, %c0_27] : memref<49x128xf32, #tpu.memory_space<vmem>>, vector<1x128xf32>
    %75 = vector.broadcast %74 : vector<1x128xf32> to vector<16x128xf32>
    %76 = arith.mulf %73, %75 : vector<16x128xf32>
    %77 = arith.addf %71, %76 : vector<16x128xf32>
    %c240_i32_28 = arith.constant 240 : i32
    %78 = tpu.dynamic_rotate %48 by %c240_i32_28 dim 1 : vector<16x256xf32>, i32 -> vector<16x256xf32>
    %79 = vector.extract_strided_slice %78 {offsets = [0, 0], sizes = [16, 128], strides = [1, 1]} : vector<16x256xf32> to vector<16x128xf32>
    %c12 = arith.constant 12 : index
    %c0_29 = arith.constant 0 : index
    %80 = vector.load %arg2[%c12, %c0_29] : memref<49x128xf32, #tpu.memory_space<vmem>>, vector<1x128xf32>
    %81 = vector.broadcast %80 : vector<1x128xf32> to vector<16x128xf32>
    %82 = arith.mulf %79, %81 : vector<16x128xf32>
    %83 = arith.addf %77, %82 : vector<16x128xf32>
    %c232_i32_30 = arith.constant 232 : i32
    %84 = tpu.dynamic_rotate %48 by %c232_i32_30 dim 1 : vector<16x256xf32>, i32 -> vector<16x256xf32>
    %85 = vector.extract_strided_slice %84 {offsets = [0, 0], sizes = [16, 128], strides = [1, 1]} : vector<16x256xf32> to vector<16x128xf32>
    %c13 = arith.constant 13 : index
    %c0_31 = arith.constant 0 : index
    %86 = vector.load %arg2[%c13, %c0_31] : memref<49x128xf32, #tpu.memory_space<vmem>>, vector<1x128xf32>
    %87 = vector.broadcast %86 : vector<1x128xf32> to vector<16x128xf32>
    %88 = arith.mulf %85, %87 : vector<16x128xf32>
    %89 = arith.addf %83, %88 : vector<16x128xf32>
    %c2_32 = arith.constant 2 : index
    %c0_33 = arith.constant 0 : index
    %90 = vector.load %arg11[%c2_32, %c0_33] : memref<24x256xf32, #tpu.memory_space<vmem>>, vector<16x256xf32>
    %c24_i32_34 = arith.constant 24 : i32
    %91 = tpu.dynamic_rotate %90 by %c24_i32_34 dim 1 : vector<16x256xf32>, i32 -> vector<16x256xf32>
    %92 = vector.extract_strided_slice %91 {offsets = [0, 0], sizes = [16, 128], strides = [1, 1]} : vector<16x256xf32> to vector<16x128xf32>
    %c14 = arith.constant 14 : index
    %c0_35 = arith.constant 0 : index
    %93 = vector.load %arg2[%c14, %c0_35] : memref<49x128xf32, #tpu.memory_space<vmem>>, vector<1x128xf32>
    %94 = vector.broadcast %93 : vector<1x128xf32> to vector<16x128xf32>
    %95 = arith.mulf %92, %94 : vector<16x128xf32>
    %96 = arith.addf %89, %95 : vector<16x128xf32>
    %c16_i32_36 = arith.constant 16 : i32
    %97 = tpu.dynamic_rotate %90 by %c16_i32_36 dim 1 : vector<16x256xf32>, i32 -> vector<16x256xf32>
    %98 = vector.extract_strided_slice %97 {offsets = [0, 0], sizes = [16, 128], strides = [1, 1]} : vector<16x256xf32> to vector<16x128xf32>
    %c15 = arith.constant 15 : index
    %c0_37 = arith.constant 0 : index
    %99 = vector.load %arg2[%c15, %c0_37] : memref<49x128xf32, #tpu.memory_space<vmem>>, vector<1x128xf32>
    %100 = vector.broadcast %99 : vector<1x128xf32> to vector<16x128xf32>
    %101 = arith.mulf %98, %100 : vector<16x128xf32>
    %102 = arith.addf %96, %101 : vector<16x128xf32>
    %c8_i32_38 = arith.constant 8 : i32
    %103 = tpu.dynamic_rotate %90 by %c8_i32_38 dim 1 : vector<16x256xf32>, i32 -> vector<16x256xf32>
    %104 = vector.extract_strided_slice %103 {offsets = [0, 0], sizes = [16, 128], strides = [1, 1]} : vector<16x256xf32> to vector<16x128xf32>
    %c16 = arith.constant 16 : index
    %c0_39 = arith.constant 0 : index
    %105 = vector.load %arg2[%c16, %c0_39] : memref<49x128xf32, #tpu.memory_space<vmem>>, vector<1x128xf32>
    %106 = vector.broadcast %105 : vector<1x128xf32> to vector<16x128xf32>
    %107 = arith.mulf %104, %106 : vector<16x128xf32>
    %108 = arith.addf %102, %107 : vector<16x128xf32>
    %109 = vector.extract_strided_slice %90 {offsets = [0, 0], sizes = [16, 128], strides = [1, 1]} : vector<16x256xf32> to vector<16x128xf32>
    %c17 = arith.constant 17 : index
    %c0_40 = arith.constant 0 : index
    %110 = vector.load %arg2[%c17, %c0_40] : memref<49x128xf32, #tpu.memory_space<vmem>>, vector<1x128xf32>
    %111 = vector.broadcast %110 : vector<1x128xf32> to vector<16x128xf32>
    %112 = arith.mulf %109, %111 : vector<16x128xf32>
    %113 = arith.addf %108, %112 : vector<16x128xf32>
    %c248_i32_41 = arith.constant 248 : i32
    %114 = tpu.dynamic_rotate %90 by %c248_i32_41 dim 1 : vector<16x256xf32>, i32 -> vector<16x256xf32>
    %115 = vector.extract_strided_slice %114 {offsets = [0, 0], sizes = [16, 128], strides = [1, 1]} : vector<16x256xf32> to vector<16x128xf32>
    %c18 = arith.constant 18 : index
    %c0_42 = arith.constant 0 : index
    %116 = vector.load %arg2[%c18, %c0_42] : memref<49x128xf32, #tpu.memory_space<vmem>>, vector<1x128xf32>
    %117 = vector.broadcast %116 : vector<1x128xf32> to vector<16x128xf32>
    %118 = arith.mulf %115, %117 : vector<16x128xf32>
    %119 = arith.addf %113, %118 : vector<16x128xf32>
    %c240_i32_43 = arith.constant 240 : i32
    %120 = tpu.dynamic_rotate %90 by %c240_i32_43 dim 1 : vector<16x256xf32>, i32 -> vector<16x256xf32>
    %121 = vector.extract_strided_slice %120 {offsets = [0, 0], sizes = [16, 128], strides = [1, 1]} : vector<16x256xf32> to vector<16x128xf32>
    %c19 = arith.constant 19 : index
    %c0_44 = arith.constant 0 : index
    %122 = vector.load %arg2[%c19, %c0_44] : memref<49x128xf32, #tpu.memory_space<vmem>>, vector<1x128xf32>
    %123 = vector.broadcast %122 : vector<1x128xf32> to vector<16x128xf32>
    %124 = arith.mulf %121, %123 : vector<16x128xf32>
    %125 = arith.addf %119, %124 : vector<16x128xf32>
    %c232_i32_45 = arith.constant 232 : i32
    %126 = tpu.dynamic_rotate %90 by %c232_i32_45 dim 1 : vector<16x256xf32>, i32 -> vector<16x256xf32>
    %127 = vector.extract_strided_slice %126 {offsets = [0, 0], sizes = [16, 128], strides = [1, 1]} : vector<16x256xf32> to vector<16x128xf32>
    %c20 = arith.constant 20 : index
    %c0_46 = arith.constant 0 : index
    %128 = vector.load %arg2[%c20, %c0_46] : memref<49x128xf32, #tpu.memory_space<vmem>>, vector<1x128xf32>
    %129 = vector.broadcast %128 : vector<1x128xf32> to vector<16x128xf32>
    %130 = arith.mulf %127, %129 : vector<16x128xf32>
    %131 = arith.addf %125, %130 : vector<16x128xf32>
    %c3_47 = arith.constant 3 : index
    %c0_48 = arith.constant 0 : index
    %132 = vector.load %arg11[%c3_47, %c0_48] : memref<24x256xf32, #tpu.memory_space<vmem>>, vector<16x256xf32>
    %c24_i32_49 = arith.constant 24 : i32
    %133 = tpu.dynamic_rotate %132 by %c24_i32_49 dim 1 : vector<16x256xf32>, i32 -> vector<16x256xf32>
    %134 = vector.extract_strided_slice %133 {offsets = [0, 0], sizes = [16, 128], strides = [1, 1]} : vector<16x256xf32> to vector<16x128xf32>
    %c21 = arith.constant 21 : index
    %c0_50 = arith.constant 0 : index
    %135 = vector.load %arg2[%c21, %c0_50] : memref<49x128xf32, #tpu.memory_space<vmem>>, vector<1x128xf32>
    %136 = vector.broadcast %135 : vector<1x128xf32> to vector<16x128xf32>
    %137 = arith.mulf %134, %136 : vector<16x128xf32>
    %138 = arith.addf %131, %137 : vector<16x128xf32>
    %c16_i32_51 = arith.constant 16 : i32
    %139 = tpu.dynamic_rotate %132 by %c16_i32_51 dim 1 : vector<16x256xf32>, i32 -> vector<16x256xf32>
    %140 = vector.extract_strided_slice %139 {offsets = [0, 0], sizes = [16, 128], strides = [1, 1]} : vector<16x256xf32> to vector<16x128xf32>
    %c22 = arith.constant 22 : index
    %c0_52 = arith.constant 0 : index
    %141 = vector.load %arg2[%c22, %c0_52] : memref<49x128xf32, #tpu.memory_space<vmem>>, vector<1x128xf32>
    %142 = vector.broadcast %141 : vector<1x128xf32> to vector<16x128xf32>
    %143 = arith.mulf %140, %142 : vector<16x128xf32>
    %144 = arith.addf %138, %143 : vector<16x128xf32>
    %c8_i32_53 = arith.constant 8 : i32
    %145 = tpu.dynamic_rotate %132 by %c8_i32_53 dim 1 : vector<16x256xf32>, i32 -> vector<16x256xf32>
    %146 = vector.extract_strided_slice %145 {offsets = [0, 0], sizes = [16, 128], strides = [1, 1]} : vector<16x256xf32> to vector<16x128xf32>
    %c23 = arith.constant 23 : index
    %c0_54 = arith.constant 0 : index
    %147 = vector.load %arg2[%c23, %c0_54] : memref<49x128xf32, #tpu.memory_space<vmem>>, vector<1x128xf32>
    %148 = vector.broadcast %147 : vector<1x128xf32> to vector<16x128xf32>
    %149 = arith.mulf %146, %148 : vector<16x128xf32>
    %150 = arith.addf %144, %149 : vector<16x128xf32>
    %151 = vector.extract_strided_slice %132 {offsets = [0, 0], sizes = [16, 128], strides = [1, 1]} : vector<16x256xf32> to vector<16x128xf32>
    %c24 = arith.constant 24 : index
    %c0_55 = arith.constant 0 : index
    %152 = vector.load %arg2[%c24, %c0_55] : memref<49x128xf32, #tpu.memory_space<vmem>>, vector<1x128xf32>
    %153 = vector.broadcast %152 : vector<1x128xf32> to vector<16x128xf32>
    %154 = arith.mulf %151, %153 : vector<16x128xf32>
    %155 = arith.addf %150, %154 : vector<16x128xf32>
    %c248_i32_56 = arith.constant 248 : i32
    %156 = tpu.dynamic_rotate %132 by %c248_i32_56 dim 1 : vector<16x256xf32>, i32 -> vector<16x256xf32>
    %157 = vector.extract_strided_slice %156 {offsets = [0, 0], sizes = [16, 128], strides = [1, 1]} : vector<16x256xf32> to vector<16x128xf32>
    %c25 = arith.constant 25 : index
    %c0_57 = arith.constant 0 : index
    %158 = vector.load %arg2[%c25, %c0_57] : memref<49x128xf32, #tpu.memory_space<vmem>>, vector<1x128xf32>
    %159 = vector.broadcast %158 : vector<1x128xf32> to vector<16x128xf32>
    %160 = arith.mulf %157, %159 : vector<16x128xf32>
    %161 = arith.addf %155, %160 : vector<16x128xf32>
    %c240_i32_58 = arith.constant 240 : i32
    %162 = tpu.dynamic_rotate %132 by %c240_i32_58 dim 1 : vector<16x256xf32>, i32 -> vector<16x256xf32>
    %163 = vector.extract_strided_slice %162 {offsets = [0, 0], sizes = [16, 128], strides = [1, 1]} : vector<16x256xf32> to vector<16x128xf32>
    %c26 = arith.constant 26 : index
    %c0_59 = arith.constant 0 : index
    %164 = vector.load %arg2[%c26, %c0_59] : memref<49x128xf32, #tpu.memory_space<vmem>>, vector<1x128xf32>
    %165 = vector.broadcast %164 : vector<1x128xf32> to vector<16x128xf32>
    %166 = arith.mulf %163, %165 : vector<16x128xf32>
    %167 = arith.addf %161, %166 : vector<16x128xf32>
    %c232_i32_60 = arith.constant 232 : i32
    %168 = tpu.dynamic_rotate %132 by %c232_i32_60 dim 1 : vector<16x256xf32>, i32 -> vector<16x256xf32>
    %169 = vector.extract_strided_slice %168 {offsets = [0, 0], sizes = [16, 128], strides = [1, 1]} : vector<16x256xf32> to vector<16x128xf32>
    %c27 = arith.constant 27 : index
    %c0_61 = arith.constant 0 : index
    %170 = vector.load %arg2[%c27, %c0_61] : memref<49x128xf32, #tpu.memory_space<vmem>>, vector<1x128xf32>
    %171 = vector.broadcast %170 : vector<1x128xf32> to vector<16x128xf32>
    %172 = arith.mulf %169, %171 : vector<16x128xf32>
    %173 = arith.addf %167, %172 : vector<16x128xf32>
    %c4_62 = arith.constant 4 : index
    %c0_63 = arith.constant 0 : index
    %174 = vector.load %arg11[%c4_62, %c0_63] : memref<24x256xf32, #tpu.memory_space<vmem>>, vector<16x256xf32>
    %c24_i32_64 = arith.constant 24 : i32
    %175 = tpu.dynamic_rotate %174 by %c24_i32_64 dim 1 : vector<16x256xf32>, i32 -> vector<16x256xf32>
    %176 = vector.extract_strided_slice %175 {offsets = [0, 0], sizes = [16, 128], strides = [1, 1]} : vector<16x256xf32> to vector<16x128xf32>
    %c28 = arith.constant 28 : index
    %c0_65 = arith.constant 0 : index
    %177 = vector.load %arg2[%c28, %c0_65] : memref<49x128xf32, #tpu.memory_space<vmem>>, vector<1x128xf32>
    %178 = vector.broadcast %177 : vector<1x128xf32> to vector<16x128xf32>
    %179 = arith.mulf %176, %178 : vector<16x128xf32>
    %180 = arith.addf %173, %179 : vector<16x128xf32>
    %c16_i32_66 = arith.constant 16 : i32
    %181 = tpu.dynamic_rotate %174 by %c16_i32_66 dim 1 : vector<16x256xf32>, i32 -> vector<16x256xf32>
    %182 = vector.extract_strided_slice %181 {offsets = [0, 0], sizes = [16, 128], strides = [1, 1]} : vector<16x256xf32> to vector<16x128xf32>
    %c29 = arith.constant 29 : index
    %c0_67 = arith.constant 0 : index
    %183 = vector.load %arg2[%c29, %c0_67] : memref<49x128xf32, #tpu.memory_space<vmem>>, vector<1x128xf32>
    %184 = vector.broadcast %183 : vector<1x128xf32> to vector<16x128xf32>
    %185 = arith.mulf %182, %184 : vector<16x128xf32>
    %186 = arith.addf %180, %185 : vector<16x128xf32>
    %c8_i32_68 = arith.constant 8 : i32
    %187 = tpu.dynamic_rotate %174 by %c8_i32_68 dim 1 : vector<16x256xf32>, i32 -> vector<16x256xf32>
    %188 = vector.extract_strided_slice %187 {offsets = [0, 0], sizes = [16, 128], strides = [1, 1]} : vector<16x256xf32> to vector<16x128xf32>
    %c30 = arith.constant 30 : index
    %c0_69 = arith.constant 0 : index
    %189 = vector.load %arg2[%c30, %c0_69] : memref<49x128xf32, #tpu.memory_space<vmem>>, vector<1x128xf32>
    %190 = vector.broadcast %189 : vector<1x128xf32> to vector<16x128xf32>
    %191 = arith.mulf %188, %190 : vector<16x128xf32>
    %192 = arith.addf %186, %191 : vector<16x128xf32>
    %193 = vector.extract_strided_slice %174 {offsets = [0, 0], sizes = [16, 128], strides = [1, 1]} : vector<16x256xf32> to vector<16x128xf32>
    %c31 = arith.constant 31 : index
    %c0_70 = arith.constant 0 : index
    %194 = vector.load %arg2[%c31, %c0_70] : memref<49x128xf32, #tpu.memory_space<vmem>>, vector<1x128xf32>
    %195 = vector.broadcast %194 : vector<1x128xf32> to vector<16x128xf32>
    %196 = arith.mulf %193, %195 : vector<16x128xf32>
    %197 = arith.addf %192, %196 : vector<16x128xf32>
    %c248_i32_71 = arith.constant 248 : i32
    %198 = tpu.dynamic_rotate %174 by %c248_i32_71 dim 1 : vector<16x256xf32>, i32 -> vector<16x256xf32>
    %199 = vector.extract_strided_slice %198 {offsets = [0, 0], sizes = [16, 128], strides = [1, 1]} : vector<16x256xf32> to vector<16x128xf32>
    %c32 = arith.constant 32 : index
    %c0_72 = arith.constant 0 : index
    %200 = vector.load %arg2[%c32, %c0_72] : memref<49x128xf32, #tpu.memory_space<vmem>>, vector<1x128xf32>
    %201 = vector.broadcast %200 : vector<1x128xf32> to vector<16x128xf32>
    %202 = arith.mulf %199, %201 : vector<16x128xf32>
    %203 = arith.addf %197, %202 : vector<16x128xf32>
    %c240_i32_73 = arith.constant 240 : i32
    %204 = tpu.dynamic_rotate %174 by %c240_i32_73 dim 1 : vector<16x256xf32>, i32 -> vector<16x256xf32>
    %205 = vector.extract_strided_slice %204 {offsets = [0, 0], sizes = [16, 128], strides = [1, 1]} : vector<16x256xf32> to vector<16x128xf32>
    %c33 = arith.constant 33 : index
    %c0_74 = arith.constant 0 : index
    %206 = vector.load %arg2[%c33, %c0_74] : memref<49x128xf32, #tpu.memory_space<vmem>>, vector<1x128xf32>
    %207 = vector.broadcast %206 : vector<1x128xf32> to vector<16x128xf32>
    %208 = arith.mulf %205, %207 : vector<16x128xf32>
    %209 = arith.addf %203, %208 : vector<16x128xf32>
    %c232_i32_75 = arith.constant 232 : i32
    %210 = tpu.dynamic_rotate %174 by %c232_i32_75 dim 1 : vector<16x256xf32>, i32 -> vector<16x256xf32>
    %211 = vector.extract_strided_slice %210 {offsets = [0, 0], sizes = [16, 128], strides = [1, 1]} : vector<16x256xf32> to vector<16x128xf32>
    %c34 = arith.constant 34 : index
    %c0_76 = arith.constant 0 : index
    %212 = vector.load %arg2[%c34, %c0_76] : memref<49x128xf32, #tpu.memory_space<vmem>>, vector<1x128xf32>
    %213 = vector.broadcast %212 : vector<1x128xf32> to vector<16x128xf32>
    %214 = arith.mulf %211, %213 : vector<16x128xf32>
    %215 = arith.addf %209, %214 : vector<16x128xf32>
    %c5_77 = arith.constant 5 : index
    %c0_78 = arith.constant 0 : index
    %216 = vector.load %arg11[%c5_77, %c0_78] : memref<24x256xf32, #tpu.memory_space<vmem>>, vector<16x256xf32>
    %c24_i32_79 = arith.constant 24 : i32
    %217 = tpu.dynamic_rotate %216 by %c24_i32_79 dim 1 : vector<16x256xf32>, i32 -> vector<16x256xf32>
    %218 = vector.extract_strided_slice %217 {offsets = [0, 0], sizes = [16, 128], strides = [1, 1]} : vector<16x256xf32> to vector<16x128xf32>
    %c35 = arith.constant 35 : index
    %c0_80 = arith.constant 0 : index
    %219 = vector.load %arg2[%c35, %c0_80] : memref<49x128xf32, #tpu.memory_space<vmem>>, vector<1x128xf32>
    %220 = vector.broadcast %219 : vector<1x128xf32> to vector<16x128xf32>
    %221 = arith.mulf %218, %220 : vector<16x128xf32>
    %222 = arith.addf %215, %221 : vector<16x128xf32>
    %c16_i32_81 = arith.constant 16 : i32
    %223 = tpu.dynamic_rotate %216 by %c16_i32_81 dim 1 : vector<16x256xf32>, i32 -> vector<16x256xf32>
    %224 = vector.extract_strided_slice %223 {offsets = [0, 0], sizes = [16, 128], strides = [1, 1]} : vector<16x256xf32> to vector<16x128xf32>
    %c36 = arith.constant 36 : index
    %c0_82 = arith.constant 0 : index
    %225 = vector.load %arg2[%c36, %c0_82] : memref<49x128xf32, #tpu.memory_space<vmem>>, vector<1x128xf32>
    %226 = vector.broadcast %225 : vector<1x128xf32> to vector<16x128xf32>
    %227 = arith.mulf %224, %226 : vector<16x128xf32>
    %228 = arith.addf %222, %227 : vector<16x128xf32>
    %c8_i32_83 = arith.constant 8 : i32
    %229 = tpu.dynamic_rotate %216 by %c8_i32_83 dim 1 : vector<16x256xf32>, i32 -> vector<16x256xf32>
    %230 = vector.extract_strided_slice %229 {offsets = [0, 0], sizes = [16, 128], strides = [1, 1]} : vector<16x256xf32> to vector<16x128xf32>
    %c37 = arith.constant 37 : index
    %c0_84 = arith.constant 0 : index
    %231 = vector.load %arg2[%c37, %c0_84] : memref<49x128xf32, #tpu.memory_space<vmem>>, vector<1x128xf32>
    %232 = vector.broadcast %231 : vector<1x128xf32> to vector<16x128xf32>
    %233 = arith.mulf %230, %232 : vector<16x128xf32>
    %234 = arith.addf %228, %233 : vector<16x128xf32>
    %235 = vector.extract_strided_slice %216 {offsets = [0, 0], sizes = [16, 128], strides = [1, 1]} : vector<16x256xf32> to vector<16x128xf32>
    %c38 = arith.constant 38 : index
    %c0_85 = arith.constant 0 : index
    %236 = vector.load %arg2[%c38, %c0_85] : memref<49x128xf32, #tpu.memory_space<vmem>>, vector<1x128xf32>
    %237 = vector.broadcast %236 : vector<1x128xf32> to vector<16x128xf32>
    %238 = arith.mulf %235, %237 : vector<16x128xf32>
    %239 = arith.addf %234, %238 : vector<16x128xf32>
    %c248_i32_86 = arith.constant 248 : i32
    %240 = tpu.dynamic_rotate %216 by %c248_i32_86 dim 1 : vector<16x256xf32>, i32 -> vector<16x256xf32>
    %241 = vector.extract_strided_slice %240 {offsets = [0, 0], sizes = [16, 128], strides = [1, 1]} : vector<16x256xf32> to vector<16x128xf32>
    %c39 = arith.constant 39 : index
    %c0_87 = arith.constant 0 : index
    %242 = vector.load %arg2[%c39, %c0_87] : memref<49x128xf32, #tpu.memory_space<vmem>>, vector<1x128xf32>
    %243 = vector.broadcast %242 : vector<1x128xf32> to vector<16x128xf32>
    %244 = arith.mulf %241, %243 : vector<16x128xf32>
    %245 = arith.addf %239, %244 : vector<16x128xf32>
    %c240_i32_88 = arith.constant 240 : i32
    %246 = tpu.dynamic_rotate %216 by %c240_i32_88 dim 1 : vector<16x256xf32>, i32 -> vector<16x256xf32>
    %247 = vector.extract_strided_slice %246 {offsets = [0, 0], sizes = [16, 128], strides = [1, 1]} : vector<16x256xf32> to vector<16x128xf32>
    %c40 = arith.constant 40 : index
    %c0_89 = arith.constant 0 : index
    %248 = vector.load %arg2[%c40, %c0_89] : memref<49x128xf32, #tpu.memory_space<vmem>>, vector<1x128xf32>
    %249 = vector.broadcast %248 : vector<1x128xf32> to vector<16x128xf32>
    %250 = arith.mulf %247, %249 : vector<16x128xf32>
    %251 = arith.addf %245, %250 : vector<16x128xf32>
    %c232_i32_90 = arith.constant 232 : i32
    %252 = tpu.dynamic_rotate %216 by %c232_i32_90 dim 1 : vector<16x256xf32>, i32 -> vector<16x256xf32>
    %253 = vector.extract_strided_slice %252 {offsets = [0, 0], sizes = [16, 128], strides = [1, 1]} : vector<16x256xf32> to vector<16x128xf32>
    %c41 = arith.constant 41 : index
    %c0_91 = arith.constant 0 : index
    %254 = vector.load %arg2[%c41, %c0_91] : memref<49x128xf32, #tpu.memory_space<vmem>>, vector<1x128xf32>
    %255 = vector.broadcast %254 : vector<1x128xf32> to vector<16x128xf32>
    %256 = arith.mulf %253, %255 : vector<16x128xf32>
    %257 = arith.addf %251, %256 : vector<16x128xf32>
    %c6_92 = arith.constant 6 : index
    %c0_93 = arith.constant 0 : index
    %258 = vector.load %arg11[%c6_92, %c0_93] : memref<24x256xf32, #tpu.memory_space<vmem>>, vector<16x256xf32>
    %c24_i32_94 = arith.constant 24 : i32
    %259 = tpu.dynamic_rotate %258 by %c24_i32_94 dim 1 : vector<16x256xf32>, i32 -> vector<16x256xf32>
    %260 = vector.extract_strided_slice %259 {offsets = [0, 0], sizes = [16, 128], strides = [1, 1]} : vector<16x256xf32> to vector<16x128xf32>
    %c42 = arith.constant 42 : index
    %c0_95 = arith.constant 0 : index
    %261 = vector.load %arg2[%c42, %c0_95] : memref<49x128xf32, #tpu.memory_space<vmem>>, vector<1x128xf32>
    %262 = vector.broadcast %261 : vector<1x128xf32> to vector<16x128xf32>
    %263 = arith.mulf %260, %262 : vector<16x128xf32>
    %264 = arith.addf %257, %263 : vector<16x128xf32>
    %c16_i32_96 = arith.constant 16 : i32
    %265 = tpu.dynamic_rotate %258 by %c16_i32_96 dim 1 : vector<16x256xf32>, i32 -> vector<16x256xf32>
    %266 = vector.extract_strided_slice %265 {offsets = [0, 0], sizes = [16, 128], strides = [1, 1]} : vector<16x256xf32> to vector<16x128xf32>
    %c43 = arith.constant 43 : index
    %c0_97 = arith.constant 0 : index
    %267 = vector.load %arg2[%c43, %c0_97] : memref<49x128xf32, #tpu.memory_space<vmem>>, vector<1x128xf32>
    %268 = vector.broadcast %267 : vector<1x128xf32> to vector<16x128xf32>
    %269 = arith.mulf %266, %268 : vector<16x128xf32>
    %270 = arith.addf %264, %269 : vector<16x128xf32>
    %c8_i32_98 = arith.constant 8 : i32
    %271 = tpu.dynamic_rotate %258 by %c8_i32_98 dim 1 : vector<16x256xf32>, i32 -> vector<16x256xf32>
    %272 = vector.extract_strided_slice %271 {offsets = [0, 0], sizes = [16, 128], strides = [1, 1]} : vector<16x256xf32> to vector<16x128xf32>
    %c44 = arith.constant 44 : index
    %c0_99 = arith.constant 0 : index
    %273 = vector.load %arg2[%c44, %c0_99] : memref<49x128xf32, #tpu.memory_space<vmem>>, vector<1x128xf32>
    %274 = vector.broadcast %273 : vector<1x128xf32> to vector<16x128xf32>
    %275 = arith.mulf %272, %274 : vector<16x128xf32>
    %276 = arith.addf %270, %275 : vector<16x128xf32>
    %277 = vector.extract_strided_slice %258 {offsets = [0, 0], sizes = [16, 128], strides = [1, 1]} : vector<16x256xf32> to vector<16x128xf32>
    %c45 = arith.constant 45 : index
    %c0_100 = arith.constant 0 : index
    %278 = vector.load %arg2[%c45, %c0_100] : memref<49x128xf32, #tpu.memory_space<vmem>>, vector<1x128xf32>
    %279 = vector.broadcast %278 : vector<1x128xf32> to vector<16x128xf32>
    %280 = arith.mulf %277, %279 : vector<16x128xf32>
    %281 = arith.addf %276, %280 : vector<16x128xf32>
    %c248_i32_101 = arith.constant 248 : i32
    %282 = tpu.dynamic_rotate %258 by %c248_i32_101 dim 1 : vector<16x256xf32>, i32 -> vector<16x256xf32>
    %283 = vector.extract_strided_slice %282 {offsets = [0, 0], sizes = [16, 128], strides = [1, 1]} : vector<16x256xf32> to vector<16x128xf32>
    %c46 = arith.constant 46 : index
    %c0_102 = arith.constant 0 : index
    %284 = vector.load %arg2[%c46, %c0_102] : memref<49x128xf32, #tpu.memory_space<vmem>>, vector<1x128xf32>
    %285 = vector.broadcast %284 : vector<1x128xf32> to vector<16x128xf32>
    %286 = arith.mulf %283, %285 : vector<16x128xf32>
    %287 = arith.addf %281, %286 : vector<16x128xf32>
    %c240_i32_103 = arith.constant 240 : i32
    %288 = tpu.dynamic_rotate %258 by %c240_i32_103 dim 1 : vector<16x256xf32>, i32 -> vector<16x256xf32>
    %289 = vector.extract_strided_slice %288 {offsets = [0, 0], sizes = [16, 128], strides = [1, 1]} : vector<16x256xf32> to vector<16x128xf32>
    %c47 = arith.constant 47 : index
    %c0_104 = arith.constant 0 : index
    %290 = vector.load %arg2[%c47, %c0_104] : memref<49x128xf32, #tpu.memory_space<vmem>>, vector<1x128xf32>
    %291 = vector.broadcast %290 : vector<1x128xf32> to vector<16x128xf32>
    %292 = arith.mulf %289, %291 : vector<16x128xf32>
    %293 = arith.addf %287, %292 : vector<16x128xf32>
    %c232_i32_105 = arith.constant 232 : i32
    %294 = tpu.dynamic_rotate %258 by %c232_i32_105 dim 1 : vector<16x256xf32>, i32 -> vector<16x256xf32>
    %295 = vector.extract_strided_slice %294 {offsets = [0, 0], sizes = [16, 128], strides = [1, 1]} : vector<16x256xf32> to vector<16x128xf32>
    %c48 = arith.constant 48 : index
    %c0_106 = arith.constant 0 : index
    %296 = vector.load %arg2[%c48, %c0_106] : memref<49x128xf32, #tpu.memory_space<vmem>>, vector<1x128xf32>
    %297 = vector.broadcast %296 : vector<1x128xf32> to vector<16x128xf32>
    %298 = arith.mulf %295, %297 : vector<16x128xf32>
    %299 = arith.addf %293, %298 : vector<16x128xf32>
    %c0_107 = arith.constant 0 : index
    %c0_108 = arith.constant 0 : index
    %300 = vector.load %arg4[%c0_107, %c0_108] : memref<8x128xf32, #tpu.memory_space<vmem>>, vector<1x128xf32>
    %c1_109 = arith.constant 1 : index
    %c0_110 = arith.constant 0 : index
    %301 = vector.load %arg4[%c1_109, %c0_110] : memref<8x128xf32, #tpu.memory_space<vmem>>, vector<1x128xf32>
    %cst_111 = arith.constant dense<0.000000e+00> : vector<128xf32>
    %302 = vector.multi_reduction <add>, %299, %cst_111 [0] : vector<16x128xf32> to vector<128xf32>
    %303 = vector.shape_cast %302 : vector<128xf32> to vector<1x128xf32>
    %cst_112 = arith.constant 1.600000e+01 : f32
    %304 = vector.broadcast %cst_112 : f32 to vector<1x128xf32>
    %305 = arith.divf %303, %304 : vector<1x128xf32>
    %306 = arith.mulf %305, %300 : vector<1x128xf32>
    %307 = arith.addf %306, %301 : vector<1x128xf32>
    %c0_113 = arith.constant 0 : index
    %c0_114 = arith.constant 0 : index
    %308 = vector.load %arg5[%c0_113, %c0_114] : memref<128x2xf32, #tpu.memory_space<vmem>>, vector<128x2xf32>
    %cst_115 = arith.constant dense<0.000000e+00> : vector<1x2xf32>
    %309 = tpu.matmul %307, %308, %cst_115 {dimension_numbers = #tpu.dot_dimension_numbers<[1], [0], [0], [1], [0, 0, 1, 1], [], []>} : vector<1x128xf32>, vector<128x2xf32>, vector<1x2xf32> -> vector<1x2xf32>
    %c7_116 = arith.constant 7 : index
    %c0_117 = arith.constant 0 : index
    %310 = vector.load %arg4[%c7_116, %c0_117] : memref<8x128xf32, #tpu.memory_space<vmem>>, vector<1x2xf32>
    %311 = arith.addf %309, %310 : vector<1x2xf32>
    %cst_118 = arith.constant 0.000000e+00 : f32
    %312 = vector.broadcast %cst_118 : f32 to vector<1x2xf32>
    %313 = arith.maximumf %311, %312 : vector<1x2xf32>
    %c0_119 = arith.constant 0 : index
    %c0_120 = arith.constant 0 : index
    %314 = vector.load %arg6[%c0_119, %c0_120] : memref<2x128xf32, #tpu.memory_space<vmem>>, vector<2x128xf32>
    %cst_121 = arith.constant dense<0.000000e+00> : vector<1x128xf32>
    %315 = tpu.matmul %313, %314, %cst_121 {dimension_numbers = #tpu.dot_dimension_numbers<[1], [0], [0], [1], [0, 0, 1, 1], [], []>} : vector<1x2xf32>, vector<2x128xf32>, vector<1x128xf32> -> vector<1x128xf32>
    %c6_122 = arith.constant 6 : index
    %c0_123 = arith.constant 0 : index
    %316 = vector.load %arg4[%c6_122, %c0_123] : memref<8x128xf32, #tpu.memory_space<vmem>>, vector<1x128xf32>
    %317 = arith.addf %315, %316 : vector<1x128xf32>
    %318 = arith.negf %317 : vector<1x128xf32>
    %319 = math.exp %318 : vector<1x128xf32>
    %cst_124 = arith.constant 1.000000e+00 : f32
    %320 = vector.broadcast %cst_124 : f32 to vector<1x128xf32>
    %321 = arith.addf %320, %319 : vector<1x128xf32>
    %322 = arith.divf %320, %321 : vector<1x128xf32>
    %323 = arith.mulf %300, %322 : vector<1x128xf32>
    %324 = vector.broadcast %323 : vector<1x128xf32> to vector<16x128xf32>
    %325 = arith.mulf %299, %324 : vector<16x128xf32>
    %326 = arith.mulf %301, %322 : vector<1x128xf32>
    %327 = vector.broadcast %326 : vector<1x128xf32> to vector<16x128xf32>
    %328 = arith.addf %325, %327 : vector<16x128xf32>
    %329 = arith.truncf %328 : vector<16x128xf32> to vector<16x128xbf16>
    %c0_125 = arith.constant 0 : index
    %c0_126 = arith.constant 0 : index
    %330 = vector.load %arg7[%c0_125, %c0_126] : memref<128x768xbf16, #tpu.memory_space<vmem>>, vector<128x768xbf16>
    %cst_127 = arith.constant dense<0.000000e+00> : vector<16x768xf32>
    %331 = tpu.matmul %329, %330, %cst_127 {dimension_numbers = #tpu.dot_dimension_numbers<[1], [0], [0], [1], [0, 0, 1, 1], [], []>} : vector<16x128xbf16>, vector<128x768xbf16>, vector<16x768xf32> -> vector<16x768xf32>
    %c0_128 = arith.constant 0 : index
    %c0_129 = arith.constant 0 : index
    %332 = vector.load %arg8[%c0_128, %c0_129] : memref<1x768xf32, #tpu.memory_space<vmem>>, vector<1x768xf32>
    %333 = vector.broadcast %332 : vector<1x768xf32> to vector<16x768xf32>
    %334 = arith.addf %331, %333 : vector<16x768xf32>
    %335 = vector.extract_strided_slice %334 {offsets = [0, 0], sizes = [16, 384], strides = [1, 1]} : vector<16x768xf32> to vector<16x384xf32>
    %cst_130 = arith.constant 0.000000e+00 : f32
    %cst_131 = arith.constant 6.000000e+00 : f32
    %336 = vector.broadcast %cst_130 : f32 to vector<16x384xf32>
    %337 = arith.maximumf %336, %335 : vector<16x384xf32>
    %338 = vector.broadcast %cst_131 : f32 to vector<16x384xf32>
    %339 = arith.minimumf %338, %337 : vector<16x384xf32>
    %340 = vector.extract_strided_slice %334 {offsets = [0, 384], sizes = [16, 384], strides = [1, 1]} : vector<16x768xf32> to vector<16x384xf32>
    %341 = arith.mulf %339, %340 : vector<16x384xf32>
    %342 = arith.truncf %341 : vector<16x384xf32> to vector<16x384xbf16>
    %c0_132 = arith.constant 0 : index
    %c0_133 = arith.constant 0 : index
    %343 = vector.load %arg9[%c0_132, %c0_133] : memref<384x128xbf16, #tpu.memory_space<vmem>>, vector<384x128xbf16>
    %cst_134 = arith.constant dense<0.000000e+00> : vector<16x128xf32>
    %344 = tpu.matmul %342, %343, %cst_134 {dimension_numbers = #tpu.dot_dimension_numbers<[1], [0], [0], [1], [0, 0, 1, 1], [], []>} : vector<16x384xbf16>, vector<384x128xbf16>, vector<16x128xf32> -> vector<16x128xf32>
    %c2_135 = arith.constant 2 : index
    %c0_136 = arith.constant 0 : index
    %345 = vector.load %arg4[%c2_135, %c0_136] : memref<8x128xf32, #tpu.memory_space<vmem>>, vector<1x128xf32>
    %346 = vector.broadcast %345 : vector<1x128xf32> to vector<16x128xf32>
    %347 = arith.mulf %344, %346 : vector<16x128xf32>
    %c3_137 = arith.constant 3 : index
    %c0_138 = arith.constant 0 : index
    %348 = vector.load %arg4[%c3_137, %c0_138] : memref<8x128xf32, #tpu.memory_space<vmem>>, vector<1x128xf32>
    %349 = vector.broadcast %348 : vector<1x128xf32> to vector<16x128xf32>
    %350 = arith.addf %347, %349 : vector<16x128xf32>
    %c3_139 = arith.constant 3 : index
    %c0_140 = arith.constant 0 : index
    %351 = vector.load %arg11[%c3_139, %c0_140] : memref<24x256xf32, #tpu.memory_space<vmem>>, vector<16x128xf32>
    tpu.vector_store %arg11[%c3_139, %c0_140], %350 {strides = array<i32>} : memref<24x256xf32, #tpu.memory_space<vmem>>, vector<16x128xf32>,
    %cst_141 = arith.constant 0.000000e+00 : f32
    %352 = vector.broadcast %cst_141 : f32 to vector<16x128xf32>
    %c0_142 = arith.constant 0 : index
    %c0_143 = arith.constant 0 : index
    %353 = vector.load %arg11[%c0_142, %c0_143] : memref<24x256xf32, #tpu.memory_space<vmem>>, vector<16x256xf32>
    %c24_i32_144 = arith.constant 24 : i32
    %354 = tpu.dynamic_rotate %353 by %c24_i32_144 dim 1 : vector<16x256xf32>, i32 -> vector<16x256xf32>
    %355 = vector.extract_strided_slice %354 {offsets = [0, 0], sizes = [16, 128], strides = [1, 1]} : vector<16x256xf32> to vector<16x128xf32>
    %c0_145 = arith.constant 0 : index
    %c0_146 = arith.constant 0 : index
    %356 = vector.load %arg3[%c0_145, %c0_146] : memref<49x128xf32, #tpu.memory_space<vmem>>, vector<1x128xf32>
    %357 = vector.broadcast %356 : vector<1x128xf32> to vector<16x128xf32>
    %358 = arith.mulf %355, %357 : vector<16x128xf32>
    %359 = arith.addf %352, %358 : vector<16x128xf32>
    %c16_i32_147 = arith.constant 16 : i32
    %360 = tpu.dynamic_rotate %353 by %c16_i32_147 dim 1 : vector<16x256xf32>, i32 -> vector<16x256xf32>
    %361 = vector.extract_strided_slice %360 {offsets = [0, 0], sizes = [16, 128], strides = [1, 1]} : vector<16x256xf32> to vector<16x128xf32>
    %c1_148 = arith.constant 1 : index
    %c0_149 = arith.constant 0 : index
    %362 = vector.load %arg3[%c1_148, %c0_149] : memref<49x128xf32, #tpu.memory_space<vmem>>, vector<1x128xf32>
    %363 = vector.broadcast %362 : vector<1x128xf32> to vector<16x128xf32>
    %364 = arith.mulf %361, %363 : vector<16x128xf32>
    %365 = arith.addf %359, %364 : vector<16x128xf32>
    %c8_i32_150 = arith.constant 8 : i32
    %366 = tpu.dynamic_rotate %353 by %c8_i32_150 dim 1 : vector<16x256xf32>, i32 -> vector<16x256xf32>
    %367 = vector.extract_strided_slice %366 {offsets = [0, 0], sizes = [16, 128], strides = [1, 1]} : vector<16x256xf32> to vector<16x128xf32>
    %c2_151 = arith.constant 2 : index
    %c0_152 = arith.constant 0 : index
    %368 = vector.load %arg3[%c2_151, %c0_152] : memref<49x128xf32, #tpu.memory_space<vmem>>, vector<1x128xf32>
    %369 = vector.broadcast %368 : vector<1x128xf32> to vector<16x128xf32>
    %370 = arith.mulf %367, %369 : vector<16x128xf32>
    %371 = arith.addf %365, %370 : vector<16x128xf32>
    %372 = vector.extract_strided_slice %353 {offsets = [0, 0], sizes = [16, 128], strides = [1, 1]} : vector<16x256xf32> to vector<16x128xf32>
    %c3_153 = arith.constant 3 : index
    %c0_154 = arith.constant 0 : index
    %373 = vector.load %arg3[%c3_153, %c0_154] : memref<49x128xf32, #tpu.memory_space<vmem>>, vector<1x128xf32>
    %374 = vector.broadcast %373 : vector<1x128xf32> to vector<16x128xf32>
    %375 = arith.mulf %372, %374 : vector<16x128xf32>
    %376 = arith.addf %371, %375 : vector<16x128xf32>
    %c248_i32_155 = arith.constant 248 : i32
    %377 = tpu.dynamic_rotate %353 by %c248_i32_155 dim 1 : vector<16x256xf32>, i32 -> vector<16x256xf32>
    %378 = vector.extract_strided_slice %377 {offsets = [0, 0], sizes = [16, 128], strides = [1, 1]} : vector<16x256xf32> to vector<16x128xf32>
    %c4_156 = arith.constant 4 : index
    %c0_157 = arith.constant 0 : index
    %379 = vector.load %arg3[%c4_156, %c0_157] : memref<49x128xf32, #tpu.memory_space<vmem>>, vector<1x128xf32>
    %380 = vector.broadcast %379 : vector<1x128xf32> to vector<16x128xf32>
    %381 = arith.mulf %378, %380 : vector<16x128xf32>
    %382 = arith.addf %376, %381 : vector<16x128xf32>
    %c240_i32_158 = arith.constant 240 : i32
    %383 = tpu.dynamic_rotate %353 by %c240_i32_158 dim 1 : vector<16x256xf32>, i32 -> vector<16x256xf32>
    %384 = vector.extract_strided_slice %383 {offsets = [0, 0], sizes = [16, 128], strides = [1, 1]} : vector<16x256xf32> to vector<16x128xf32>
    %c5_159 = arith.constant 5 : index
    %c0_160 = arith.constant 0 : index
    %385 = vector.load %arg3[%c5_159, %c0_160] : memref<49x128xf32, #tpu.memory_space<vmem>>, vector<1x128xf32>
    %386 = vector.broadcast %385 : vector<1x128xf32> to vector<16x128xf32>
    %387 = arith.mulf %384, %386 : vector<16x128xf32>
    %388 = arith.addf %382, %387 : vector<16x128xf32>
    %c232_i32_161 = arith.constant 232 : i32
    %389 = tpu.dynamic_rotate %353 by %c232_i32_161 dim 1 : vector<16x256xf32>, i32 -> vector<16x256xf32>
    %390 = vector.extract_strided_slice %389 {offsets = [0, 0], sizes = [16, 128], strides = [1, 1]} : vector<16x256xf32> to vector<16x128xf32>
    %c6_162 = arith.constant 6 : index
    %c0_163 = arith.constant 0 : index
    %391 = vector.load %arg3[%c6_162, %c0_163] : memref<49x128xf32, #tpu.memory_space<vmem>>, vector<1x128xf32>
    %392 = vector.broadcast %391 : vector<1x128xf32> to vector<16x128xf32>
    %393 = arith.mulf %390, %392 : vector<16x128xf32>
    %394 = arith.addf %388, %393 : vector<16x128xf32>
    %c1_164 = arith.constant 1 : index
    %c0_165 = arith.constant 0 : index
    %395 = vector.load %arg11[%c1_164, %c0_165] : memref<24x256xf32, #tpu.memory_space<vmem>>, vector<16x256xf32>
    %c24_i32_166 = arith.constant 24 : i32
    %396 = tpu.dynamic_rotate %395 by %c24_i32_166 dim 1 : vector<16x256xf32>, i32 -> vector<16x256xf32>
    %397 = vector.extract_strided_slice %396 {offsets = [0, 0], sizes = [16, 128], strides = [1, 1]} : vector<16x256xf32> to vector<16x128xf32>
    %c7_167 = arith.constant 7 : index
    %c0_168 = arith.constant 0 : index
    %398 = vector.load %arg3[%c7_167, %c0_168] : memref<49x128xf32, #tpu.memory_space<vmem>>, vector<1x128xf32>
    %399 = vector.broadcast %398 : vector<1x128xf32> to vector<16x128xf32>
    %400 = arith.mulf %397, %399 : vector<16x128xf32>
    %401 = arith.addf %394, %400 : vector<16x128xf32>
    %c16_i32_169 = arith.constant 16 : i32
    %402 = tpu.dynamic_rotate %395 by %c16_i32_169 dim 1 : vector<16x256xf32>, i32 -> vector<16x256xf32>
    %403 = vector.extract_strided_slice %402 {offsets = [0, 0], sizes = [16, 128], strides = [1, 1]} : vector<16x256xf32> to vector<16x128xf32>
    %c8_170 = arith.constant 8 : index
    %c0_171 = arith.constant 0 : index
    %404 = vector.load %arg3[%c8_170, %c0_171] : memref<49x128xf32, #tpu.memory_space<vmem>>, vector<1x128xf32>
    %405 = vector.broadcast %404 : vector<1x128xf32> to vector<16x128xf32>
    %406 = arith.mulf %403, %405 : vector<16x128xf32>
    %407 = arith.addf %401, %406 : vector<16x128xf32>
    %c8_i32_172 = arith.constant 8 : i32
    %408 = tpu.dynamic_rotate %395 by %c8_i32_172 dim 1 : vector<16x256xf32>, i32 -> vector<16x256xf32>
    %409 = vector.extract_strided_slice %408 {offsets = [0, 0], sizes = [16, 128], strides = [1, 1]} : vector<16x256xf32> to vector<16x128xf32>
    %c9_173 = arith.constant 9 : index
    %c0_174 = arith.constant 0 : index
    %410 = vector.load %arg3[%c9_173, %c0_174] : memref<49x128xf32, #tpu.memory_space<vmem>>, vector<1x128xf32>
    %411 = vector.broadcast %410 : vector<1x128xf32> to vector<16x128xf32>
    %412 = arith.mulf %409, %411 : vector<16x128xf32>
    %413 = arith.addf %407, %412 : vector<16x128xf32>
    %414 = vector.extract_strided_slice %395 {offsets = [0, 0], sizes = [16, 128], strides = [1, 1]} : vector<16x256xf32> to vector<16x128xf32>
    %c10_175 = arith.constant 10 : index
    %c0_176 = arith.constant 0 : index
    %415 = vector.load %arg3[%c10_175, %c0_176] : memref<49x128xf32, #tpu.memory_space<vmem>>, vector<1x128xf32>
    %416 = vector.broadcast %415 : vector<1x128xf32> to vector<16x128xf32>
    %417 = arith.mulf %414, %416 : vector<16x128xf32>
    %418 = arith.addf %413, %417 : vector<16x128xf32>
    %c248_i32_177 = arith.constant 248 : i32
    %419 = tpu.dynamic_rotate %395 by %c248_i32_177 dim 1 : vector<16x256xf32>, i32 -> vector<16x256xf32>
    %420 = vector.extract_strided_slice %419 {offsets = [0, 0], sizes = [16, 128], strides = [1, 1]} : vector<16x256xf32> to vector<16x128xf32>
    %c11_178 = arith.constant 11 : index
    %c0_179 = arith.constant 0 : index
    %421 = vector.load %arg3[%c11_178, %c0_179] : memref<49x128xf32, #tpu.memory_space<vmem>>, vector<1x128xf32>
    %422 = vector.broadcast %421 : vector<1x128xf32> to vector<16x128xf32>
    %423 = arith.mulf %420, %422 : vector<16x128xf32>
    %424 = arith.addf %418, %423 : vector<16x128xf32>
    %c240_i32_180 = arith.constant 240 : i32
    %425 = tpu.dynamic_rotate %395 by %c240_i32_180 dim 1 : vector<16x256xf32>, i32 -> vector<16x256xf32>
    %426 = vector.extract_strided_slice %425 {offsets = [0, 0], sizes = [16, 128], strides = [1, 1]} : vector<16x256xf32> to vector<16x128xf32>
    %c12_181 = arith.constant 12 : index
    %c0_182 = arith.constant 0 : index
    %427 = vector.load %arg3[%c12_181, %c0_182] : memref<49x128xf32, #tpu.memory_space<vmem>>, vector<1x128xf32>
    %428 = vector.broadcast %427 : vector<1x128xf32> to vector<16x128xf32>
    %429 = arith.mulf %426, %428 : vector<16x128xf32>
    %430 = arith.addf %424, %429 : vector<16x128xf32>
    %c232_i32_183 = arith.constant 232 : i32
    %431 = tpu.dynamic_rotate %395 by %c232_i32_183 dim 1 : vector<16x256xf32>, i32 -> vector<16x256xf32>
    %432 = vector.extract_strided_slice %431 {offsets = [0, 0], sizes = [16, 128], strides = [1, 1]} : vector<16x256xf32> to vector<16x128xf32>
    %c13_184 = arith.constant 13 : index
    %c0_185 = arith.constant 0 : index
    %433 = vector.load %arg3[%c13_184, %c0_185] : memref<49x128xf32, #tpu.memory_space<vmem>>, vector<1x128xf32>
    %434 = vector.broadcast %433 : vector<1x128xf32> to vector<16x128xf32>
    %435 = arith.mulf %432, %434 : vector<16x128xf32>
    %436 = arith.addf %430, %435 : vector<16x128xf32>
    %c2_186 = arith.constant 2 : index
    %c0_187 = arith.constant 0 : index
    %437 = vector.load %arg11[%c2_186, %c0_187] : memref<24x256xf32, #tpu.memory_space<vmem>>, vector<16x256xf32>
    %c24_i32_188 = arith.constant 24 : i32
    %438 = tpu.dynamic_rotate %437 by %c24_i32_188 dim 1 : vector<16x256xf32>, i32 -> vector<16x256xf32>
    %439 = vector.extract_strided_slice %438 {offsets = [0, 0], sizes = [16, 128], strides = [1, 1]} : vector<16x256xf32> to vector<16x128xf32>
    %c14_189 = arith.constant 14 : index
    %c0_190 = arith.constant 0 : index
    %440 = vector.load %arg3[%c14_189, %c0_190] : memref<49x128xf32, #tpu.memory_space<vmem>>, vector<1x128xf32>
    %441 = vector.broadcast %440 : vector<1x128xf32> to vector<16x128xf32>
    %442 = arith.mulf %439, %441 : vector<16x128xf32>
    %443 = arith.addf %436, %442 : vector<16x128xf32>
    %c16_i32_191 = arith.constant 16 : i32
    %444 = tpu.dynamic_rotate %437 by %c16_i32_191 dim 1 : vector<16x256xf32>, i32 -> vector<16x256xf32>
    %445 = vector.extract_strided_slice %444 {offsets = [0, 0], sizes = [16, 128], strides = [1, 1]} : vector<16x256xf32> to vector<16x128xf32>
    %c15_192 = arith.constant 15 : index
    %c0_193 = arith.constant 0 : index
    %446 = vector.load %arg3[%c15_192, %c0_193] : memref<49x128xf32, #tpu.memory_space<vmem>>, vector<1x128xf32>
    %447 = vector.broadcast %446 : vector<1x128xf32> to vector<16x128xf32>
    %448 = arith.mulf %445, %447 : vector<16x128xf32>
    %449 = arith.addf %443, %448 : vector<16x128xf32>
    %c8_i32_194 = arith.constant 8 : i32
    %450 = tpu.dynamic_rotate %437 by %c8_i32_194 dim 1 : vector<16x256xf32>, i32 -> vector<16x256xf32>
    %451 = vector.extract_strided_slice %450 {offsets = [0, 0], sizes = [16, 128], strides = [1, 1]} : vector<16x256xf32> to vector<16x128xf32>
    %c16_195 = arith.constant 16 : index
    %c0_196 = arith.constant 0 : index
    %452 = vector.load %arg3[%c16_195, %c0_196] : memref<49x128xf32, #tpu.memory_space<vmem>>, vector<1x128xf32>
    %453 = vector.broadcast %452 : vector<1x128xf32> to vector<16x128xf32>
    %454 = arith.mulf %451, %453 : vector<16x128xf32>
    %455 = arith.addf %449, %454 : vector<16x128xf32>
    %456 = vector.extract_strided_slice %437 {offsets = [0, 0], sizes = [16, 128], strides = [1, 1]} : vector<16x256xf32> to vector<16x128xf32>
    %c17_197 = arith.constant 17 : index
    %c0_198 = arith.constant 0 : index
    %457 = vector.load %arg3[%c17_197, %c0_198] : memref<49x128xf32, #tpu.memory_space<vmem>>, vector<1x128xf32>
    %458 = vector.broadcast %457 : vector<1x128xf32> to vector<16x128xf32>
    %459 = arith.mulf %456, %458 : vector<16x128xf32>
    %460 = arith.addf %455, %459 : vector<16x128xf32>
    %c248_i32_199 = arith.constant 248 : i32
    %461 = tpu.dynamic_rotate %437 by %c248_i32_199 dim 1 : vector<16x256xf32>, i32 -> vector<16x256xf32>
    %462 = vector.extract_strided_slice %461 {offsets = [0, 0], sizes = [16, 128], strides = [1, 1]} : vector<16x256xf32> to vector<16x128xf32>
    %c18_200 = arith.constant 18 : index
    %c0_201 = arith.constant 0 : index
    %463 = vector.load %arg3[%c18_200, %c0_201] : memref<49x128xf32, #tpu.memory_space<vmem>>, vector<1x128xf32>
    %464 = vector.broadcast %463 : vector<1x128xf32> to vector<16x128xf32>
    %465 = arith.mulf %462, %464 : vector<16x128xf32>
    %466 = arith.addf %460, %465 : vector<16x128xf32>
    %c240_i32_202 = arith.constant 240 : i32
    %467 = tpu.dynamic_rotate %437 by %c240_i32_202 dim 1 : vector<16x256xf32>, i32 -> vector<16x256xf32>
    %468 = vector.extract_strided_slice %467 {offsets = [0, 0], sizes = [16, 128], strides = [1, 1]} : vector<16x256xf32> to vector<16x128xf32>
    %c19_203 = arith.constant 19 : index
    %c0_204 = arith.constant 0 : index
    %469 = vector.load %arg3[%c19_203, %c0_204] : memref<49x128xf32, #tpu.memory_space<vmem>>, vector<1x128xf32>
    %470 = vector.broadcast %469 : vector<1x128xf32> to vector<16x128xf32>
    %471 = arith.mulf %468, %470 : vector<16x128xf32>
    %472 = arith.addf %466, %471 : vector<16x128xf32>
    %c232_i32_205 = arith.constant 232 : i32
    %473 = tpu.dynamic_rotate %437 by %c232_i32_205 dim 1 : vector<16x256xf32>, i32 -> vector<16x256xf32>
    %474 = vector.extract_strided_slice %473 {offsets = [0, 0], sizes = [16, 128], strides = [1, 1]} : vector<16x256xf32> to vector<16x128xf32>
    %c20_206 = arith.constant 20 : index
    %c0_207 = arith.constant 0 : index
    %475 = vector.load %arg3[%c20_206, %c0_207] : memref<49x128xf32, #tpu.memory_space<vmem>>, vector<1x128xf32>
    %476 = vector.broadcast %475 : vector<1x128xf32> to vector<16x128xf32>
    %477 = arith.mulf %474, %476 : vector<16x128xf32>
    %478 = arith.addf %472, %477 : vector<16x128xf32>
    %c3_208 = arith.constant 3 : index
    %c0_209 = arith.constant 0 : index
    %479 = vector.load %arg11[%c3_208, %c0_209] : memref<24x256xf32, #tpu.memory_space<vmem>>, vector<16x256xf32>
    %c24_i32_210 = arith.constant 24 : i32
    %480 = tpu.dynamic_rotate %479 by %c24_i32_210 dim 1 : vector<16x256xf32>, i32 -> vector<16x256xf32>
    %481 = vector.extract_strided_slice %480 {offsets = [0, 0], sizes = [16, 128], strides = [1, 1]} : vector<16x256xf32> to vector<16x128xf32>
    %c21_211 = arith.constant 21 : index
    %c0_212 = arith.constant 0 : index
    %482 = vector.load %arg3[%c21_211, %c0_212] : memref<49x128xf32, #tpu.memory_space<vmem>>, vector<1x128xf32>
    %483 = vector.broadcast %482 : vector<1x128xf32> to vector<16x128xf32>
    %484 = arith.mulf %481, %483 : vector<16x128xf32>
    %485 = arith.addf %478, %484 : vector<16x128xf32>
    %c16_i32_213 = arith.constant 16 : i32
    %486 = tpu.dynamic_rotate %479 by %c16_i32_213 dim 1 : vector<16x256xf32>, i32 -> vector<16x256xf32>
    %487 = vector.extract_strided_slice %486 {offsets = [0, 0], sizes = [16, 128], strides = [1, 1]} : vector<16x256xf32> to vector<16x128xf32>
    %c22_214 = arith.constant 22 : index
    %c0_215 = arith.constant 0 : index
    %488 = vector.load %arg3[%c22_214, %c0_215] : memref<49x128xf32, #tpu.memory_space<vmem>>, vector<1x128xf32>
    %489 = vector.broadcast %488 : vector<1x128xf32> to vector<16x128xf32>
    %490 = arith.mulf %487, %489 : vector<16x128xf32>
    %491 = arith.addf %485, %490 : vector<16x128xf32>
    %c8_i32_216 = arith.constant 8 : i32
    %492 = tpu.dynamic_rotate %479 by %c8_i32_216 dim 1 : vector<16x256xf32>, i32 -> vector<16x256xf32>
    %493 = vector.extract_strided_slice %492 {offsets = [0, 0], sizes = [16, 128], strides = [1, 1]} : vector<16x256xf32> to vector<16x128xf32>
    %c23_217 = arith.constant 23 : index
    %c0_218 = arith.constant 0 : index
    %494 = vector.load %arg3[%c23_217, %c0_218] : memref<49x128xf32, #tpu.memory_space<vmem>>, vector<1x128xf32>
    %495 = vector.broadcast %494 : vector<1x128xf32> to vector<16x128xf32>
    %496 = arith.mulf %493, %495 : vector<16x128xf32>
    %497 = arith.addf %491, %496 : vector<16x128xf32>
    %498 = vector.extract_strided_slice %479 {offsets = [0, 0], sizes = [16, 128], strides = [1, 1]} : vector<16x256xf32> to vector<16x128xf32>
    %c24_219 = arith.constant 24 : index
    %c0_220 = arith.constant 0 : index
    %499 = vector.load %arg3[%c24_219, %c0_220] : memref<49x128xf32, #tpu.memory_space<vmem>>, vector<1x128xf32>
    %500 = vector.broadcast %499 : vector<1x128xf32> to vector<16x128xf32>
    %501 = arith.mulf %498, %500 : vector<16x128xf32>
    %502 = arith.addf %497, %501 : vector<16x128xf32>
    %c248_i32_221 = arith.constant 248 : i32
    %503 = tpu.dynamic_rotate %479 by %c248_i32_221 dim 1 : vector<16x256xf32>, i32 -> vector<16x256xf32>
    %504 = vector.extract_strided_slice %503 {offsets = [0, 0], sizes = [16, 128], strides = [1, 1]} : vector<16x256xf32> to vector<16x128xf32>
    %c25_222 = arith.constant 25 : index
    %c0_223 = arith.constant 0 : index
    %505 = vector.load %arg3[%c25_222, %c0_223] : memref<49x128xf32, #tpu.memory_space<vmem>>, vector<1x128xf32>
    %506 = vector.broadcast %505 : vector<1x128xf32> to vector<16x128xf32>
    %507 = arith.mulf %504, %506 : vector<16x128xf32>
    %508 = arith.addf %502, %507 : vector<16x128xf32>
    %c240_i32_224 = arith.constant 240 : i32
    %509 = tpu.dynamic_rotate %479 by %c240_i32_224 dim 1 : vector<16x256xf32>, i32 -> vector<16x256xf32>
    %510 = vector.extract_strided_slice %509 {offsets = [0, 0], sizes = [16, 128], strides = [1, 1]} : vector<16x256xf32> to vector<16x128xf32>
    %c26_225 = arith.constant 26 : index
    %c0_226 = arith.constant 0 : index
    %511 = vector.load %arg3[%c26_225, %c0_226] : memref<49x128xf32, #tpu.memory_space<vmem>>, vector<1x128xf32>
    %512 = vector.broadcast %511 : vector<1x128xf32> to vector<16x128xf32>
    %513 = arith.mulf %510, %512 : vector<16x128xf32>
    %514 = arith.addf %508, %513 : vector<16x128xf32>
    %c232_i32_227 = arith.constant 232 : i32
    %515 = tpu.dynamic_rotate %479 by %c232_i32_227 dim 1 : vector<16x256xf32>, i32 -> vector<16x256xf32>
    %516 = vector.extract_strided_slice %515 {offsets = [0, 0], sizes = [16, 128], strides = [1, 1]} : vector<16x256xf32> to vector<16x128xf32>
    %c27_228 = arith.constant 27 : index
    %c0_229 = arith.constant 0 : index
    %517 = vector.load %arg3[%c27_228, %c0_229] : memref<49x128xf32, #tpu.memory_space<vmem>>, vector<1x128xf32>
    %518 = vector.broadcast %517 : vector<1x128xf32> to vector<16x128xf32>
    %519 = arith.mulf %516, %518 : vector<16x128xf32>
    %520 = arith.addf %514, %519 : vector<16x128xf32>
    %c4_230 = arith.constant 4 : index
    %c0_231 = arith.constant 0 : index
    %521 = vector.load %arg11[%c4_230, %c0_231] : memref<24x256xf32, #tpu.memory_space<vmem>>, vector<16x256xf32>
    %c24_i32_232 = arith.constant 24 : i32
    %522 = tpu.dynamic_rotate %521 by %c24_i32_232 dim 1 : vector<16x256xf32>, i32 -> vector<16x256xf32>
    %523 = vector.extract_strided_slice %522 {offsets = [0, 0], sizes = [16, 128], strides = [1, 1]} : vector<16x256xf32> to vector<16x128xf32>
    %c28_233 = arith.constant 28 : index
    %c0_234 = arith.constant 0 : index
    %524 = vector.load %arg3[%c28_233, %c0_234] : memref<49x128xf32, #tpu.memory_space<vmem>>, vector<1x128xf32>
    %525 = vector.broadcast %524 : vector<1x128xf32> to vector<16x128xf32>
    %526 = arith.mulf %523, %525 : vector<16x128xf32>
    %527 = arith.addf %520, %526 : vector<16x128xf32>
    %c16_i32_235 = arith.constant 16 : i32
    %528 = tpu.dynamic_rotate %521 by %c16_i32_235 dim 1 : vector<16x256xf32>, i32 -> vector<16x256xf32>
    %529 = vector.extract_strided_slice %528 {offsets = [0, 0], sizes = [16, 128], strides = [1, 1]} : vector<16x256xf32> to vector<16x128xf32>
    %c29_236 = arith.constant 29 : index
    %c0_237 = arith.constant 0 : index
    %530 = vector.load %arg3[%c29_236, %c0_237] : memref<49x128xf32, #tpu.memory_space<vmem>>, vector<1x128xf32>
    %531 = vector.broadcast %530 : vector<1x128xf32> to vector<16x128xf32>
    %532 = arith.mulf %529, %531 : vector<16x128xf32>
    %533 = arith.addf %527, %532 : vector<16x128xf32>
    %c8_i32_238 = arith.constant 8 : i32
    %534 = tpu.dynamic_rotate %521 by %c8_i32_238 dim 1 : vector<16x256xf32>, i32 -> vector<16x256xf32>
    %535 = vector.extract_strided_slice %534 {offsets = [0, 0], sizes = [16, 128], strides = [1, 1]} : vector<16x256xf32> to vector<16x128xf32>
    %c30_239 = arith.constant 30 : index
    %c0_240 = arith.constant 0 : index
    %536 = vector.load %arg3[%c30_239, %c0_240] : memref<49x128xf32, #tpu.memory_space<vmem>>, vector<1x128xf32>
    %537 = vector.broadcast %536 : vector<1x128xf32> to vector<16x128xf32>
    %538 = arith.mulf %535, %537 : vector<16x128xf32>
    %539 = arith.addf %533, %538 : vector<16x128xf32>
    %540 = vector.extract_strided_slice %521 {offsets = [0, 0], sizes = [16, 128], strides = [1, 1]} : vector<16x256xf32> to vector<16x128xf32>
    %c31_241 = arith.constant 31 : index
    %c0_242 = arith.constant 0 : index
    %541 = vector.load %arg3[%c31_241, %c0_242] : memref<49x128xf32, #tpu.memory_space<vmem>>, vector<1x128xf32>
    %542 = vector.broadcast %541 : vector<1x128xf32> to vector<16x128xf32>
    %543 = arith.mulf %540, %542 : vector<16x128xf32>
    %544 = arith.addf %539, %543 : vector<16x128xf32>
    %c248_i32_243 = arith.constant 248 : i32
    %545 = tpu.dynamic_rotate %521 by %c248_i32_243 dim 1 : vector<16x256xf32>, i32 -> vector<16x256xf32>
    %546 = vector.extract_strided_slice %545 {offsets = [0, 0], sizes = [16, 128], strides = [1, 1]} : vector<16x256xf32> to vector<16x128xf32>
    %c32_244 = arith.constant 32 : index
    %c0_245 = arith.constant 0 : index
    %547 = vector.load %arg3[%c32_244, %c0_245] : memref<49x128xf32, #tpu.memory_space<vmem>>, vector<1x128xf32>
    %548 = vector.broadcast %547 : vector<1x128xf32> to vector<16x128xf32>
    %549 = arith.mulf %546, %548 : vector<16x128xf32>
    %550 = arith.addf %544, %549 : vector<16x128xf32>
    %c240_i32_246 = arith.constant 240 : i32
    %551 = tpu.dynamic_rotate %521 by %c240_i32_246 dim 1 : vector<16x256xf32>, i32 -> vector<16x256xf32>
    %552 = vector.extract_strided_slice %551 {offsets = [0, 0], sizes = [16, 128], strides = [1, 1]} : vector<16x256xf32> to vector<16x128xf32>
    %c33_247 = arith.constant 33 : index
    %c0_248 = arith.constant 0 : index
    %553 = vector.load %arg3[%c33_247, %c0_248] : memref<49x128xf32, #tpu.memory_space<vmem>>, vector<1x128xf32>
    %554 = vector.broadcast %553 : vector<1x128xf32> to vector<16x128xf32>
    %555 = arith.mulf %552, %554 : vector<16x128xf32>
    %556 = arith.addf %550, %555 : vector<16x128xf32>
    %c232_i32_249 = arith.constant 232 : i32
    %557 = tpu.dynamic_rotate %521 by %c232_i32_249 dim 1 : vector<16x256xf32>, i32 -> vector<16x256xf32>
    %558 = vector.extract_strided_slice %557 {offsets = [0, 0], sizes = [16, 128], strides = [1, 1]} : vector<16x256xf32> to vector<16x128xf32>
    %c34_250 = arith.constant 34 : index
    %c0_251 = arith.constant 0 : index
    %559 = vector.load %arg3[%c34_250, %c0_251] : memref<49x128xf32, #tpu.memory_space<vmem>>, vector<1x128xf32>
    %560 = vector.broadcast %559 : vector<1x128xf32> to vector<16x128xf32>
    %561 = arith.mulf %558, %560 : vector<16x128xf32>
    %562 = arith.addf %556, %561 : vector<16x128xf32>
    %c5_252 = arith.constant 5 : index
    %c0_253 = arith.constant 0 : index
    %563 = vector.load %arg11[%c5_252, %c0_253] : memref<24x256xf32, #tpu.memory_space<vmem>>, vector<16x256xf32>
    %c24_i32_254 = arith.constant 24 : i32
    %564 = tpu.dynamic_rotate %563 by %c24_i32_254 dim 1 : vector<16x256xf32>, i32 -> vector<16x256xf32>
    %565 = vector.extract_strided_slice %564 {offsets = [0, 0], sizes = [16, 128], strides = [1, 1]} : vector<16x256xf32> to vector<16x128xf32>
    %c35_255 = arith.constant 35 : index
    %c0_256 = arith.constant 0 : index
    %566 = vector.load %arg3[%c35_255, %c0_256] : memref<49x128xf32, #tpu.memory_space<vmem>>, vector<1x128xf32>
    %567 = vector.broadcast %566 : vector<1x128xf32> to vector<16x128xf32>
    %568 = arith.mulf %565, %567 : vector<16x128xf32>
    %569 = arith.addf %562, %568 : vector<16x128xf32>
    %c16_i32_257 = arith.constant 16 : i32
    %570 = tpu.dynamic_rotate %563 by %c16_i32_257 dim 1 : vector<16x256xf32>, i32 -> vector<16x256xf32>
    %571 = vector.extract_strided_slice %570 {offsets = [0, 0], sizes = [16, 128], strides = [1, 1]} : vector<16x256xf32> to vector<16x128xf32>
    %c36_258 = arith.constant 36 : index
    %c0_259 = arith.constant 0 : index
    %572 = vector.load %arg3[%c36_258, %c0_259] : memref<49x128xf32, #tpu.memory_space<vmem>>, vector<1x128xf32>
    %573 = vector.broadcast %572 : vector<1x128xf32> to vector<16x128xf32>
    %574 = arith.mulf %571, %573 : vector<16x128xf32>
    %575 = arith.addf %569, %574 : vector<16x128xf32>
    %c8_i32_260 = arith.constant 8 : i32
    %576 = tpu.dynamic_rotate %563 by %c8_i32_260 dim 1 : vector<16x256xf32>, i32 -> vector<16x256xf32>
    %577 = vector.extract_strided_slice %576 {offsets = [0, 0], sizes = [16, 128], strides = [1, 1]} : vector<16x256xf32> to vector<16x128xf32>
    %c37_261 = arith.constant 37 : index
    %c0_262 = arith.constant 0 : index
    %578 = vector.load %arg3[%c37_261, %c0_262] : memref<49x128xf32, #tpu.memory_space<vmem>>, vector<1x128xf32>
    %579 = vector.broadcast %578 : vector<1x128xf32> to vector<16x128xf32>
    %580 = arith.mulf %577, %579 : vector<16x128xf32>
    %581 = arith.addf %575, %580 : vector<16x128xf32>
    %582 = vector.extract_strided_slice %563 {offsets = [0, 0], sizes = [16, 128], strides = [1, 1]} : vector<16x256xf32> to vector<16x128xf32>
    %c38_263 = arith.constant 38 : index
    %c0_264 = arith.constant 0 : index
    %583 = vector.load %arg3[%c38_263, %c0_264] : memref<49x128xf32, #tpu.memory_space<vmem>>, vector<1x128xf32>
    %584 = vector.broadcast %583 : vector<1x128xf32> to vector<16x128xf32>
    %585 = arith.mulf %582, %584 : vector<16x128xf32>
    %586 = arith.addf %581, %585 : vector<16x128xf32>
    %c248_i32_265 = arith.constant 248 : i32
    %587 = tpu.dynamic_rotate %563 by %c248_i32_265 dim 1 : vector<16x256xf32>, i32 -> vector<16x256xf32>
    %588 = vector.extract_strided_slice %587 {offsets = [0, 0], sizes = [16, 128], strides = [1, 1]} : vector<16x256xf32> to vector<16x128xf32>
    %c39_266 = arith.constant 39 : index
    %c0_267 = arith.constant 0 : index
    %589 = vector.load %arg3[%c39_266, %c0_267] : memref<49x128xf32, #tpu.memory_space<vmem>>, vector<1x128xf32>
    %590 = vector.broadcast %589 : vector<1x128xf32> to vector<16x128xf32>
    %591 = arith.mulf %588, %590 : vector<16x128xf32>
    %592 = arith.addf %586, %591 : vector<16x128xf32>
    %c240_i32_268 = arith.constant 240 : i32
    %593 = tpu.dynamic_rotate %563 by %c240_i32_268 dim 1 : vector<16x256xf32>, i32 -> vector<16x256xf32>
    %594 = vector.extract_strided_slice %593 {offsets = [0, 0], sizes = [16, 128], strides = [1, 1]} : vector<16x256xf32> to vector<16x128xf32>
    %c40_269 = arith.constant 40 : index
    %c0_270 = arith.constant 0 : index
    %595 = vector.load %arg3[%c40_269, %c0_270] : memref<49x128xf32, #tpu.memory_space<vmem>>, vector<1x128xf32>
    %596 = vector.broadcast %595 : vector<1x128xf32> to vector<16x128xf32>
    %597 = arith.mulf %594, %596 : vector<16x128xf32>
    %598 = arith.addf %592, %597 : vector<16x128xf32>
    %c232_i32_271 = arith.constant 232 : i32
    %599 = tpu.dynamic_rotate %563 by %c232_i32_271 dim 1 : vector<16x256xf32>, i32 -> vector<16x256xf32>
    %600 = vector.extract_strided_slice %599 {offsets = [0, 0], sizes = [16, 128], strides = [1, 1]} : vector<16x256xf32> to vector<16x128xf32>
    %c41_272 = arith.constant 41 : index
    %c0_273 = arith.constant 0 : index
    %601 = vector.load %arg3[%c41_272, %c0_273] : memref<49x128xf32, #tpu.memory_space<vmem>>, vector<1x128xf32>
    %602 = vector.broadcast %601 : vector<1x128xf32> to vector<16x128xf32>
    %603 = arith.mulf %600, %602 : vector<16x128xf32>
    %604 = arith.addf %598, %603 : vector<16x128xf32>
    %c6_274 = arith.constant 6 : index
    %c0_275 = arith.constant 0 : index
    %605 = vector.load %arg11[%c6_274, %c0_275] : memref<24x256xf32, #tpu.memory_space<vmem>>, vector<16x256xf32>
    %c24_i32_276 = arith.constant 24 : i32
    %606 = tpu.dynamic_rotate %605 by %c24_i32_276 dim 1 : vector<16x256xf32>, i32 -> vector<16x256xf32>
    %607 = vector.extract_strided_slice %606 {offsets = [0, 0], sizes = [16, 128], strides = [1, 1]} : vector<16x256xf32> to vector<16x128xf32>
    %c42_277 = arith.constant 42 : index
    %c0_278 = arith.constant 0 : index
    %608 = vector.load %arg3[%c42_277, %c0_278] : memref<49x128xf32, #tpu.memory_space<vmem>>, vector<1x128xf32>
    %609 = vector.broadcast %608 : vector<1x128xf32> to vector<16x128xf32>
    %610 = arith.mulf %607, %609 : vector<16x128xf32>
    %611 = arith.addf %604, %610 : vector<16x128xf32>
    %c16_i32_279 = arith.constant 16 : i32
    %612 = tpu.dynamic_rotate %605 by %c16_i32_279 dim 1 : vector<16x256xf32>, i32 -> vector<16x256xf32>
    %613 = vector.extract_strided_slice %612 {offsets = [0, 0], sizes = [16, 128], strides = [1, 1]} : vector<16x256xf32> to vector<16x128xf32>
    %c43_280 = arith.constant 43 : index
    %c0_281 = arith.constant 0 : index
    %614 = vector.load %arg3[%c43_280, %c0_281] : memref<49x128xf32, #tpu.memory_space<vmem>>, vector<1x128xf32>
    %615 = vector.broadcast %614 : vector<1x128xf32> to vector<16x128xf32>
    %616 = arith.mulf %613, %615 : vector<16x128xf32>
    %617 = arith.addf %611, %616 : vector<16x128xf32>
    %c8_i32_282 = arith.constant 8 : i32
    %618 = tpu.dynamic_rotate %605 by %c8_i32_282 dim 1 : vector<16x256xf32>, i32 -> vector<16x256xf32>
    %619 = vector.extract_strided_slice %618 {offsets = [0, 0], sizes = [16, 128], strides = [1, 1]} : vector<16x256xf32> to vector<16x128xf32>
    %c44_283 = arith.constant 44 : index
    %c0_284 = arith.constant 0 : index
    %620 = vector.load %arg3[%c44_283, %c0_284] : memref<49x128xf32, #tpu.memory_space<vmem>>, vector<1x128xf32>
    %621 = vector.broadcast %620 : vector<1x128xf32> to vector<16x128xf32>
    %622 = arith.mulf %619, %621 : vector<16x128xf32>
    %623 = arith.addf %617, %622 : vector<16x128xf32>
    %624 = vector.extract_strided_slice %605 {offsets = [0, 0], sizes = [16, 128], strides = [1, 1]} : vector<16x256xf32> to vector<16x128xf32>
    %c45_285 = arith.constant 45 : index
    %c0_286 = arith.constant 0 : index
    %625 = vector.load %arg3[%c45_285, %c0_286] : memref<49x128xf32, #tpu.memory_space<vmem>>, vector<1x128xf32>
    %626 = vector.broadcast %625 : vector<1x128xf32> to vector<16x128xf32>
    %627 = arith.mulf %624, %626 : vector<16x128xf32>
    %628 = arith.addf %623, %627 : vector<16x128xf32>
    %c248_i32_287 = arith.constant 248 : i32
    %629 = tpu.dynamic_rotate %605 by %c248_i32_287 dim 1 : vector<16x256xf32>, i32 -> vector<16x256xf32>
    %630 = vector.extract_strided_slice %629 {offsets = [0, 0], sizes = [16, 128], strides = [1, 1]} : vector<16x256xf32> to vector<16x128xf32>
    %c46_288 = arith.constant 46 : index
    %c0_289 = arith.constant 0 : index
    %631 = vector.load %arg3[%c46_288, %c0_289] : memref<49x128xf32, #tpu.memory_space<vmem>>, vector<1x128xf32>
    %632 = vector.broadcast %631 : vector<1x128xf32> to vector<16x128xf32>
    %633 = arith.mulf %630, %632 : vector<16x128xf32>
    %634 = arith.addf %628, %633 : vector<16x128xf32>
    %c240_i32_290 = arith.constant 240 : i32
    %635 = tpu.dynamic_rotate %605 by %c240_i32_290 dim 1 : vector<16x256xf32>, i32 -> vector<16x256xf32>
    %636 = vector.extract_strided_slice %635 {offsets = [0, 0], sizes = [16, 128], strides = [1, 1]} : vector<16x256xf32> to vector<16x128xf32>
    %c47_291 = arith.constant 47 : index
    %c0_292 = arith.constant 0 : index
    %637 = vector.load %arg3[%c47_291, %c0_292] : memref<49x128xf32, #tpu.memory_space<vmem>>, vector<1x128xf32>
    %638 = vector.broadcast %637 : vector<1x128xf32> to vector<16x128xf32>
    %639 = arith.mulf %636, %638 : vector<16x128xf32>
    %640 = arith.addf %634, %639 : vector<16x128xf32>
    %c232_i32_293 = arith.constant 232 : i32
    %641 = tpu.dynamic_rotate %605 by %c232_i32_293 dim 1 : vector<16x256xf32>, i32 -> vector<16x256xf32>
    %642 = vector.extract_strided_slice %641 {offsets = [0, 0], sizes = [16, 128], strides = [1, 1]} : vector<16x256xf32> to vector<16x128xf32>
    %c48_294 = arith.constant 48 : index
    %c0_295 = arith.constant 0 : index
    %643 = vector.load %arg3[%c48_294, %c0_295] : memref<49x128xf32, #tpu.memory_space<vmem>>, vector<1x128xf32>
    %644 = vector.broadcast %643 : vector<1x128xf32> to vector<16x128xf32>
    %645 = arith.mulf %642, %644 : vector<16x128xf32>
    %646 = arith.addf %640, %645 : vector<16x128xf32>
    %c4_296 = arith.constant 4 : index
    %c0_297 = arith.constant 0 : index
    %647 = vector.load %arg4[%c4_296, %c0_297] : memref<8x128xf32, #tpu.memory_space<vmem>>, vector<1x128xf32>
    %648 = vector.broadcast %647 : vector<1x128xf32> to vector<16x128xf32>
    %649 = arith.addf %646, %648 : vector<16x128xf32>
    %c5_298 = arith.constant 5 : index
    %c0_299 = arith.constant 0 : index
    %650 = vector.load %arg4[%c5_298, %c0_299] : memref<8x128xf32, #tpu.memory_space<vmem>>, vector<1x128xf32>
    %651 = vector.broadcast %650 : vector<1x128xf32> to vector<16x128xf32>
    %652 = arith.mulf %649, %651 : vector<16x128xf32>
    %653 = arith.addf %1, %652 : vector<16x128xf32>
    %c0_300 = arith.constant 0 : index
    %c0_301 = arith.constant 0 : index
    %c0_302 = arith.constant 0 : index
    %654 = vector.load %arg10[%c0_300, %c0_301, %c0_302] : memref<1x16x128xf32, #tpu.memory_space<vmem>>, vector<1x16x128xf32>
    %655 = vector.shape_cast %654 : vector<1x16x128xf32> to vector<16x128xf32>
    %656 = vector.shape_cast %653 : vector<16x128xf32> to vector<1x16x128xf32>
    tpu.vector_store %arg10[%c0_300, %c0_301, %c0_302], %656 {strides = array<i32>} : memref<1x16x128xf32, #tpu.memory_space<vmem>>, vector<1x16x128xf32>,
    return
  }
  func.func @transform_0(%arg0: i32) -> (i32, i32, i32) {
    %c0_i32 = arith.constant 0 : i32
    %c0_i32_0 = arith.constant 0 : i32
    %c0_i32_1 = arith.constant 0 : i32
    return %arg0, %c0_i32, %c0_i32_0 : i32, i32, i32
  }
  func.func @transform_1(%arg0: i32) -> (i32, i32) {
    %c0_i32 = arith.constant 0 : i32
    %c0_i32_0 = arith.constant 0 : i32
    %c0_i32_1 = arith.constant 0 : i32
    return %c0_i32, %c0_i32_0 : i32, i32
  }
  func.func @transform_2(%arg0: i32) -> (i32, i32) {
    %c0_i32 = arith.constant 0 : i32
    %c0_i32_0 = arith.constant 0 : i32
    %c0_i32_1 = arith.constant 0 : i32
    return %c0_i32, %c0_i32_0 : i32, i32
  }
  func.func @transform_3(%arg0: i32) -> (i32, i32) {
    %c0_i32 = arith.constant 0 : i32
    %c0_i32_0 = arith.constant 0 : i32
    %c0_i32_1 = arith.constant 0 : i32
    return %c0_i32, %c0_i32_0 : i32, i32
  }
  func.func @transform_4(%arg0: i32) -> (i32, i32) {
    %c0_i32 = arith.constant 0 : i32
    %c0_i32_0 = arith.constant 0 : i32
    %c0_i32_1 = arith.constant 0 : i32
    return %c0_i32, %c0_i32_0 : i32, i32
  }
  func.func @transform_5(%arg0: i32) -> (i32, i32) {
    %c0_i32 = arith.constant 0 : i32
    %c0_i32_0 = arith.constant 0 : i32
    %c0_i32_1 = arith.constant 0 : i32
    return %c0_i32, %c0_i32_0 : i32, i32
  }
  func.func @transform_6(%arg0: i32) -> (i32, i32) {
    %c0_i32 = arith.constant 0 : i32
    %c0_i32_0 = arith.constant 0 : i32
    %c0_i32_1 = arith.constant 0 : i32
    return %c0_i32, %c0_i32_0 : i32, i32
  }
  func.func @transform_7(%arg0: i32) -> (i32, i32) {
    %c0_i32 = arith.constant 0 : i32
    %c0_i32_0 = arith.constant 0 : i32
    %c0_i32_1 = arith.constant 0 : i32
    return %c0_i32, %c0_i32_0 : i32, i32
  }
  func.func @transform_8(%arg0: i32) -> (i32, i32) {
    %c0_i32 = arith.constant 0 : i32
    %c0_i32_0 = arith.constant 0 : i32
    %c0_i32_1 = arith.constant 0 : i32
    return %c0_i32, %c0_i32_0 : i32, i32
  }
  func.func @transform_9(%arg0: i32) -> (i32, i32, i32) {
    %c0_i32 = arith.constant 0 : i32
    %c0_i32_0 = arith.constant 0 : i32
    %c0_i32_1 = arith.constant 0 : i32
    return %arg0, %c0_i32, %c0_i32_0 : i32, i32, i32
  }
}

</mosaic_0001>

<llo_original>
// kernel: tpu_custom_call.1
$region0: #{tpu_custom_call.1}
  #allocation0 [shape = 'u32[]', space=smem, size = 0x4, offset = 0x4, fixed_abs, tag = 'smem constant byte address 0x4 - core index']
  #allocation1 [shape = 'u32[144,128]{1,0:T(1,128)}', space=vmem, size = 0x12000, scoped, tag = 'internal scratch']
  #allocation2 [shape = 'f32[24,256]{1,0:T(8,128)}', space=vmem, size = 0x6000, scoped, tag = 'scratch operand']
  %s0 = inlined_call_operand.hbm [shape: f32[2,16,128], index: 0, kind: input, shape index: {}]
  %s1 = inlined_call_operand.vmem [shape: f32[49,128], index: 1, kind: input, shape index: {}]
  %s2 = inlined_call_operand.vmem [shape: f32[49,128], index: 2, kind: input, shape index: {}]
  %s3 = inlined_call_operand.vmem [shape: f32[8,128], index: 3, kind: input, shape index: {}]
  %s4 = inlined_call_operand.vmem [shape: f32[128,2], index: 4, kind: input, shape index: {}]
  %s5 = inlined_call_operand.vmem [shape: f32[2,128], index: 5, kind: input, shape index: {}]
  %s6 = inlined_call_operand.hbm [shape: bf16[128,768], index: 6, kind: input, shape index: {}]
  %s7 = inlined_call_operand.vmem [shape: f32[1,768], index: 7, kind: input, shape index: {}]
  %s8 = inlined_call_operand.hbm [shape: bf16[384,128], index: 8, kind: input, shape index: {}]
  %s9 = inlined_call_operand.hbm [shape: f32[2,16,128], index: 9, kind: output, shape index: {}]
  %s10 = sld [smem:[#allocation0]]
  $region81: #{tpu_custom_call.1} parent=0
    _
  %s12 = ssub.s32 1, %s10
  %s13 = scalar_select 0, %s12, %s10
  $region1: #{tpu_custom_call.1} parent=0
    #allocation3 [shape = 'u8[16384]{0}', space=vmem, size = 0x4000, scoped, tag = 'input window, operand 0']
    #allocation4 [shape = 's32[2]{0}', space=sflag, size = 0x8, scoped, tag = 'scoped memory for tpu_custom_call.1']
    #allocation5 [shape = 's32[2]{0}', space=sflag, size = 0x8, scoped, tag = 'scoped memory for tpu_custom_call.1']
    #allocation6 [shape = 'u8[196608]{0}', space=vmem, size = 0x30000, scoped, tag = 'input window, operand 6, single buffered']
    #allocation7 [shape = 's32[1]{0}', space=sflag, size = 0x4, scoped, tag = 'scoped memory for tpu_custom_call.1']
    #allocation8 [shape = 'u8[98304]{0}', space=vmem, size = 0x18000, scoped, tag = 'input window, operand 8, single buffered']
    #allocation9 [shape = 'u8[16384]{0}', space=vmem, size = 0x4000, scoped, tag = 'output window, operand 0']
    %14 = vsyncpa [#allocation4], 0
    %s15 = scalar_lea.sflag [#allocation4], 1
    %16 = vsyncpa %s15, 0
    %17 = vsyncpa [#allocation7], 0
    %18 = vsyncpa [#allocation5], 0
    %s19 = scalar_lea.sflag [#allocation5], 1
    %20 = vsyncpa %s19, 0
    loop: start=0, step=1, limit=4
    $region2: #{tpu_custom_call.1} parent=1 // loop_pre_header
      _
    $region3: #{tpu_custom_call.1} parent=1 // loop_header
      %s22 = sphi 0, %s26
      %p23 = scmp.ge.s32.totalorder %s22, 4
      %s32 = sphi 0, %s34
      %s35 = sphi 0, %s32
      %s36 = sphi 0, %s35
      %s52 = sphi 0, %s36
      %s56 = sphi 0, %s56
      %s58 = sphi 0, %s56
      %s59 = sphi 0, %s58
      %s73 = sphi 0, %s59
      %s77 = sphi 0, %s77
      %s79 = sphi 0, %s77
      %s80 = sphi 0, %s79
      %s94 = sphi 0, %s80
      %s98 = sphi 0, %s98
      %s100 = sphi 0, %s98
      %s101 = sphi 0, %s100
      %s115 = sphi 0, %s101
      %s119 = sphi 0, %s119
      %s121 = sphi 0, %s119
      %s122 = sphi 0, %s121
      %s136 = sphi 0, %s122
      %s140 = sphi 0, %s140
      %s142 = sphi 0, %s140
      %s143 = sphi 0, %s142
      %s157 = sphi 0, %s143
      %s161 = sphi 0, %s161
      %s163 = sphi 0, %s161
      %s164 = sphi 0, %s163
      %s178 = sphi 0, %s164
      %s182 = sphi 0, %s182
      %s184 = sphi 0, %s182
      %s185 = sphi 0, %s184
      %s199 = sphi 0, %s185
      %s203 = sphi 0, %s203
      %s205 = sphi 0, %s203
      %s206 = sphi 0, %s205
      %s220 = sphi 0, %s206
      %s226 = sphi 0, %s228
      %s229 = sphi 0, %s226
      %s230 = sphi 0, %s229
      %s246 = sphi 0, %s230
    $region4: #{tpu_custom_call.1} parent=1 // loop_header_branch
      %25 = sbr.rel (%p23) target = $region8
    $region5: #{tpu_custom_call.1} parent=1 // loop_body
      %s27 = ssub.s32 %s22, 1
      %s28 = ssub.s32 %s22, 2
      %s29 = sadd.s32 %s22, 1
      %s30 = ssub.s32 %s22, %s29
      %p31 = scmp.eq.s32.totalorder %s30, 0
      %s33 = sadd.s32 %s32, 1
      %s34 = scalar_select %p31, %s32, %s33
      %p37 = pneg %p31
      %p38 = scmp.eq.s32.totalorder %s22, 1
      %p39 = por %p37, %p38
      %p40 = scmp.ne.s32.totalorder %s32, %s35
      %p41 = scmp.eq.s32.totalorder %s22, 0
      %p42 = por %p40, %p41
      %p43 = scmp.ne.s32.totalorder %s32, %s35
      %p44 = scmp.eq.s32.totalorder %s27, 1
      %p45 = por %p43, %p44
      %p46 = scmp.ne.s32.totalorder %s35, %s36
      %p47 = scmp.eq.s32.totalorder %s27, 0
      %p48 = por %p46, %p47
      %p49 = scmp.ne.s32.totalorder %s35, %s36
      %p50 = scmp.eq.s32.totalorder %s28, 1
      %p51 = por %p49, %p50
      %p53 = scmp.ne.s32.totalorder %s36, %s52
      %p54 = scmp.eq.s32.totalorder %s28, 0
      %p55 = por %p53, %p54
      %s57 = sadd.s32 %s56, 1
      %p60 = scmp.eq.s32.totalorder %s22, 1
      %p61 = scmp.ne.s32.totalorder %s56, %s58
      %p62 = scmp.eq.s32.totalorder %s22, 0
      %p63 = por %p61, %p62
      %p64 = scmp.ne.s32.totalorder %s56, %s58
      %p65 = scmp.eq.s32.totalorder %s27, 1
      %p66 = por %p64, %p65
      %p67 = scmp.ne.s32.totalorder %s58, %s59
      %p68 = scmp.eq.s32.totalorder %s27, 0
      %p69 = por %p67, %p68
      %p70 = scmp.ne.s32.totalorder %s58, %s59
      %p71 = scmp.eq.s32.totalorder %s28, 1
      %p72 = por %p70, %p71
      %p74 = scmp.ne.s32.totalorder %s59, %s73
      %p75 = scmp.eq.s32.totalorder %s28, 0
      %p76 = por %p74, %p75
      %s78 = sadd.s32 %s77, 1
      %p81 = scmp.eq.s32.totalorder %s22, 1
      %p82 = scmp.ne.s32.totalorder %s77, %s79
      %p83 = scmp.eq.s32.totalorder %s22, 0
      %p84 = por %p82, %p83
      %p85 = scmp.ne.s32.totalorder %s77, %s79
      %p86 = scmp.eq.s32.totalorder %s27, 1
      %p87 = por %p85, %p86
      %p88 = scmp.ne.s32.totalorder %s79, %s80
      %p89 = scmp.eq.s32.totalorder %s27, 0
      %p90 = por %p88, %p89
      %p91 = scmp.ne.s32.totalorder %s79, %s80
      %p92 = scmp.eq.s32.totalorder %s28, 1
      %p93 = por %p91, %p92
      %p95 = scmp.ne.s32.totalorder %s80, %s94
      %p96 = scmp.eq.s32.totalorder %s28, 0
      %p97 = por %p95, %p96
      %s99 = sadd.s32 %s98, 1
      %p102 = scmp.eq.s32.totalorder %s22, 1
      %p103 = scmp.ne.s32.totalorder %s98, %s100
      %p104 = scmp.eq.s32.totalorder %s22, 0
      %p105 = por %p103, %p104
      %p106 = scmp.ne.s32.totalorder %s98, %s100
      %p107 = scmp.eq.s32.totalorder %s27, 1
      %p108 = por %p106, %p107
      %p109 = scmp.ne.s32.totalorder %s100, %s101
      %p110 = scmp.eq.s32.totalorder %s27, 0
      %p111 = por %p109, %p110
      %p112 = scmp.ne.s32.totalorder %s100, %s101
      %p113 = scmp.eq.s32.totalorder %s28, 1
      %p114 = por %p112, %p113
      %p116 = scmp.ne.s32.totalorder %s101, %s115
      %p117 = scmp.eq.s32.totalorder %s28, 0
      %p118 = por %p116, %p117
      %s120 = sadd.s32 %s119, 1
      %p123 = scmp.eq.s32.totalorder %s22, 1
      %p124 = scmp.ne.s32.totalorder %s119, %s121
      %p125 = scmp.eq.s32.totalorder %s22, 0
      %p126 = por %p124, %p125
      %p127 = scmp.ne.s32.totalorder %s119, %s121
      %p128 = scmp.eq.s32.totalorder %s27, 1
      %p129 = por %p127, %p128
      %p130 = scmp.ne.s32.totalorder %s121, %s122
      %p131 = scmp.eq.s32.totalorder %s27, 0
      %p132 = por %p130, %p131
      %p133 = scmp.ne.s32.totalorder %s121, %s122
      %p134 = scmp.eq.s32.totalorder %s28, 1
      %p135 = por %p133, %p134
      %p137 = scmp.ne.s32.totalorder %s122, %s136
      %p138 = scmp.eq.s32.totalorder %s28, 0
      %p139 = por %p137, %p138
      %s141 = sadd.s32 %s140, 1
      %p144 = scmp.eq.s32.totalorder %s22, 1
      %p145 = scmp.ne.s32.totalorder %s140, %s142
      %p146 = scmp.eq.s32.totalorder %s22, 0
      %p147 = por %p145, %p146
      %p148 = scmp.ne.s32.totalorder %s140, %s142
      %p149 = scmp.eq.s32.totalorder %s27, 1
      %p150 = por %p148, %p149
      %p151 = scmp.ne.s32.totalorder %s142, %s143
      %p152 = scmp.eq.s32.totalorder %s27, 0
      %p153 = por %p151, %p152
      %p154 = scmp.ne.s32.totalorder %s142, %s143
      %p155 = scmp.eq.s32.totalorder %s28, 1
      %p156 = por %p154, %p155
      %p158 = scmp.ne.s32.totalorder %s143, %s157
      %p159 = scmp.eq.s32.totalorder %s28, 0
      %p160 = por %p158, %p159
      %s162 = sadd.s32 %s161, 1
      %p165 = scmp.eq.s32.totalorder %s22, 1
      %p166 = scmp.ne.s32.totalorder %s161, %s163
      %p167 = scmp.eq.s32.totalorder %s22, 0
      %p168 = por %p166, %p167
      %p169 = scmp.ne.s32.totalorder %s161, %s163
      %p170 = scmp.eq.s32.totalorder %s27, 1
      %p171 = por %p169, %p170
      %p172 = scmp.ne.s32.totalorder %s163, %s164
      %p173 = scmp.eq.s32.totalorder %s27, 0
      %p174 = por %p172, %p173
      %p175 = scmp.ne.s32.totalorder %s163, %s164
      %p176 = scmp.eq.s32.totalorder %s28, 1
      %p177 = por %p175, %p176
      %p179 = scmp.ne.s32.totalorder %s164, %s178
      %p180 = scmp.eq.s32.totalorder %s28, 0
      %p181 = por %p179, %p180
      %s183 = sadd.s32 %s182, 1
      %p186 = scmp.eq.s32.totalorder %s22, 1
      %p187 = scmp.ne.s32.totalorder %s182, %s184
      %p188 = scmp.eq.s32.totalorder %s22, 0
      %p189 = por %p187, %p188
      %p190 = scmp.ne.s32.totalorder %s182, %s184
      %p191 = scmp.eq.s32.totalorder %s27, 1
      %p192 = por %p190, %p191
      %p193 = scmp.ne.s32.totalorder %s184, %s185
      %p194 = scmp.eq.s32.totalorder %s27, 0
      %p195 = por %p193, %p194
      %p196 = scmp.ne.s32.totalorder %s184, %s185
      %p197 = scmp.eq.s32.totalorder %s28, 1
      %p198 = por %p196, %p197
      %p200 = scmp.ne.s32.totalorder %s185, %s199
      %p201 = scmp.eq.s32.totalorder %s28, 0
      %p202 = por %p200, %p201
      %s204 = sadd.s32 %s203, 1
      %p207 = scmp.eq.s32.totalorder %s22, 1
      %p208 = scmp.ne.s32.totalorder %s203, %s205
      %p209 = scmp.eq.s32.totalorder %s22, 0
      %p210 = por %p208, %p209
      %p211 = scmp.ne.s32.totalorder %s203, %s205
      %p212 = scmp.eq.s32.totalorder %s27, 1
      %p213 = por %p211, %p212
      %p214 = scmp.ne.s32.totalorder %s205, %s206
      %p215 = scmp.eq.s32.totalorder %s27, 0
      %p216 = por %p214, %p215
      %p217 = scmp.ne.s32.totalorder %s205, %s206
      %p218 = scmp.eq.s32.totalorder %s28, 1
      %p219 = por %p217, %p218
      %p221 = scmp.ne.s32.totalorder %s206, %s220
      %p222 = scmp.eq.s32.totalorder %s28, 0
      %p223 = por %p221, %p222
      %s224 = ssub.s32 %s22, %s29
      %p225 = scmp.eq.s32.totalorder %s224, 0
      %s227 = sadd.s32 %s226, 1
      %s228 = scalar_select %p225, %s226, %s227
      %p231 = pneg %p225
      %p232 = scmp.eq.s32.totalorder %s22, 1
      %p233 = por %p231, %p232
      %p234 = scmp.ne.s32.totalorder %s226, %s229
      %p235 = scmp.eq.s32.totalorder %s22, 0
      %p236 = por %p234, %p235
      %p237 = scmp.ne.s32.totalorder %s226, %s229
      %p238 = scmp.eq.s32.totalorder %s27, 1
      %p239 = por %p237, %p238
      %p240 = scmp.ne.s32.totalorder %s229, %s230
      %p241 = scmp.eq.s32.totalorder %s27, 0
      %p242 = por %p240, %p241
      %p243 = scmp.ne.s32.totalorder %s229, %s230
      %p244 = scmp.eq.s32.totalorder %s28, 1
      %p245 = por %p243, %p244
      %p247 = scmp.ne.s32.totalorder %s230, %s246
      %p248 = scmp.eq.s32.totalorder %s28, 0
      %p249 = por %p247, %p248
      %p250 = scmp.le.s32.totalorder 1, %s22
      %p251 = scmp.lt.s32.totalorder %s22, 3
      %p252 = pnand %p250, %p251
      %p253 = pneg %p252
      // Predicated region
      $region9: #{tpu_custom_call.1} parent=5 // pred_check
        _
      $region10: #{tpu_custom_call.1} parent=5 // pred_check_branch
        %255 = sbr.rel (%p252) target = $region12
      $region11: #{tpu_custom_call.1} parent=5 // pred_region
        %s256 = ssub.s32 %s22, 1
        // Predicated region
        $region13: #{tpu_custom_call.1} parent=11 // pred_check
          %p257 = pneg %p69
        $region14: #{tpu_custom_call.1} parent=11 // pred_check_branch
          %259 = sbr.rel (%p257) target = $region16
        $region15: #{tpu_custom_call.1} parent=11 // pred_region
          _
        $region16: #{tpu_custom_call.1} parent=11 // pred_fallthru
          _
        // Predicated region
        $region17: #{tpu_custom_call.1} parent=11 // pred_check
          %p260 = pneg %p90
        $region18: #{tpu_custom_call.1} parent=11 // pred_check_branch
          %262 = sbr.rel (%p260) target = $region20
        $region19: #{tpu_custom_call.1} parent=11 // pred_region
          _
        $region20: #{tpu_custom_call.1} parent=11 // pred_fallthru
          _
        // Predicated region
        $region21: #{tpu_custom_call.1} parent=11 // pred_check
          %p263 = pneg %p111
        $region22: #{tpu_custom_call.1} parent=11 // pred_check_branch
          %265 = sbr.rel (%p263) target = $region24
        $region23: #{tpu_custom_call.1} parent=11 // pred_region
          _
        $region24: #{tpu_custom_call.1} parent=11 // pred_fallthru
          _
        // Predicated region
        $region25: #{tpu_custom_call.1} parent=11 // pred_check
          %p266 = pneg %p132
        $region26: #{tpu_custom_call.1} parent=11 // pred_check_branch
          %268 = sbr.rel (%p266) target = $region28
        $region27: #{tpu_custom_call.1} parent=11 // pred_region
          _
        $region28: #{tpu_custom_call.1} parent=11 // pred_fallthru
          _
        // Predicated region
        $region29: #{tpu_custom_call.1} parent=11 // pred_check
          %p269 = pneg %p153
        $region30: #{tpu_custom_call.1} parent=11 // pred_check_branch
          %271 = sbr.rel (%p269) target = $region32
        $region31: #{tpu_custom_call.1} parent=11 // pred_region
          _
        $region32: #{tpu_custom_call.1} parent=11 // pred_fallthru
          _
        // Predicated region
        $region33: #{tpu_custom_call.1} parent=11 // pred_check
          %p272 = pneg %p174
        $region34: #{tpu_custom_call.1} parent=11 // pred_check_branch
          %274 = sbr.rel (%p272) target = $region36
        $region35: #{tpu_custom_call.1} parent=11 // pred_region
          %s276 = ssub.s32 6144, 6144
          %277 = vsyncadd [#allocation7], %s276
          %s278 = sshll.u32 [#allocation6], 4
          %s279 = int_to_ptr.vmem [resolvable:$true] %s278
          %284 = dma.hbm_to_vmem [thread:$0]  %s6, 6144, %s279, [#allocation7], 384, 384, 24
        $region36: #{tpu_custom_call.1} parent=11 // pred_fallthru
          _
        // Predicated region
        $region37: #{tpu_custom_call.1} parent=11 // pred_check
          %p285 = pneg %p195
        $region38: #{tpu_custom_call.1} parent=11 // pred_check_branch
          %287 = sbr.rel (%p285) target = $region40
        $region39: #{tpu_custom_call.1} parent=11 // pred_region
          _
        $region40: #{tpu_custom_call.1} parent=11 // pred_fallthru
          _
        // Predicated region
        $region41: #{tpu_custom_call.1} parent=11 // pred_check
          %p288 = pneg %p216
        $region42: #{tpu_custom_call.1} parent=11 // pred_check_branch
          %290 = sbr.rel (%p288) target = $region44
        $region43: #{tpu_custom_call.1} parent=11 // pred_region
          %s292 = ssub.s32 3072, 3072
          %293 = vsyncadd [#allocation7], %s292
          %s294 = sshll.u32 [#allocation8], 4
          %s295 = int_to_ptr.vmem [resolvable:$true] %s294
          %300 = dma.hbm_to_vmem [thread:$0]  %s8, 3072, %s295, [#allocation7], 64, 64, 4
        $region44: #{tpu_custom_call.1} parent=11 // pred_fallthru
          _
      $region12: #{tpu_custom_call.1} parent=5 // pred_fallthru
        _
      %p301 = scmp.lt.s32.totalorder %s22, 2
      // Predicated region
      $region45: #{tpu_custom_call.1} parent=5 // pred_check
        %p302 = pneg %p301
      $region46: #{tpu_custom_call.1} parent=5 // pred_check_branch
        %304 = sbr.rel (%p302) target = $region48
      $region47: #{tpu_custom_call.1} parent=5 // pred_region
        // Predicated region
        $region49: #{tpu_custom_call.1} parent=47 // pred_check
          %p305 = pneg %p42
        $region50: #{tpu_custom_call.1} parent=47 // pred_check_branch
          %307 = sbr.rel (%p305) target = $region52
        $region51: #{tpu_custom_call.1} parent=47 // pred_region
          %s308 = sand.u32 %s32, 1
          %s309 = scalar_lea.sflag [#allocation4], %s308
          %s310 = sand.u32 %s32, 1
          %s311 = smul.addr %s310, 16
          %s312 = scalar_lea.vmem [#allocation3], %s311
          %s314 = ssub.s32 256, 256
          %315 = vsyncadd %s309, %s314
          %s316 = smul.addr %s22, 2
          %s317 = smul.addr %s316, 128
          %s318 = scalar_lea.hbm %s0, %s317
          %s319 = sshll.u32 %s312, 4
          %s320 = int_to_ptr.vmem [resolvable:$true] %s319
          %325 = dma.hbm_to_vmem [thread:$0]  %s318, 256, %s320, %s309, 128, 128, 8
        $region52: #{tpu_custom_call.1} parent=47 // pred_fallthru
          _
      $region48: #{tpu_custom_call.1} parent=5 // pred_fallthru
        _
      %p326 = scmp.le.s32.totalorder 1, %s22
      %p327 = scmp.lt.s32.totalorder %s22, 3
      %p328 = pnand %p326, %p327
      %p329 = pneg %p328
      // Predicated region
      $region53: #{tpu_custom_call.1} parent=5 // pred_check
        _
      $region54: #{tpu_custom_call.1} parent=5 // pred_check_branch
        %331 = sbr.rel (%p328) target = $region56
      $region55: #{tpu_custom_call.1} parent=5 // pred_region
        %s332 = ssub.s32 %s22, 1
        %s333 = sand.u32 %s35, 1
        %s334 = scalar_lea.sflag [#allocation4], %s333
        %s335 = sand.u32 %s35, 1
        %s336 = smul.addr %s335, 16
        %s337 = scalar_lea.vmem [#allocation3], %s336
        // Predicated region
        $region57: #{tpu_custom_call.1} parent=55 // pred_check
          %p338 = pneg %p48
        $region58: #{tpu_custom_call.1} parent=55 // pred_check_branch
          %340 = sbr.rel (%p338) target = $region60
        $region59: #{tpu_custom_call.1} parent=55 // pred_region
          %341 = dma.done %s334, 256
        $region60: #{tpu_custom_call.1} parent=55 // pred_fallthru
          _
        // Predicated region
        $region61: #{tpu_custom_call.1} parent=55 // pred_check
          %p342 = pneg %p174
        $region62: #{tpu_custom_call.1} parent=55 // pred_check_branch
          %344 = sbr.rel (%p342) target = $region64
        $region63: #{tpu_custom_call.1} parent=55 // pred_region
          %345 = dma.done [#allocation7], 6144
        $region64: #{tpu_custom_call.1} parent=55 // pred_fallthru
          _
        // Predicated region
        $region65: #{tpu_custom_call.1} parent=55 // pred_check
          %p346 = pneg %p216
        $region66: #{tpu_custom_call.1} parent=55 // pred_check_branch
          %348 = sbr.rel (%p346) target = $region68
        $region67: #{tpu_custom_call.1} parent=55 // pred_region
          %349 = dma.done [#allocation7], 3072
        $region68: #{tpu_custom_call.1} parent=55 // pred_fallthru
          _
        %s350 = sand.u32 %s35, 1
        %s351 = scalar_lea.sflag [#allocation4], %s350
        %s352 = sand.u32 %s35, 1
        %s353 = smul.addr %s352, 16
        %s354 = scalar_lea.vmem [#allocation3], %s353
        %p355 = pneg %p48
        %p356 = pneg %p45
        %p357 = pneg %p69
        %p358 = pneg %p66
        %p359 = pneg %p90
        %p360 = pneg %p87
        %p361 = pneg %p111
        %p362 = pneg %p108
        %p363 = pneg %p132
        %p364 = pneg %p129
        %p365 = pneg %p153
        %p366 = pneg %p150
        %p367 = pneg %p174
        %p368 = pneg %p171
        %p369 = pneg %p195
        %p370 = pneg %p192
        %p371 = pneg %p216
        %p372 = pneg %p213
        %p373 = pneg %p242
        %p374 = pneg %p239
        %s375 = sand.u32 %s229, 1
        %s376 = scalar_lea.sflag [#allocation5], %s375
        %s377 = sand.u32 %s229, 1
        %s378 = smul.addr %s377, 16
        %s379 = scalar_lea.vmem [#allocation9], %s378
        %v381 = vld [vmem:[%s337] sm:$0xff]
        %v382 = vld [vmem:[%s337 + $0x8] sm:$0xff]
        %383 = vst [vmem:[#allocation2] sm:$0xff] 0.0
        %384 = vst [vmem:[#allocation2 + $0x8] sm:$0xff] 0.0
        %385 = vst [vmem:[#allocation2 + $0x10] sm:$0xff] 0.0
        %386 = vst [vmem:[#allocation2 + $0x18] sm:$0xff] 0.0
        %387 = vst [vmem:[#allocation2 + $0x20] sm:$0xff] 0.0
        %388 = vst [vmem:[#allocation2 + $0x28] sm:$0xff] 0.0
        %vm391 = vcmask 1042432
        %v392 = vrot.slane %v381, 5
        %v393 = vrot.slane %v382, 5
        %v394 = vsel %vm391, %v392, %v393
        %398 = vst [vmem:[#allocation2] sm:$0xf8] %v392
        %399 = vst [vmem:[#allocation2 + $0x10] sm:$0xff] %v394
        %400 = vst [vmem:[#allocation2 + $0x20] sm:$0x7] %v393
        %v401 = vld [vmem:[#allocation2] sm:$0xff]
        %v402 = vld [vmem:[#allocation2 + $0x8] sm:$0xff]
        %v403 = vld [vmem:[#allocation2 + $0x10] sm:$0xff]
        %v404 = vld [vmem:[#allocation2 + $0x18] sm:$0xff]
        %405 = vrot.lane.b32.xlu0 %v401, 24
        %v406 = vpop.permute.xlu0 %405
        %407 = vrot.lane.b32.xlu0 %v403, 24
        %v408 = vpop.permute.xlu0 %407
        %409 = vrot.lane.b32.xlu0 %v402, 24
        %v410 = vpop.permute.xlu0 %409
        %411 = vrot.lane.b32.xlu0 %v404, 24
        %v412 = vpop.permute.xlu0 %411
        %v413 = vlaneseq
        %v414 = vand.u32 %v413, 127
        %vm415 = vcmp.lt.s32.totalorder %v414, 24
        %v416 = vsel %vm415, %v410, %v406
        %v417 = vsel %vm415, %v412, %v408
        %v418 = vld [vmem:[%s1] sm:$0x1]
        %v419 = vlaneseq
        %v420 = vshrl.u32 %v419, 7
        %v421 = vsub.s32 0, %v420
        %v422 = vrot.slane %v418, %v421
        %v423 = vmul.f32 %v416, %v422
        %v424 = vmul.f32 %v417, %v422
        %v425 = vadd.f32 %v423, 0.0
        %v426 = vadd.f32 %v424, 0.0
        %427 = vrot.lane.b32.xlu0 %v401, 16
        %v428 = vpop.permute.xlu0 %427
        %429 = vrot.lane.b32.xlu0 %v403, 16
        %v430 = vpop.permute.xlu0 %429
        %431 = vrot.lane.b32.xlu0 %v402, 16
        %v432 = vpop.permute.xlu0 %431
        %433 = vrot.lane.b32.xlu0 %v404, 16
        %v434 = vpop.permute.xlu0 %433
        %vm435 = vcmp.lt.s32.totalorder %v414, 16
        %v436 = vsel %vm435, %v432, %v428
        %v437 = vsel %vm435, %v434, %v430
        %v438 = vld [vmem:[%s1 + $0x1] sm:$0x1]
        %v439 = vlaneseq
        %v440 = vshrl.u32 %v439, 7
        %v441 = vsub.s32 0, %v440
        %v442 = vrot.slane %v438, %v441
        %v443 = vmul.f32 %v436, %v442
        %v444 = vmul.f32 %v437, %v442
        %v445 = vadd.f32 %v425, %v443
        %v446 = vadd.f32 %v426, %v444
        %447 = vrot.lane.b32.xlu0 %v401, 8
        %v448 = vpop.permute.xlu0 %447
        %449 = vrot.lane.b32.xlu0 %v403, 8
        %v450 = vpop.permute.xlu0 %449
        %451 = vrot.lane.b32.xlu0 %v402, 8
        %v452 = vpop.permute.xlu0 %451
        %453 = vrot.lane.b32.xlu0 %v404, 8
        %v454 = vpop.permute.xlu0 %453
        %vm455 = vcmp.lt.s32.totalorder %v414, 8
        %v456 = vsel %vm455, %v452, %v448
        %v457 = vsel %vm455, %v454, %v450
        %v458 = vld [vmem:[%s1 + $0x2] sm:$0x1]
        %v459 = vlaneseq
        %v460 = vshrl.u32 %v459, 7
        %v461 = vsub.s32 0, %v460
        %v462 = vrot.slane %v458, %v461
        %v463 = vmul.f32 %v456, %v462
        %v464 = vmul.f32 %v457, %v462
        %v465 = vadd.f32 %v445, %v463
        %v466 = vadd.f32 %v446, %v464
        %v467 = vld [vmem:[%s1 + $0x3] sm:$0x1]
        %v468 = vlaneseq
        %v469 = vshrl.u32 %v468, 7
        %v470 = vsub.s32 0, %v469
        %v471 = vrot.slane %v467, %v470
        %v472 = vmul.f32 %v401, %v471
        %v473 = vmul.f32 %v403, %v471
        %v474 = vadd.f32 %v465, %v472
        %v475 = vadd.f32 %v466, %v473
        %476 = vrot.lane.b32.xlu0 %v401, 120
        %v477 = vpop.permute.xlu0 %476
        %478 = vrot.lane.b32.xlu0 %v403, 120
        %v479 = vpop.permute.xlu0 %478
        %480 = vrot.lane.b32.xlu0 %v402, 120
        %v481 = vpop.permute.xlu0 %480
        %482 = vrot.lane.b32.xlu0 %v404, 120
        %v483 = vpop.permute.xlu0 %482
        %vm484 = vcmp.lt.s32.totalorder %v414, 120
        %v485 = vsel %vm484, %v477, %v481
        %v486 = vsel %vm484, %v479, %v483
        %v487 = vld [vmem:[%s1 + $0x4] sm:$0x1]
        %v488 = vlaneseq
        %v489 = vshrl.u32 %v488, 7
        %v490 = vsub.s32 0, %v489
        %v491 = vrot.slane %v487, %v490
        %v492 = vmul.f32 %v485, %v491
        %v493 = vmul.f32 %v486, %v491
        %v494 = vadd.f32 %v474, %v492
        %v495 = vadd.f32 %v475, %v493
        %496 = vrot.lane.b32.xlu0 %v401, 112
        %v497 = vpop.permute.xlu0 %496
        %498 = vrot.lane.b32.xlu0 %v403, 112
        %v499 = vpop.permute.xlu0 %498
        %500 = vrot.lane.b32.xlu0 %v402, 112
        %v501 = vpop.permute.xlu0 %500
        %502 = vrot.lane.b32.xlu0 %v404, 112
        %v503 = vpop.permute.xlu0 %502
        %vm504 = vcmp.lt.s32.totalorder %v414, 112
        %v505 = vsel %vm504, %v497, %v501
        %v506 = vsel %vm504, %v499, %v503
        %v507 = vld [vmem:[%s1 + $0x5] sm:$0x1]
        %v508 = vlaneseq
        %v509 = vshrl.u32 %v508, 7
        %v510 = vsub.s32 0, %v509
        %v511 = vrot.slane %v507, %v510
        %v512 = vmul.f32 %v505, %v511
        %v513 = vmul.f32 %v506, %v511
        %v514 = vadd.f32 %v494, %v512
        %v515 = vadd.f32 %v495, %v513
        %516 = vrot.lane.b32.xlu0 %v401, 104
        %v517 = vpop.permute.xlu0 %516
        %518 = vrot.lane.b32.xlu0 %v403, 104
        %v519 = vpop.permute.xlu0 %518
        %520 = vrot.lane.b32.xlu0 %v402, 104
        %v521 = vpop.permute.xlu0 %520
        %522 = vrot.lane.b32.xlu0 %v404, 104
        %v523 = vpop.permute.xlu0 %522
        %vm524 = vcmp.lt.s32.totalorder %v414, 104
        %v525 = vsel %vm524, %v517, %v521
        %v526 = vsel %vm524, %v519, %v523
        %v527 = vld [vmem:[%s1 + $0x6] sm:$0x1]
        %v528 = vlaneseq
        %v529 = vshrl.u32 %v528, 7
        %v530 = vsub.s32 0, %v529
        %v531 = vrot.slane %v527, %v530
        %v532 = vmul.f32 %v525, %v531
        %v533 = vmul.f32 %v526, %v531
        %v534 = vadd.f32 %v514, %v532
        %v535 = vadd.f32 %v515, %v533
        %v536 = vld [vmem:[#allocation2] sm:$0xfe]
        %v537 = vld [vmem:[#allocation2 + $0x8] sm:$0xfe]
        %v538 = vld [vmem:[#allocation2 + $0x10] sm:$0xff]
        %v539 = vld [vmem:[#allocation2 + $0x18] sm:$0xff]
        %v540 = vld [vmem:[#allocation2 + $0x20] sm:$0x1]
        %v541 = vld [vmem:[#allocation2 + $0x28] sm:$0x1]
        %vm548 = vcmask 1046528
        %v549 = vrot.slane %v536, 1
        %v550 = vrot.slane %v538, 1
        %v551 = vsel %vm548, %v549, %v550
        %v552 = vrot.slane %v537, 1
        %v553 = vrot.slane %v539, 1
        %v554 = vsel %vm548, %v552, %v553
        %v555 = vrot.slane %v540, 1
        %v556 = vsel %vm548, %v550, %v555
        %v557 = vrot.slane %v541, 1
        %v558 = vsel %vm548, %v553, %v557
        %563 = vrot.lane.b32.xlu0 %v551, 24
        %v564 = vpop.permute.xlu0 %563
        %565 = vrot.lane.b32.xlu0 %v556, 24
        %v566 = vpop.permute.xlu0 %565
        %567 = vrot.lane.b32.xlu0 %v554, 24
        %v568 = vpop.permute.xlu0 %567
        %569 = vrot.lane.b32.xlu0 %v558, 24
        %v570 = vpop.permute.xlu0 %569
        %v571 = vsel %vm415, %v568, %v564
        %v572 = vsel %vm415, %v570, %v566
        %v573 = vld [vmem:[%s1 + $0x7] sm:$0x1]
        %v574 = vlaneseq
        %v575 = vshrl.u32 %v574, 7
        %v576 = vsub.s32 0, %v575
        %v577 = vrot.slane %v573, %v576
        %v578 = vmul.f32 %v571, %v577
        %v579 = vmul.f32 %v572, %v577
        %v580 = vadd.f32 %v534, %v578
        %v581 = vadd.f32 %v535, %v579
        %582 = vrot.lane.b32.xlu0 %v551, 16
        %v583 = vpop.permute.xlu0 %582
        %584 = vrot.lane.b32.xlu0 %v556, 16
        %v585 = vpop.permute.xlu0 %584
        %586 = vrot.lane.b32.xlu0 %v554, 16
        %v587 = vpop.permute.xlu0 %586
        %588 = vrot.lane.b32.xlu0 %v558, 16
        %v589 = vpop.permute.xlu0 %588
        %v590 = vsel %vm435, %v587, %v583
        %v591 = vsel %vm435, %v589, %v585
        %v592 = vld [vmem:[%s1 + $0x8] sm:$0x1]
        %v593 = vlaneseq
        %v594 = vshrl.u32 %v593, 7
        %v595 = vsub.s32 0, %v594
        %v596 = vrot.slane %v592, %v595
        %v597 = vmul.f32 %v590, %v596
        %v598 = vmul.f32 %v591, %v596
        %v599 = vadd.f32 %v580, %v597
        %v600 = vadd.f32 %v581, %v598
        %601 = vrot.lane.b32.xlu0 %v551, 8
        %v602 = vpop.permute.xlu0 %601
        %603 = vrot.lane.b32.xlu0 %v556, 8
        %v604 = vpop.permute.xlu0 %603
        %605 = vrot.lane.b32.xlu0 %v554, 8
        %v606 = vpop.permute.xlu0 %605
        %607 = vrot.lane.b32.xlu0 %v558, 8
        %v608 = vpop.permute.xlu0 %607
        %v609 = vsel %vm455, %v606, %v602
        %v610 = vsel %vm455, %v608, %v604
        %v611 = vld [vmem:[%s1 + $0x9] sm:$0x1]
        %v612 = vlaneseq
        %v613 = vshrl.u32 %v612, 7
        %v614 = vsub.s32 0, %v613
        %v615 = vrot.slane %v611, %v614
        %v616 = vmul.f32 %v609, %v615
        %v617 = vmul.f32 %v610, %v615
        %v618 = vadd.f32 %v599, %v616
        %v619 = vadd.f32 %v600, %v617
        %v620 = vld [vmem:[%s1 + $0xa] sm:$0x1]
        %v621 = vlaneseq
        %v622 = vshrl.u32 %v621, 7
        %v623 = vsub.s32 0, %v622
        %v624 = vrot.slane %v620, %v623
        %v625 = vmul.f32 %v536, %v624
        %v626 = vmul.f32 %v538, %v624
        %v627 = vmul.f32 %v540, %v624
        %v631 = vrot.slane %v625, 1
        %v632 = vrot.slane %v626, 1
        %v633 = vsel %vm548, %v631, %v632
        %v634 = vrot.slane %v627, 1
        %v635 = vsel %vm548, %v632, %v634
        %v638 = vadd.f32 %v618, %v633
        %v639 = vadd.f32 %v619, %v635
        %640 = vrot.lane.b32.xlu0 %v551, 120
        %v641 = vpop.permute.xlu0 %640
        %642 = vrot.lane.b32.xlu0 %v556, 120
        %v643 = vpop.permute.xlu0 %642
        %644 = vrot.lane.b32.xlu0 %v554, 120
        %v645 = vpop.permute.xlu0 %644
        %646 = vrot.lane.b32.xlu0 %v558, 120
        %v647 = vpop.permute.xlu0 %646
        %v648 = vsel %vm484, %v641, %v645
        %v649 = vsel %vm484, %v643, %v647
        %v650 = vld [vmem:[%s1 + $0xb] sm:$0x1]
        %v651 = vlaneseq
        %v652 = vshrl.u32 %v651, 7
        %v653 = vsub.s32 0, %v652
        %v654 = vrot.slane %v650, %v653
        %v655 = vmul.f32 %v648, %v654
        %v656 = vmul.f32 %v649, %v654
        %v657 = vadd.f32 %v638, %v655
        %v658 = vadd.f32 %v639, %v656
        %659 = vrot.lane.b32.xlu0 %v551, 112
        %v660 = vpop.permute.xlu0 %659
        %661 = vrot.lane.b32.xlu0 %v556, 112
        %v662 = vpop.permute.xlu0 %661
        %663 = vrot.lane.b32.xlu0 %v554, 112
        %v664 = vpop.permute.xlu0 %663
        %665 = vrot.lane.b32.xlu0 %v558, 112
        %v666 = vpop.permute.xlu0 %665
        %v667 = vsel %vm504, %v660, %v664
        %v668 = vsel %vm504, %v662, %v666
        %v669 = vld [vmem:[%s1 + $0xc] sm:$0x1]
        %v670 = vlaneseq
        %v671 = vshrl.u32 %v670, 7
        %v672 = vsub.s32 0, %v671
        %v673 = vrot.slane %v669, %v672
        %v674 = vmul.f32 %v667, %v673
        %v675 = vmul.f32 %v668, %v673
        %v676 = vadd.f32 %v657, %v674
        %v677 = vadd.f32 %v658, %v675
        %678 = vrot.lane.b32.xlu0 %v551, 104
        %v679 = vpop.permute.xlu0 %678
        %680 = vrot.lane.b32.xlu0 %v556, 104
        %v681 = vpop.permute.xlu0 %680
        %682 = vrot.lane.b32.xlu0 %v554, 104
        %v683 = vpop.permute.xlu0 %682
        %684 = vrot.lane.b32.xlu0 %v558, 104
        %v685 = vpop.permute.xlu0 %684
        %v686 = vsel %vm524, %v679, %v683
        %v687 = vsel %vm524, %v681, %v685
        %v688 = vld [vmem:[%s1 + $0xd] sm:$0x1]
        %v689 = vlaneseq
        %v690 = vshrl.u32 %v689, 7
        %v691 = vsub.s32 0, %v690
        %v692 = vrot.slane %v688, %v691
        %v693 = vmul.f32 %v686, %v692
        %v694 = vmul.f32 %v687, %v692
        %v695 = vadd.f32 %v676, %v693
        %v696 = vadd.f32 %v677, %v694
        %v697 = vld [vmem:[#allocation2] sm:$0xfc]
        %v698 = vld [vmem:[#allocation2 + $0x8] sm:$0xfc]
        %v699 = vld [vmem:[#allocation2 + $0x20] sm:$0x3]
        %v700 = vld [vmem:[#allocation2 + $0x28] sm:$0x3]
        %vm705 = vcmask 1045504
        %v706 = vrot.slane %v697, 2
        %v707 = vrot.slane %v538, 2
        %v708 = vsel %vm705, %v706, %v707
        %v709 = vrot.slane %v698, 2
        %v710 = vrot.slane %v539, 2
        %v711 = vsel %vm705, %v709, %v710
        %v712 = vrot.slane %v699, 2
        %v713 = vsel %vm705, %v707, %v712
        %v714 = vrot.slane %v700, 2
        %v715 = vsel %vm705, %v710, %v714
        %720 = vrot.lane.b32.xlu0 %v708, 24
        %v721 = vpop.permute.xlu0 %720
        %722 = vrot.lane.b32.xlu0 %v713, 24
        %v723 = vpop.permute.xlu0 %722
        %724 = vrot.lane.b32.xlu0 %v711, 24
        %v725 = vpop.permute.xlu0 %724
        %726 = vrot.lane.b32.xlu0 %v715, 24
        %v727 = vpop.permute.xlu0 %726
        %v728 = vsel %vm415, %v725, %v721
        %v729 = vsel %vm415, %v727, %v723
        %v730 = vld [vmem:[%s1 + $0xe] sm:$0x1]
        %v731 = vlaneseq
        %v732 = vshrl.u32 %v731, 7
        %v733 = vsub.s32 0, %v732
        %v734 = vrot.slane %v730, %v733
        %v735 = vmul.f32 %v728, %v734
        %v736 = vmul.f32 %v729, %v734
        %v737 = vadd.f32 %v695, %v735
        %v738 = vadd.f32 %v696, %v736
        %739 = vrot.lane.b32.xlu0 %v708, 16
        %v740 = vpop.permute.xlu0 %739
        %741 = vrot.lane.b32.xlu0 %v713, 16
        %v742 = vpop.permute.xlu0 %741
        %743 = vrot.lane.b32.xlu0 %v711, 16
        %v744 = vpop.permute.xlu0 %743
        %745 = vrot.lane.b32.xlu0 %v715, 16
        %v746 = vpop.permute.xlu0 %745
        %v747 = vsel %vm435, %v744, %v740
        %v748 = vsel %vm435, %v746, %v742
        %v749 = vld [vmem:[%s1 + $0xf] sm:$0x1]
        %v750 = vlaneseq
        %v751 = vshrl.u32 %v750, 7
        %v752 = vsub.s32 0, %v751
        %v753 = vrot.slane %v749, %v752
        %v754 = vmul.f32 %v747, %v753
        %v755 = vmul.f32 %v748, %v753
        %v756 = vadd.f32 %v737, %v754
        %v757 = vadd.f32 %v738, %v755
        %758 = vrot.lane.b32.xlu0 %v708, 8
        %v759 = vpop.permute.xlu0 %758
        %760 = vrot.lane.b32.xlu0 %v713, 8
        %v761 = vpop.permute.xlu0 %760
        %762 = vrot.lane.b32.xlu0 %v711, 8
        %v763 = vpop.permute.xlu0 %762
        %764 = vrot.lane.b32.xlu0 %v715, 8
        %v765 = vpop.permute.xlu0 %764
        %v766 = vsel %vm455, %v763, %v759
        %v767 = vsel %vm455, %v765, %v761
        %v768 = vld [vmem:[%s1 + $0x10] sm:$0x1]
        %v769 = vlaneseq
        %v770 = vshrl.u32 %v769, 7
        %v771 = vsub.s32 0, %v770
        %v772 = vrot.slane %v768, %v771
        %v773 = vmul.f32 %v766, %v772
        %v774 = vmul.f32 %v767, %v772
        %v775 = vadd.f32 %v756, %v773
        %v776 = vadd.f32 %v757, %v774
        %v777 = vld [vmem:[%s1 + $0x11] sm:$0x1]
        %v778 = vlaneseq
        %v779 = vshrl.u32 %v778, 7
        %v780 = vsub.s32 0, %v779
        %v781 = vrot.slane %v777, %v780
        %v782 = vmul.f32 %v697, %v781
        %v783 = vmul.f32 %v538, %v781
        %v784 = vmul.f32 %v699, %v781
        %v788 = vrot.slane %v782, 2
        %v789 = vrot.slane %v783, 2
        %v790 = vsel %vm705, %v788, %v789
        %v791 = vrot.slane %v784, 2
        %v792 = vsel %vm705, %v789, %v791
        %v795 = vadd.f32 %v775, %v790
        %v796 = vadd.f32 %v776, %v792
        %797 = vrot.lane.b32.xlu0 %v708, 120
        %v798 = vpop.permute.xlu0 %797
        %799 = vrot.lane.b32.xlu0 %v713, 120
        %v800 = vpop.permute.xlu0 %799
        %801 = vrot.lane.b32.xlu0 %v711, 120
        %v802 = vpop.permute.xlu0 %801
        %803 = vrot.lane.b32.xlu0 %v715, 120
        %v804 = vpop.permute.xlu0 %803
        %v805 = vsel %vm484, %v798, %v802
        %v806 = vsel %vm484, %v800, %v804
        %v807 = vld [vmem:[%s1 + $0x12] sm:$0x1]
        %v808 = vlaneseq
        %v809 = vshrl.u32 %v808, 7
        %v810 = vsub.s32 0, %v809
        %v811 = vrot.slane %v807, %v810
        %v812 = vmul.f32 %v805, %v811
        %v813 = vmul.f32 %v806, %v811
        %v814 = vadd.f32 %v795, %v812
        %v815 = vadd.f32 %v796, %v813
        %816 = vrot.lane.b32.xlu0 %v708, 112
        %v817 = vpop.permute.xlu0 %816
        %818 = vrot.lane.b32.xlu0 %v713, 112
        %v819 = vpop.permute.xlu0 %818
        %820 = vrot.lane.b32.xlu0 %v711, 112
        %v821 = vpop.permute.xlu0 %820
        %822 = vrot.lane.b32.xlu0 %v715, 112
        %v823 = vpop.permute.xlu0 %822
        %v824 = vsel %vm504, %v817, %v821
        %v825 = vsel %vm504, %v819, %v823
        %v826 = vld [vmem:[%s1 + $0x13] sm:$0x1]
        %v827 = vlaneseq
        %v828 = vshrl.u32 %v827, 7
        %v829 = vsub.s32 0, %v828
        %v830 = vrot.slane %v826, %v829
        %v831 = vmul.f32 %v824, %v830
        %v832 = vmul.f32 %v825, %v830
        %v833 = vadd.f32 %v814, %v831
        %v834 = vadd.f32 %v815, %v832
        %835 = vrot.lane.b32.xlu0 %v708, 104
        %v836 = vpop.permute.xlu0 %835
        %837 = vrot.lane.b32.xlu0 %v713, 104
        %v838 = vpop.permute.xlu0 %837
        %839 = vrot.lane.b32.xlu0 %v711, 104
        %v840 = vpop.permute.xlu0 %839
        %841 = vrot.lane.b32.xlu0 %v715, 104
        %v842 = vpop.permute.xlu0 %841
        %v843 = vsel %vm524, %v836, %v840
        %v844 = vsel %vm524, %v838, %v842
        %v845 = vld [vmem:[%s1 + $0x14] sm:$0x1]
        %v846 = vlaneseq
        %v847 = vshrl.u32 %v846, 7
        %v848 = vsub.s32 0, %v847
        %v849 = vrot.slane %v845, %v848
        %v850 = vmul.f32 %v843, %v849
        %v851 = vmul.f32 %v844, %v849
        %v852 = vadd.f32 %v833, %v850
        %v853 = vadd.f32 %v834, %v851
        %v854 = vld [vmem:[#allocation2] sm:$0xf8]
        %v855 = vld [vmem:[#allocation2 + $0x8] sm:$0xf8]
        %v856 = vld [vmem:[#allocation2 + $0x20] sm:$0x7]
        %v857 = vld [vmem:[#allocation2 + $0x28] sm:$0x7]
        %vm862 = vcmask 1044480
        %v863 = vrot.slane %v854, 3
        %v864 = vrot.slane %v538, 3
        %v865 = vsel %vm862, %v863, %v864
        %v866 = vrot.slane %v855, 3
        %v867 = vrot.slane %v539, 3
        %v868 = vsel %vm862, %v866, %v867
        %v869 = vrot.slane %v856, 3
        %v870 = vsel %vm862, %v864, %v869
        %v871 = vrot.slane %v857, 3
        %v872 = vsel %vm862, %v867, %v871
        %877 = vrot.lane.b32.xlu0 %v865, 24
        %v878 = vpop.permute.xlu0 %877
        %879 = vrot.lane.b32.xlu0 %v870, 24
        %v880 = vpop.permute.xlu0 %879
        %881 = vrot.lane.b32.xlu0 %v868, 24
        %v882 = vpop.permute.xlu0 %881
        %883 = vrot.lane.b32.xlu0 %v872, 24
        %v884 = vpop.permute.xlu0 %883
        %v885 = vsel %vm415, %v882, %v878
        %v886 = vsel %vm415, %v884, %v880
        %v887 = vld [vmem:[%s1 + $0x15] sm:$0x1]
        %v888 = vlaneseq
        %v889 = vshrl.u32 %v888, 7
        %v890 = vsub.s32 0, %v889
        %v891 = vrot.slane %v887, %v890
        %v892 = vmul.f32 %v885, %v891
        %v893 = vmul.f32 %v886, %v891
        %v894 = vadd.f32 %v852, %v892
        %v895 = vadd.f32 %v853, %v893
        %896 = vrot.lane.b32.xlu0 %v865, 16
        %v897 = vpop.permute.xlu0 %896
        %898 = vrot.lane.b32.xlu0 %v870, 16
        %v899 = vpop.permute.xlu0 %898
        %900 = vrot.lane.b32.xlu0 %v868, 16
        %v901 = vpop.permute.xlu0 %900
        %902 = vrot.lane.b32.xlu0 %v872, 16
        %v903 = vpop.permute.xlu0 %902
        %v904 = vsel %vm435, %v901, %v897
        %v905 = vsel %vm435, %v903, %v899
        %v906 = vld [vmem:[%s1 + $0x16] sm:$0x1]
        %v907 = vlaneseq
        %v908 = vshrl.u32 %v907, 7
        %v909 = vsub.s32 0, %v908
        %v910 = vrot.slane %v906, %v909
        %v911 = vmul.f32 %v904, %v910
        %v912 = vmul.f32 %v905, %v910
        %v913 = vadd.f32 %v894, %v911
        %v914 = vadd.f32 %v895, %v912
        %915 = vrot.lane.b32.xlu0 %v865, 8
        %v916 = vpop.permute.xlu0 %915
        %917 = vrot.lane.b32.xlu0 %v870, 8
        %v918 = vpop.permute.xlu0 %917
        %919 = vrot.lane.b32.xlu0 %v868, 8
        %v920 = vpop.permute.xlu0 %919
        %921 = vrot.lane.b32.xlu0 %v872, 8
        %v922 = vpop.permute.xlu0 %921
        %v923 = vsel %vm455, %v920, %v916
        %v924 = vsel %vm455, %v922, %v918
        %v925 = vld [vmem:[%s1 + $0x17] sm:$0x1]
        %v926 = vlaneseq
        %v927 = vshrl.u32 %v926, 7
        %v928 = vsub.s32 0, %v927
        %v929 = vrot.slane %v925, %v928
        %v930 = vmul.f32 %v923, %v929
        %v931 = vmul.f32 %v924, %v929
        %v932 = vadd.f32 %v913, %v930
        %v933 = vadd.f32 %v914, %v931
        %v934 = vld [vmem:[%s1 + $0x18] sm:$0x1]
        %v935 = vlaneseq
        %v936 = vshrl.u32 %v935, 7
        %v937 = vsub.s32 0, %v936
        %v938 = vrot.slane %v934, %v937
        %v939 = vmul.f32 %v854, %v938
        %v940 = vmul.f32 %v538, %v938
        %v941 = vmul.f32 %v856, %v938
        %v945 = vrot.slane %v939, 3
        %v946 = vrot.slane %v940, 3
        %v947 = vsel %vm862, %v945, %v946
        %v948 = vrot.slane %v941, 3
        %v949 = vsel %vm862, %v946, %v948
        %v952 = vadd.f32 %v932, %v947
        %v953 = vadd.f32 %v933, %v949
        %954 = vrot.lane.b32.xlu0 %v865, 120
        %v955 = vpop.permute.xlu0 %954
        %956 = vrot.lane.b32.xlu0 %v870, 120
        %v957 = vpop.permute.xlu0 %956
        %958 = vrot.lane.b32.xlu0 %v868, 120
        %v959 = vpop.permute.xlu0 %958
        %960 = vrot.lane.b32.xlu0 %v872, 120
        %v961 = vpop.permute.xlu0 %960
        %v962 = vsel %vm484, %v955, %v959
        %v963 = vsel %vm484, %v957, %v961
        %v964 = vld [vmem:[%s1 + $0x19] sm:$0x1]
        %v965 = vlaneseq
        %v966 = vshrl.u32 %v965, 7
        %v967 = vsub.s32 0, %v966
        %v968 = vrot.slane %v964, %v967
        %v969 = vmul.f32 %v962, %v968
        %v970 = vmul.f32 %v963, %v968
        %v971 = vadd.f32 %v952, %v969
        %v972 = vadd.f32 %v953, %v970
        %973 = vrot.lane.b32.xlu0 %v865, 112
        %v974 = vpop.permute.xlu0 %973
        %975 = vrot.lane.b32.xlu0 %v870, 112
        %v976 = vpop.permute.xlu0 %975
        %977 = vrot.lane.b32.xlu0 %v868, 112
        %v978 = vpop.permute.xlu0 %977
        %979 = vrot.lane.b32.xlu0 %v872, 112
        %v980 = vpop.permute.xlu0 %979
        %v981 = vsel %vm504, %v974, %v978
        %v982 = vsel %vm504, %v976, %v980
        %v983 = vld [vmem:[%s1 + $0x1a] sm:$0x1]
        %v984 = vlaneseq
        %v985 = vshrl.u32 %v984, 7
        %v986 = vsub.s32 0, %v985
        %v987 = vrot.slane %v983, %v986
        %v988 = vmul.f32 %v981, %v987
        %v989 = vmul.f32 %v982, %v987
        %v990 = vadd.f32 %v971, %v988
        %v991 = vadd.f32 %v972, %v989
        %992 = vrot.lane.b32.xlu0 %v865, 104
        %v993 = vpop.permute.xlu0 %992
        %994 = vrot.lane.b32.xlu0 %v870, 104
        %v995 = vpop.permute.xlu0 %994
        %996 = vrot.lane.b32.xlu0 %v868, 104
        %v997 = vpop.permute.xlu0 %996
        %998 = vrot.lane.b32.xlu0 %v872, 104
        %v999 = vpop.permute.xlu0 %998
        %v1000 = vsel %vm524, %v993, %v997
        %v1001 = vsel %vm524, %v995, %v999
        %v1002 = vld [vmem:[%s1 + $0x1b] sm:$0x1]
        %v1003 = vlaneseq
        %v1004 = vshrl.u32 %v1003, 7
        %v1005 = vsub.s32 0, %v1004
        %v1006 = vrot.slane %v1002, %v1005
        %v1007 = vmul.f32 %v1000, %v1006
        %v1008 = vmul.f32 %v1001, %v1006
        %v1009 = vadd.f32 %v990, %v1007
        %v1010 = vadd.f32 %v991, %v1008
        %v1011 = vld [vmem:[#allocation2] sm:$0xf0]
        %v1012 = vld [vmem:[#allocation2 + $0x8] sm:$0xf0]
        %v1013 = vld [vmem:[#allocation2 + $0x20] sm:$0xf]
        %v1014 = vld [vmem:[#allocation2 + $0x28] sm:$0xf]
        %vm1019 = vcmask 1043456
        %v1020 = vrot.slane %v1011, 4
        %v1021 = vrot.slane %v538, 4
        %v1022 = vsel %vm1019, %v1020, %v1021
        %v1023 = vrot.slane %v1012, 4
        %v1024 = vrot.slane %v539, 4
        %v1025 = vsel %vm1019, %v1023, %v1024
        %v1026 = vrot.slane %v1013, 4
        %v1027 = vsel %vm1019, %v1021, %v1026
        %v1028 = vrot.slane %v1014, 4
        %v1029 = vsel %vm1019, %v1024, %v1028
        %1034 = vrot.lane.b32.xlu0 %v1022, 24
        %v1035 = vpop.permute.xlu0 %1034
        %1036 = vrot.lane.b32.xlu0 %v1027, 24
        %v1037 = vpop.permute.xlu0 %1036
        %1038 = vrot.lane.b32.xlu0 %v1025, 24
        %v1039 = vpop.permute.xlu0 %1038
        %1040 = vrot.lane.b32.xlu0 %v1029, 24
        %v1041 = vpop.permute.xlu0 %1040
        %v1042 = vsel %vm415, %v1039, %v1035
        %v1043 = vsel %vm415, %v1041, %v1037
        %v1044 = vld [vmem:[%s1 + $0x1c] sm:$0x1]
        %v1045 = vlaneseq
        %v1046 = vshrl.u32 %v1045, 7
        %v1047 = vsub.s32 0, %v1046
        %v1048 = vrot.slane %v1044, %v1047
        %v1049 = vmul.f32 %v1042, %v1048
        %v1050 = vmul.f32 %v1043, %v1048
        %v1051 = vadd.f32 %v1009, %v1049
        %v1052 = vadd.f32 %v1010, %v1050
        %1053 = vrot.lane.b32.xlu0 %v1022, 16
        %v1054 = vpop.permute.xlu0 %1053
        %1055 = vrot.lane.b32.xlu0 %v1027, 16
        %v1056 = vpop.permute.xlu0 %1055
        %1057 = vrot.lane.b32.xlu0 %v1025, 16
        %v1058 = vpop.permute.xlu0 %1057
        %1059 = vrot.lane.b32.xlu0 %v1029, 16
        %v1060 = vpop.permute.xlu0 %1059
        %v1061 = vsel %vm435, %v1058, %v1054
        %v1062 = vsel %vm435, %v1060, %v1056
        %v1063 = vld [vmem:[%s1 + $0x1d] sm:$0x1]
        %v1064 = vlaneseq
        %v1065 = vshrl.u32 %v1064, 7
        %v1066 = vsub.s32 0, %v1065
        %v1067 = vrot.slane %v1063, %v1066
        %v1068 = vmul.f32 %v1061, %v1067
        %v1069 = vmul.f32 %v1062, %v1067
        %v1070 = vadd.f32 %v1051, %v1068
        %v1071 = vadd.f32 %v1052, %v1069
        %1072 = vrot.lane.b32.xlu0 %v1022, 8
        %v1073 = vpop.permute.xlu0 %1072
        %1074 = vrot.lane.b32.xlu0 %v1027, 8
        %v1075 = vpop.permute.xlu0 %1074
        %1076 = vrot.lane.b32.xlu0 %v1025, 8
        %v1077 = vpop.permute.xlu0 %1076
        %1078 = vrot.lane.b32.xlu0 %v1029, 8
        %v1079 = vpop.permute.xlu0 %1078
        %v1080 = vsel %vm455, %v1077, %v1073
        %v1081 = vsel %vm455, %v1079, %v1075
        %v1082 = vld [vmem:[%s1 + $0x1e] sm:$0x1]
        %v1083 = vlaneseq
        %v1084 = vshrl.u32 %v1083, 7
        %v1085 = vsub.s32 0, %v1084
        %v1086 = vrot.slane %v1082, %v1085
        %v1087 = vmul.f32 %v1080, %v1086
        %v1088 = vmul.f32 %v1081, %v1086
        %v1089 = vadd.f32 %v1070, %v1087
        %v1090 = vadd.f32 %v1071, %v1088
        %v1091 = vld [vmem:[%s1 + $0x1f] sm:$0x1]
        %v1092 = vlaneseq
        %v1093 = vshrl.u32 %v1092, 7
        %v1094 = vsub.s32 0, %v1093
        %v1095 = vrot.slane %v1091, %v1094
        %v1096 = vmul.f32 %v1011, %v1095
        %v1097 = vmul.f32 %v538, %v1095
        %v1098 = vmul.f32 %v1013, %v1095
        %v1102 = vrot.slane %v1096, 4
        %v1103 = vrot.slane %v1097, 4
        %v1104 = vsel %vm1019, %v1102, %v1103
        %v1105 = vrot.slane %v1098, 4
        %v1106 = vsel %vm1019, %v1103, %v1105
        %v1109 = vadd.f32 %v1089, %v1104
        %v1110 = vadd.f32 %v1090, %v1106
        %1111 = vrot.lane.b32.xlu0 %v1022, 120
        %v1112 = vpop.permute.xlu0 %1111
        %1113 = vrot.lane.b32.xlu0 %v1027, 120
        %v1114 = vpop.permute.xlu0 %1113
        %1115 = vrot.lane.b32.xlu0 %v1025, 120
        %v1116 = vpop.permute.xlu0 %1115
        %1117 = vrot.lane.b32.xlu0 %v1029, 120
        %v1118 = vpop.permute.xlu0 %1117
        %v1119 = vsel %vm484, %v1112, %v1116
        %v1120 = vsel %vm484, %v1114, %v1118
        %v1121 = vld [vmem:[%s1 + $0x20] sm:$0x1]
        %v1122 = vlaneseq
        %v1123 = vshrl.u32 %v1122, 7
        %v1124 = vsub.s32 0, %v1123
        %v1125 = vrot.slane %v1121, %v1124
        %v1126 = vmul.f32 %v1119, %v1125
        %v1127 = vmul.f32 %v1120, %v1125
        %v1128 = vadd.f32 %v1109, %v1126
        %v1129 = vadd.f32 %v1110, %v1127
        %1130 = vrot.lane.b32.xlu0 %v1022, 112
        %v1131 = vpop.permute.xlu0 %1130
        %1132 = vrot.lane.b32.xlu0 %v1027, 112
        %v1133 = vpop.permute.xlu0 %1132
        %1134 = vrot.lane.b32.xlu0 %v1025, 112
        %v1135 = vpop.permute.xlu0 %1134
        %1136 = vrot.lane.b32.xlu0 %v1029, 112
        %v1137 = vpop.permute.xlu0 %1136
        %v1138 = vsel %vm504, %v1131, %v1135
        %v1139 = vsel %vm504, %v1133, %v1137
        %v1140 = vld [vmem:[%s1 + $0x21] sm:$0x1]
        %v1141 = vlaneseq
        %v1142 = vshrl.u32 %v1141, 7
        %v1143 = vsub.s32 0, %v1142
        %v1144 = vrot.slane %v1140, %v1143
        %v1145 = vmul.f32 %v1138, %v1144
        %v1146 = vmul.f32 %v1139, %v1144
        %v1147 = vadd.f32 %v1128, %v1145
        %v1148 = vadd.f32 %v1129, %v1146
        %1149 = vrot.lane.b32.xlu0 %v1022, 104
        %v1150 = vpop.permute.xlu0 %1149
        %1151 = vrot.lane.b32.xlu0 %v1027, 104
        %v1152 = vpop.permute.xlu0 %1151
        %1153 = vrot.lane.b32.xlu0 %v1025, 104
        %v1154 = vpop.permute.xlu0 %1153
        %1155 = vrot.lane.b32.xlu0 %v1029, 104
        %v1156 = vpop.permute.xlu0 %1155
        %v1157 = vsel %vm524, %v1150, %v1154
        %v1158 = vsel %vm524, %v1152, %v1156
        %v1159 = vld [vmem:[%s1 + $0x22] sm:$0x1]
        %v1160 = vlaneseq
        %v1161 = vshrl.u32 %v1160, 7
        %v1162 = vsub.s32 0, %v1161
        %v1163 = vrot.slane %v1159, %v1162
        %v1164 = vmul.f32 %v1157, %v1163
        %v1165 = vmul.f32 %v1158, %v1163
        %v1166 = vadd.f32 %v1147, %v1164
        %v1167 = vadd.f32 %v1148, %v1165
        %v1168 = vld [vmem:[#allocation2] sm:$0xe0]
        %v1169 = vld [vmem:[#allocation2 + $0x8] sm:$0xe0]
        %v1170 = vld [vmem:[#allocation2 + $0x20] sm:$0x1f]
        %v1171 = vld [vmem:[#allocation2 + $0x28] sm:$0x1f]
        %v1176 = vrot.slane %v1168, 5
        %v1177 = vrot.slane %v538, 5
        %v1178 = vsel %vm391, %v1176, %v1177
        %v1179 = vrot.slane %v1169, 5
        %v1180 = vrot.slane %v539, 5
        %v1181 = vsel %vm391, %v1179, %v1180
        %v1182 = vrot.slane %v1170, 5
        %v1183 = vsel %vm391, %v1177, %v1182
        %v1184 = vrot.slane %v1171, 5
        %v1185 = vsel %vm391, %v1180, %v1184
        %1190 = vrot.lane.b32.xlu0 %v1178, 24
        %v1191 = vpop.permute.xlu0 %1190
        %1192 = vrot.lane.b32.xlu0 %v1183, 24
        %v1193 = vpop.permute.xlu0 %1192
        %1194 = vrot.lane.b32.xlu0 %v1181, 24
        %v1195 = vpop.permute.xlu0 %1194
        %1196 = vrot.lane.b32.xlu0 %v1185, 24
        %v1197 = vpop.permute.xlu0 %1196
        %v1198 = vsel %vm415, %v1195, %v1191
        %v1199 = vsel %vm415, %v1197, %v1193
        %v1200 = vld [vmem:[%s1 + $0x23] sm:$0x1]
        %v1201 = vlaneseq
        %v1202 = vshrl.u32 %v1201, 7
        %v1203 = vsub.s32 0, %v1202
        %v1204 = vrot.slane %v1200, %v1203
        %v1205 = vmul.f32 %v1198, %v1204
        %v1206 = vmul.f32 %v1199, %v1204
        %v1207 = vadd.f32 %v1166, %v1205
        %v1208 = vadd.f32 %v1167, %v1206
        %1209 = vrot.lane.b32.xlu0 %v1178, 16
        %v1210 = vpop.permute.xlu0 %1209
        %1211 = vrot.lane.b32.xlu0 %v1183, 16
        %v1212 = vpop.permute.xlu0 %1211
        %1213 = vrot.lane.b32.xlu0 %v1181, 16
        %v1214 = vpop.permute.xlu0 %1213
        %1215 = vrot.lane.b32.xlu0 %v1185, 16
        %v1216 = vpop.permute.xlu0 %1215
        %v1217 = vsel %vm435, %v1214, %v1210
        %v1218 = vsel %vm435, %v1216, %v1212
        %v1219 = vld [vmem:[%s1 + $0x24] sm:$0x1]
        %v1220 = vlaneseq
        %v1221 = vshrl.u32 %v1220, 7
        %v1222 = vsub.s32 0, %v1221
        %v1223 = vrot.slane %v1219, %v1222
        %v1224 = vmul.f32 %v1217, %v1223
        %v1225 = vmul.f32 %v1218, %v1223
        %v1226 = vadd.f32 %v1207, %v1224
        %v1227 = vadd.f32 %v1208, %v1225
        %1228 = vrot.lane.b32.xlu0 %v1178, 8
        %v1229 = vpop.permute.xlu0 %1228
        %1230 = vrot.lane.b32.xlu0 %v1183, 8
        %v1231 = vpop.permute.xlu0 %1230
        %1232 = vrot.lane.b32.xlu0 %v1181, 8
        %v1233 = vpop.permute.xlu0 %1232
        %1234 = vrot.lane.b32.xlu0 %v1185, 8
        %v1235 = vpop.permute.xlu0 %1234
        %v1236 = vsel %vm455, %v1233, %v1229
        %v1237 = vsel %vm455, %v1235, %v1231
        %v1238 = vld [vmem:[%s1 + $0x25] sm:$0x1]
        %v1239 = vlaneseq
        %v1240 = vshrl.u32 %v1239, 7
        %v1241 = vsub.s32 0, %v1240
        %v1242 = vrot.slane %v1238, %v1241
        %v1243 = vmul.f32 %v1236, %v1242
        %v1244 = vmul.f32 %v1237, %v1242
        %v1245 = vadd.f32 %v1226, %v1243
        %v1246 = vadd.f32 %v1227, %v1244
        %v1247 = vld [vmem:[%s1 + $0x26] sm:$0x1]
        %v1248 = vlaneseq
        %v1249 = vshrl.u32 %v1248, 7
        %v1250 = vsub.s32 0, %v1249
        %v1251 = vrot.slane %v1247, %v1250
        %v1252 = vmul.f32 %v1168, %v1251
        %v1253 = vmul.f32 %v538, %v1251
        %v1254 = vmul.f32 %v1170, %v1251
        %v1258 = vrot.slane %v1252, 5
        %v1259 = vrot.slane %v1253, 5
        %v1260 = vsel %vm391, %v1258, %v1259
        %v1261 = vrot.slane %v1254, 5
        %v1262 = vsel %vm391, %v1259, %v1261
        %v1265 = vadd.f32 %v1245, %v1260
        %v1266 = vadd.f32 %v1246, %v1262
        %1267 = vrot.lane.b32.xlu0 %v1178, 120
        %v1268 = vpop.permute.xlu0 %1267
        %1269 = vrot.lane.b32.xlu0 %v1183, 120
        %v1270 = vpop.permute.xlu0 %1269
        %1271 = vrot.lane.b32.xlu0 %v1181, 120
        %v1272 = vpop.permute.xlu0 %1271
        %1273 = vrot.lane.b32.xlu0 %v1185, 120
        %v1274 = vpop.permute.xlu0 %1273
        %v1275 = vsel %vm484, %v1268, %v1272
        %v1276 = vsel %vm484, %v1270, %v1274
        %v1277 = vld [vmem:[%s1 + $0x27] sm:$0x1]
        %v1278 = vlaneseq
        %v1279 = vshrl.u32 %v1278, 7
        %v1280 = vsub.s32 0, %v1279
        %v1281 = vrot.slane %v1277, %v1280
        %v1282 = vmul.f32 %v1275, %v1281
        %v1283 = vmul.f32 %v1276, %v1281
        %v1284 = vadd.f32 %v1265, %v1282
        %v1285 = vadd.f32 %v1266, %v1283
        %1286 = vrot.lane.b32.xlu0 %v1178, 112
        %v1287 = vpop.permute.xlu0 %1286
        %1288 = vrot.lane.b32.xlu0 %v1183, 112
        %v1289 = vpop.permute.xlu0 %1288
        %1290 = vrot.lane.b32.xlu0 %v1181, 112
        %v1291 = vpop.permute.xlu0 %1290
        %1292 = vrot.lane.b32.xlu0 %v1185, 112
        %v1293 = vpop.permute.xlu0 %1292
        %v1294 = vsel %vm504, %v1287, %v1291
        %v1295 = vsel %vm504, %v1289, %v1293
        %v1296 = vld [vmem:[%s1 + $0x28] sm:$0x1]
        %v1297 = vlaneseq
        %v1298 = vshrl.u32 %v1297, 7
        %v1299 = vsub.s32 0, %v1298
        %v1300 = vrot.slane %v1296, %v1299
        %v1301 = vmul.f32 %v1294, %v1300
        %v1302 = vmul.f32 %v1295, %v1300
        %v1303 = vadd.f32 %v1284, %v1301
        %v1304 = vadd.f32 %v1285, %v1302
        %1305 = vrot.lane.b32.xlu0 %v1178, 104
        %v1306 = vpop.permute.xlu0 %1305
        %1307 = vrot.lane.b32.xlu0 %v1183, 104
        %v1308 = vpop.permute.xlu0 %1307
        %1309 = vrot.lane.b32.xlu0 %v1181, 104
        %v1310 = vpop.permute.xlu0 %1309
        %1311 = vrot.lane.b32.xlu0 %v1185, 104
        %v1312 = vpop.permute.xlu0 %1311
        %v1313 = vsel %vm524, %v1306, %v1310
        %v1314 = vsel %vm524, %v1308, %v1312
        %v1315 = vld [vmem:[%s1 + $0x29] sm:$0x1]
        %v1316 = vlaneseq
        %v1317 = vshrl.u32 %v1316, 7
        %v1318 = vsub.s32 0, %v1317
        %v1319 = vrot.slane %v1315, %v1318
        %v1320 = vmul.f32 %v1313, %v1319
        %v1321 = vmul.f32 %v1314, %v1319
        %v1322 = vadd.f32 %v1303, %v1320
        %v1323 = vadd.f32 %v1304, %v1321
        %v1324 = vld [vmem:[#allocation2] sm:$0xc0]
        %v1325 = vld [vmem:[#allocation2 + $0x8] sm:$0xc0]
        %v1326 = vld [vmem:[#allocation2 + $0x20] sm:$0x3f]
        %v1327 = vld [vmem:[#allocation2 + $0x28] sm:$0x3f]
        %vm1332 = vcmask 1041408
        %v1333 = vrot.slane %v1324, 6
        %v1334 = vrot.slane %v538, 6
        %v1335 = vsel %vm1332, %v1333, %v1334
        %v1336 = vrot.slane %v1325, 6
        %v1337 = vrot.slane %v539, 6
        %v1338 = vsel %vm1332, %v1336, %v1337
        %v1339 = vrot.slane %v1326, 6
        %v1340 = vsel %vm1332, %v1334, %v1339
        %v1341 = vrot.slane %v1327, 6
        %v1342 = vsel %vm1332, %v1337, %v1341
        %1347 = vrot.lane.b32.xlu0 %v1335, 24
        %v1348 = vpop.permute.xlu0 %1347
        %1349 = vrot.lane.b32.xlu0 %v1340, 24
        %v1350 = vpop.permute.xlu0 %1349
        %1351 = vrot.lane.b32.xlu0 %v1338, 24
        %v1352 = vpop.permute.xlu0 %1351
        %1353 = vrot.lane.b32.xlu0 %v1342, 24
        %v1354 = vpop.permute.xlu0 %1353
        %v1355 = vsel %vm415, %v1352, %v1348
        %v1356 = vsel %vm415, %v1354, %v1350
        %v1357 = vld [vmem:[%s1 + $0x2a] sm:$0x1]
        %v1358 = vlaneseq
        %v1359 = vshrl.u32 %v1358, 7
        %v1360 = vsub.s32 0, %v1359
        %v1361 = vrot.slane %v1357, %v1360
        %v1362 = vmul.f32 %v1355, %v1361
        %v1363 = vmul.f32 %v1356, %v1361
        %v1364 = vadd.f32 %v1322, %v1362
        %v1365 = vadd.f32 %v1323, %v1363
        %1366 = vrot.lane.b32.xlu0 %v1335, 16
        %v1367 = vpop.permute.xlu0 %1366
        %1368 = vrot.lane.b32.xlu0 %v1340, 16
        %v1369 = vpop.permute.xlu0 %1368
        %1370 = vrot.lane.b32.xlu0 %v1338, 16
        %v1371 = vpop.permute.xlu0 %1370
        %1372 = vrot.lane.b32.xlu0 %v1342, 16
        %v1373 = vpop.permute.xlu0 %1372
        %v1374 = vsel %vm435, %v1371, %v1367
        %v1375 = vsel %vm435, %v1373, %v1369
        %v1376 = vld [vmem:[%s1 + $0x2b] sm:$0x1]
        %v1377 = vlaneseq
        %v1378 = vshrl.u32 %v1377, 7
        %v1379 = vsub.s32 0, %v1378
        %v1380 = vrot.slane %v1376, %v1379
        %v1381 = vmul.f32 %v1374, %v1380
        %v1382 = vmul.f32 %v1375, %v1380
        %v1383 = vadd.f32 %v1364, %v1381
        %v1384 = vadd.f32 %v1365, %v1382
        %1385 = vrot.lane.b32.xlu0 %v1335, 8
        %v1386 = vpop.permute.xlu0 %1385
        %1387 = vrot.lane.b32.xlu0 %v1340, 8
        %v1388 = vpop.permute.xlu0 %1387
        %1389 = vrot.lane.b32.xlu0 %v1338, 8
        %v1390 = vpop.permute.xlu0 %1389
        %1391 = vrot.lane.b32.xlu0 %v1342, 8
        %v1392 = vpop.permute.xlu0 %1391
        %v1393 = vsel %vm455, %v1390, %v1386
        %v1394 = vsel %vm455, %v1392, %v1388
        %v1395 = vld [vmem:[%s1 + $0x2c] sm:$0x1]
        %v1396 = vlaneseq
        %v1397 = vshrl.u32 %v1396, 7
        %v1398 = vsub.s32 0, %v1397
        %v1399 = vrot.slane %v1395, %v1398
        %v1400 = vmul.f32 %v1393, %v1399
        %v1401 = vmul.f32 %v1394, %v1399
        %v1402 = vadd.f32 %v1383, %v1400
        %v1403 = vadd.f32 %v1384, %v1401
        %v1404 = vld [vmem:[%s1 + $0x2d] sm:$0x1]
        %v1405 = vlaneseq
        %v1406 = vshrl.u32 %v1405, 7
        %v1407 = vsub.s32 0, %v1406
        %v1408 = vrot.slane %v1404, %v1407
        %v1409 = vmul.f32 %v1324, %v1408
        %v1410 = vmul.f32 %v538, %v1408
        %v1411 = vmul.f32 %v1326, %v1408
        %v1415 = vrot.slane %v1409, 6
        %v1416 = vrot.slane %v1410, 6
        %v1417 = vsel %vm1332, %v1415, %v1416
        %v1418 = vrot.slane %v1411, 6
        %v1419 = vsel %vm1332, %v1416, %v1418
        %v1422 = vadd.f32 %v1402, %v1417
        %v1423 = vadd.f32 %v1403, %v1419
        %1424 = vrot.lane.b32.xlu0 %v1335, 120
        %v1425 = vpop.permute.xlu0 %1424
        %1426 = vrot.lane.b32.xlu0 %v1340, 120
        %v1427 = vpop.permute.xlu0 %1426
        %1428 = vrot.lane.b32.xlu0 %v1338, 120
        %v1429 = vpop.permute.xlu0 %1428
        %1430 = vrot.lane.b32.xlu0 %v1342, 120
        %v1431 = vpop.permute.xlu0 %1430
        %v1432 = vsel %vm484, %v1425, %v1429
        %v1433 = vsel %vm484, %v1427, %v1431
        %v1434 = vld [vmem:[%s1 + $0x2e] sm:$0x1]
        %v1435 = vlaneseq
        %v1436 = vshrl.u32 %v1435, 7
        %v1437 = vsub.s32 0, %v1436
        %v1438 = vrot.slane %v1434, %v1437
        %v1439 = vmul.f32 %v1432, %v1438
        %v1440 = vmul.f32 %v1433, %v1438
        %v1441 = vadd.f32 %v1422, %v1439
        %v1442 = vadd.f32 %v1423, %v1440
        %1443 = vrot.lane.b32.xlu0 %v1335, 112
        %v1444 = vpop.permute.xlu0 %1443
        %1445 = vrot.lane.b32.xlu0 %v1340, 112
        %v1446 = vpop.permute.xlu0 %1445
        %1447 = vrot.lane.b32.xlu0 %v1338, 112
        %v1448 = vpop.permute.xlu0 %1447
        %1449 = vrot.lane.b32.xlu0 %v1342, 112
        %v1450 = vpop.permute.xlu0 %1449
        %v1451 = vsel %vm504, %v1444, %v1448
        %v1452 = vsel %vm504, %v1446, %v1450
        %v1453 = vld [vmem:[%s1 + $0x2f] sm:$0x1]
        %v1454 = vlaneseq
        %v1455 = vshrl.u32 %v1454, 7
        %v1456 = vsub.s32 0, %v1455
        %v1457 = vrot.slane %v1453, %v1456
        %v1458 = vmul.f32 %v1451, %v1457
        %v1459 = vmul.f32 %v1452, %v1457
        %v1460 = vadd.f32 %v1441, %v1458
        %v1461 = vadd.f32 %v1442, %v1459
        %1462 = vrot.lane.b32.xlu0 %v1335, 104
        %v1463 = vpop.permute.xlu0 %1462
        %1464 = vrot.lane.b32.xlu0 %v1340, 104
        %v1465 = vpop.permute.xlu0 %1464
        %1466 = vrot.lane.b32.xlu0 %v1338, 104
        %v1467 = vpop.permute.xlu0 %1466
        %1468 = vrot.lane.b32.xlu0 %v1342, 104
        %v1469 = vpop.permute.xlu0 %1468
        %v1470 = vsel %vm524, %v1463, %v1467
        %v1471 = vsel %vm524, %v1465, %v1469
        %v1472 = vld [vmem:[%s1 + $0x30] sm:$0x1]
        %v1473 = vlaneseq
        %v1474 = vshrl.u32 %v1473, 7
        %v1475 = vsub.s32 0, %v1474
        %v1476 = vrot.slane %v1472, %v1475
        %v1477 = vmul.f32 %v1470, %v1476
        %v1478 = vmul.f32 %v1471, %v1476
        %v1479 = vadd.f32 %v1460, %v1477
        %v1480 = vadd.f32 %v1461, %v1478
        %v1481 = vld [vmem:[%s3] sm:$0x1]
        %v1482 = vld [vmem:[%s3 + $0x1] sm:$0x1]
        %v1483 = vadd.f32 %v1479, %v1480
        %v1484 = vrot.slane %v1483, 4
        %v1485 = vadd.f32 %v1483, %v1484
        %v1486 = vrot.slane %v1485, 2
        %v1487 = vadd.f32 %v1485, %v1486
        %v1488 = vrot.slane %v1487, 1
        %v1489 = vadd.f32 %v1487, %v1488
        %v1490 = vrcp.pop 16.0
        %v1491 = vmul.f32 %v1489, %v1490
        %v1492 = vmul.f32 %v1491, %v1481
        %v1493 = vadd.f32 %v1492, %v1482
        %v1494 = vld [vmem:[%s4] sm:$0xff]
        %v1495 = vld [vmem:[%s4 + $0x8] sm:$0xff]
        %v1496 = vld [vmem:[%s4 + $0x10] sm:$0xff]
        %v1497 = vld [vmem:[%s4 + $0x18] sm:$0xff]
        %v1498 = vld [vmem:[%s4 + $0x20] sm:$0xff]
        %v1499 = vld [vmem:[%s4 + $0x28] sm:$0xff]
        %v1500 = vld [vmem:[%s4 + $0x30] sm:$0xff]
        %v1501 = vld [vmem:[%s4 + $0x38] sm:$0xff]
        %v1502 = vld [vmem:[%s4 + $0x40] sm:$0xff]
        %v1503 = vld [vmem:[%s4 + $0x48] sm:$0xff]
        %v1504 = vld [vmem:[%s4 + $0x50] sm:$0xff]
        %v1505 = vld [vmem:[%s4 + $0x58] sm:$0xff]
        %v1506 = vld [vmem:[%s4 + $0x60] sm:$0xff]
        %v1507 = vld [vmem:[%s4 + $0x68] sm:$0xff]
        %v1508 = vld [vmem:[%s4 + $0x70] sm:$0xff]
        %v1509 = vld [vmem:[%s4 + $0x78] sm:$0xff]
        %v1510 = vld [vmem:[%s3 + $0x7] sm:$0x1]
        %1511 = vmatprep.subr.mxu0 0.0
        %1512 = vmatpush1.msra.mxu0 %v1494
        %1513 = vmatprep.subr.mxu0 0.0
        %1514 = vmatpush1.msra.mxu0 %v1495
        %1515 = vmatprep.subr.mxu0 0.0
        %1516 = vmatpush1.msra.mxu0 %v1496
        %1517 = vmatprep.subr.mxu0 0.0
        %1518 = vmatpush1.msra.mxu0 %v1497
        %1519 = vmatprep.subr.mxu0 0.0
        %1520 = vmatpush1.msra.mxu0 %v1498
        %1521 = vmatprep.subr.mxu0 0.0
        %1522 = vmatpush1.msra.mxu0 %v1499
        %1523 = vmatprep.subr.mxu0 0.0
        %1524 = vmatpush1.msra.mxu0 %v1500
        %1525 = vmatprep.subr.mxu0 0.0
        %1526 = vmatpush1.msra.mxu0 %v1501
        %1527 = vmatprep.subr.mxu0 0.0
        %1528 = vmatpush1.msra.mxu0 %v1502
        %1529 = vmatprep.subr.mxu0 0.0
        %1530 = vmatpush1.msra.mxu0 %v1503
        %1531 = vmatprep.subr.mxu0 0.0
        %1532 = vmatpush1.msra.mxu0 %v1504
        %1533 = vmatprep.subr.mxu0 0.0
        %1534 = vmatpush1.msra.mxu0 %v1505
        %1535 = vmatprep.subr.mxu0 0.0
        %1536 = vmatpush1.msra.mxu0 %v1506
        %1537 = vmatprep.subr.mxu0 0.0
        %1538 = vmatpush1.msra.mxu0 %v1507
        %1539 = vmatprep.subr.mxu0 0.0
        %1540 = vmatpush1.msra.mxu0 %v1508
        %1541 = vmatprep.subr.mxu0 0.0
        %1542 = vmatpush1.msra.mxu0 %v1509
        %1543 = vmatprep.subr.mxu0 0.0
        %1544 = vmatpush1.msra.mxu0 0.0
        %1545 = vmatprep.subr.mxu0 0.0
        %1546 = vmatpush1.msra.mxu0 0.0
        %1547 = vmatprep.subr.mxu0 0.0
        %1548 = vmatpush1.msra.mxu0 0.0
        %1549 = vmatprep.subr.mxu0 0.0
        %1550 = vmatpush1.msra.mxu0 0.0
        %1551 = vmatprep.subr.mxu0 0.0
        %1552 = vmatpush1.msra.mxu0 0.0
        %1553 = vmatprep.subr.mxu0 0.0
        %1554 = vmatpush1.msra.mxu0 0.0
        %1555 = vmatprep.subr.mxu0 0.0
        %1556 = vmatpush1.msra.mxu0 0.0
        %1557 = vmatprep.subr.mxu0 0.0
        %1558 = vmatpush1.msra.mxu0 0.0
        %1559 = vmatprep.subr.mxu0 0.0
        %1560 = vmatpush1.msra.mxu0 0.0
        %1561 = vmatprep.subr.mxu0 0.0
        %1562 = vmatpush1.msra.mxu0 0.0
        %1563 = vmatprep.subr.mxu0 0.0
        %1564 = vmatpush1.msra.mxu0 0.0
        %1565 = vmatprep.subr.mxu0 0.0
        %1566 = vmatpush1.msra.mxu0 0.0
        %1567 = vmatprep.subr.mxu0 0.0
        %1568 = vmatpush1.msra.mxu0 0.0
        %1569 = vmatprep.subr.mxu0 0.0
        %1570 = vmatpush1.msra.mxu0 0.0
        %1571 = vmatprep.subr.mxu0 0.0
        %1572 = vmatpush1.msra.mxu0 0.0
        %1573 = vmatprep.subr.mxu0 0.0
        %1574 = vmatpush1.msra.mxu0 0.0
        %1575 = vmatprep.mubr.f32.mxu0 0.0
        %1576 = vmatmul.mubr.f32.gmra.mrb[0].mxu0 %v1493
        %v1577 = vpop.f32.mrb[0].mxu0
        %v1578 = vadd.f32 %v1510, %v1577
        %v1579 = vpop.f32.mrb[0].mxu0
        %1580 = vdwg.mxu0
        %v1581 = vmax.f32 %v1578, 0.0
        %v1582 = vld [vmem:[%s5] sm:$0x3]
        %v1583 = vld [vmem:[%s3 + $0x6] sm:$0x1]
        %vm1584 = vcmask 15360
        %v1586 = vsel %vm1584, %v1581, 0
        %v1589 = vsel %vm1332, %v1582, 0
        %1591 = vmatprep.subr.mxu0 0.0
        %1592 = vmatpush1.msra.mxu0 %v1589
        %1593 = vmatprep.subr.mxu0 0.0
        %1594 = vmatpush1.msra.mxu0 0.0
        %1595 = vmatprep.subr.mxu0 0.0
        %1596 = vmatpush1.msra.mxu0 0.0
        %1597 = vmatprep.subr.mxu0 0.0
        %1598 = vmatpush1.msra.mxu0 0.0
        %1599 = vmatprep.subr.mxu0 0.0
        %1600 = vmatpush1.msra.mxu0 0.0
        %1601 = vmatprep.subr.mxu0 0.0
        %1602 = vmatpush1.msra.mxu0 0.0
        %1603 = vmatprep.subr.mxu0 0.0
        %1604 = vmatpush1.msra.mxu0 0.0
        %1605 = vmatprep.subr.mxu0 0.0
        %1606 = vmatpush1.msra.mxu0 0.0
        %1607 = vmatprep.subr.mxu0 0.0
        %1608 = vmatpush1.msra.mxu0 0.0
        %1609 = vmatprep.subr.mxu0 0.0
        %1610 = vmatpush1.msra.mxu0 0.0
        %1611 = vmatprep.subr.mxu0 0.0
        %1612 = vmatpush1.msra.mxu0 0.0
        %1613 = vmatprep.subr.mxu0 0.0
        %1614 = vmatpush1.msra.mxu0 0.0
        %1615 = vmatprep.subr.mxu0 0.0
        %1616 = vmatpush1.msra.mxu0 0.0
        %1617 = vmatprep.subr.mxu0 0.0
        %1618 = vmatpush1.msra.mxu0 0.0
        %1619 = vmatprep.subr.mxu0 0.0
        %1620 = vmatpush1.msra.mxu0 0.0
        %1621 = vmatprep.subr.mxu0 0.0
        %1622 = vmatpush1.msra.mxu0 0.0
        %1623 = vmatprep.subr.mxu0 0.0
        %1624 = vmatpush1.msra.mxu0 0.0
        %1625 = vmatprep.subr.mxu0 0.0
        %1626 = vmatpush1.msra.mxu0 0.0
        %1627 = vmatprep.subr.mxu0 0.0
        %1628 = vmatpush1.msra.mxu0 0.0
        %1629 = vmatprep.subr.mxu0 0.0
        %1630 = vmatpush1.msra.mxu0 0.0
        %1631 = vmatprep.subr.mxu0 0.0
        %1632 = vmatpush1.msra.mxu0 0.0
        %1633 = vmatprep.subr.mxu0 0.0
        %1634 = vmatpush1.msra.mxu0 0.0
        %1635 = vmatprep.subr.mxu0 0.0
        %1636 = vmatpush1.msra.mxu0 0.0
        %1637 = vmatprep.subr.mxu0 0.0
        %1638 = vmatpush1.msra.mxu0 0.0
        %1639 = vmatprep.subr.mxu0 0.0
        %1640 = vmatpush1.msra.mxu0 0.0
        %1641 = vmatprep.subr.mxu0 0.0
        %1642 = vmatpush1.msra.mxu0 0.0
        %1643 = vmatprep.subr.mxu0 0.0
        %1644 = vmatpush1.msra.mxu0 0.0
        %1645 = vmatprep.subr.mxu0 0.0
        %1646 = vmatpush1.msra.mxu0 0.0
        %1647 = vmatprep.subr.mxu0 0.0
        %1648 = vmatpush1.msra.mxu0 0.0
        %1649 = vmatprep.subr.mxu0 0.0
        %1650 = vmatpush1.msra.mxu0 0.0
        %1651 = vmatprep.subr.mxu0 0.0
        %1652 = vmatpush1.msra.mxu0 0.0
        %1653 = vmatprep.subr.mxu0 0.0
        %1654 = vmatpush1.msra.mxu0 0.0
        %1655 = vmatprep.mubr.f32.mxu0 0.0
        %1656 = vmatmul.mubr.f32.gmra.mrb[0].mxu0 %v1586
        %v1657 = vpop.f32.mrb[0].mxu0
        %v1658 = vadd.f32 %v1583, %v1657
        %v1659 = vpop.f32.mrb[0].mxu0
        %1660 = vdwg.mxu0
        %v1661 = vxor.u32 %v1658, 2147483648
        %v1662 = vmul.f32 %v1661, 1.442695
        %v1663 = vpow.pop %v1662
        %v1664 = vadd.f32 %v1663, 1.0
        %v1665 = vrcp.pop %v1664
        %v1666 = vmul.f32 1.0, %v1665
        %v1667 = vmul.f32 %v1481, %v1666
        %v1668 = vlaneseq
        %v1669 = vshrl.u32 %v1668, 7
        %v1670 = vsub.s32 0, %v1669
        %v1671 = vrot.slane %v1667, %v1670
        %v1672 = vmul.f32 %v1479, %v1671
        %v1673 = vmul.f32 %v1480, %v1671
        %v1674 = vmul.f32 %v1482, %v1666
        %v1675 = vlaneseq
        %v1676 = vshrl.u32 %v1675, 7
        %v1677 = vsub.s32 0, %v1676
        %v1678 = vrot.slane %v1674, %v1677
        %v1679 = vadd.f32 %v1672, %v1678
        %v1680 = vadd.f32 %v1673, %v1678
        %v1681 = vpack.c.bf16 %v1680, %v1679
        %v1682 = vld [vmem:[#allocation6] sm:$0xff]
        %v1683 = vld [vmem:[#allocation6 + $0x8] sm:$0xff]
        %v1684 = vld [vmem:[#allocation6 + $0x10] sm:$0xff]
        %v1685 = vld [vmem:[#allocation6 + $0x18] sm:$0xff]
        %v1686 = vld [vmem:[#allocation6 + $0x20] sm:$0xff]
        %v1687 = vld [vmem:[#allocation6 + $0x28] sm:$0xff]
        %v1688 = vld [vmem:[#allocation6 + $0x30] sm:$0xff]
        %v1689 = vld [vmem:[#allocation6 + $0x38] sm:$0xff]
        %v1690 = vld [vmem:[#allocation6 + $0x40] sm:$0xff]
        %v1691 = vld [vmem:[#allocation6 + $0x48] sm:$0xff]
        %v1692 = vld [vmem:[#allocation6 + $0x50] sm:$0xff]
        %v1693 = vld [vmem:[#allocation6 + $0x58] sm:$0xff]
        %v1694 = vld [vmem:[#allocation6 + $0x60] sm:$0xff]
        %v1695 = vld [vmem:[#allocation6 + $0x68] sm:$0xff]
        %v1696 = vld [vmem:[#allocation6 + $0x70] sm:$0xff]
        %v1697 = vld [vmem:[#allocation6 + $0x78] sm:$0xff]
        %v1698 = vld [vmem:[#allocation6 + $0x80] sm:$0xff]
        %v1699 = vld [vmem:[#allocation6 + $0x88] sm:$0xff]
        %v1700 = vld [vmem:[#allocation6 + $0x90] sm:$0xff]
        %v1701 = vld [vmem:[#allocation6 + $0x98] sm:$0xff]
        %v1702 = vld [vmem:[#allocation6 + $0xa0] sm:$0xff]
        %v1703 = vld [vmem:[#allocation6 + $0xa8] sm:$0xff]
        %v1704 = vld [vmem:[#allocation6 + $0xb0] sm:$0xff]
        %v1705 = vld [vmem:[#allocation6 + $0xb8] sm:$0xff]
        %v1706 = vld [vmem:[#allocation6 + $0xc0] sm:$0xff]
        %v1707 = vld [vmem:[#allocation6 + $0xc8] sm:$0xff]
        %v1708 = vld [vmem:[#allocation6 + $0xd0] sm:$0xff]
        %v1709 = vld [vmem:[#allocation6 + $0xd8] sm:$0xff]
        %v1710 = vld [vmem:[#allocation6 + $0xe0] sm:$0xff]
        %v1711 = vld [vmem:[#allocation6 + $0xe8] sm:$0xff]
        %v1712 = vld [vmem:[#allocation6 + $0xf0] sm:$0xff]
        %v1713 = vld [vmem:[#allocation6 + $0xf8] sm:$0xff]
        %v1714 = vld [vmem:[#allocation6 + $0x100] sm:$0xff]
        %v1715 = vld [vmem:[#allocation6 + $0x108] sm:$0xff]
        %v1716 = vld [vmem:[#allocation6 + $0x110] sm:$0xff]
        %v1717 = vld [vmem:[#allocation6 + $0x118] sm:$0xff]
        %v1718 = vld [vmem:[#allocation6 + $0x120] sm:$0xff]
        %v1719 = vld [vmem:[#allocation6 + $0x128] sm:$0xff]
        %v1720 = vld [vmem:[#allocation6 + $0x130] sm:$0xff]
        %v1721 = vld [vmem:[#allocation6 + $0x138] sm:$0xff]
        %v1722 = vld [vmem:[#allocation6 + $0x140] sm:$0xff]
        %v1723 = vld [vmem:[#allocation6 + $0x148] sm:$0xff]
        %v1724 = vld [vmem:[#allocation6 + $0x150] sm:$0xff]
        %v1725 = vld [vmem:[#allocation6 + $0x158] sm:$0xff]
        %v1726 = vld [vmem:[#allocation6 + $0x160] sm:$0xff]
        %v1727 = vld [vmem:[#allocation6 + $0x168] sm:$0xff]
        %v1728 = vld [vmem:[#allocation6 + $0x170] sm:$0xff]
        %v1729 = vld [vmem:[#allocation6 + $0x178] sm:$0xff]
        %v1730 = vld [vmem:[%s7] sm:$0x3f]
        %v1732 = vlaneseq
        %v1733 = vshrl.u32 %v1732, 7
        %v1734 = vsub.s32 0, %v1733
        %v1735 = vrot.slane %v1730, %v1734
        %v1736 = vlaneseq
        %v1737 = vshrl.u32 %v1736, 7
        %v1738 = vsub.s32 1, %v1737
        %v1739 = vrot.slane %v1730, %v1738
        %v1740 = vlaneseq
        %v1741 = vshrl.u32 %v1740, 7
        %v1742 = vsub.s32 2, %v1741
        %v1743 = vrot.slane %v1730, %v1742
        %v1744 = vlaneseq
        %v1745 = vshrl.u32 %v1744, 7
        %v1746 = vsub.s32 3, %v1745
        %v1747 = vrot.slane %v1730, %v1746
        %v1748 = vlaneseq
        %v1749 = vshrl.u32 %v1748, 7
        %v1750 = vsub.s32 4, %v1749
        %v1751 = vrot.slane %v1730, %v1750
        %v1752 = vlaneseq
        %v1753 = vshrl.u32 %v1752, 7
        %v1754 = vsub.s32 5, %v1753
        %v1755 = vrot.slane %v1730, %v1754
        %v1810 = vunpack.c.l.b16 %v1682
        %v1811 = vunpack.c.h.b16 %v1682
        %v1812 = vunpack.c.l.b16 %v1683
        %v1813 = vunpack.c.h.b16 %v1683
        %v1814 = vunpack.c.l.b16 %v1684
        %v1815 = vunpack.c.h.b16 %v1684
        %v1816 = vunpack.c.l.b16 %v1685
        %v1817 = vunpack.c.h.b16 %v1685
        %v1818 = vunpack.c.l.b16 %v1686
        %v1819 = vunpack.c.h.b16 %v1686
        %v1820 = vunpack.c.l.b16 %v1687
        %v1821 = vunpack.c.h.b16 %v1687
        %v1822 = vunpack.c.l.b16 %v1688
        %v1823 = vunpack.c.h.b16 %v1688
        %v1824 = vunpack.c.l.b16 %v1689
        %v1825 = vunpack.c.h.b16 %v1689
        %v1826 = vunpack.c.l.b16 %v1690
        %v1827 = vunpack.c.h.b16 %v1690
        %v1828 = vunpack.c.l.b16 %v1691
        %v1829 = vunpack.c.h.b16 %v1691
        %v1830 = vunpack.c.l.b16 %v1692
        %v1831 = vunpack.c.h.b16 %v1692
        %v1832 = vunpack.c.l.b16 %v1693
        %v1833 = vunpack.c.h.b16 %v1693
        %v1834 = vunpack.c.l.b16 %v1694
        %v1835 = vunpack.c.h.b16 %v1694
        %v1836 = vunpack.c.l.b16 %v1695
        %v1837 = vunpack.c.h.b16 %v1695
        %v1838 = vunpack.c.l.b16 %v1696
        %v1839 = vunpack.c.h.b16 %v1696
        %v1840 = vunpack.c.l.b16 %v1697
        %v1841 = vunpack.c.h.b16 %v1697
        %v1842 = vunpack.c.l.b16 %v1698
        %v1843 = vunpack.c.h.b16 %v1698
        %v1844 = vunpack.c.l.b16 %v1699
        %v1845 = vunpack.c.h.b16 %v1699
        %v1846 = vunpack.c.l.b16 %v1700
        %v1847 = vunpack.c.h.b16 %v1700
        %v1848 = vunpack.c.l.b16 %v1701
        %v1849 = vunpack.c.h.b16 %v1701
        %v1850 = vunpack.c.l.b16 %v1702
        %v1851 = vunpack.c.h.b16 %v1702
        %v1852 = vunpack.c.l.b16 %v1703
        %v1853 = vunpack.c.h.b16 %v1703
        %v1854 = vunpack.c.l.b16 %v1704
        %v1855 = vunpack.c.h.b16 %v1704
        %v1856 = vunpack.c.l.b16 %v1705
        %v1857 = vunpack.c.h.b16 %v1705
        %v1858 = vunpack.c.l.b16 %v1706
        %v1859 = vunpack.c.h.b16 %v1706
        %v1860 = vunpack.c.l.b16 %v1707
        %v1861 = vunpack.c.h.b16 %v1707
        %v1862 = vunpack.c.l.b16 %v1708
        %v1863 = vunpack.c.h.b16 %v1708
        %v1864 = vunpack.c.l.b16 %v1709
        %v1865 = vunpack.c.h.b16 %v1709
        %v1866 = vunpack.c.l.b16 %v1710
        %v1867 = vunpack.c.h.b16 %v1710
        %v1868 = vunpack.c.l.b16 %v1711
        %v1869 = vunpack.c.h.b16 %v1711
        %v1870 = vunpack.c.l.b16 %v1712
        %v1871 = vunpack.c.h.b16 %v1712
        %v1872 = vunpack.c.l.b16 %v1713
        %v1873 = vunpack.c.h.b16 %v1713
        %v1874 = vunpack.c.l.b16 %v1714
        %v1875 = vunpack.c.h.b16 %v1714
        %v1876 = vunpack.c.l.b16 %v1715
        %v1877 = vunpack.c.h.b16 %v1715
        %v1878 = vunpack.c.l.b16 %v1716
        %v1879 = vunpack.c.h.b16 %v1716
        %v1880 = vunpack.c.l.b16 %v1717
        %v1881 = vunpack.c.h.b16 %v1717
        %v1882 = vunpack.c.l.b16 %v1718
        %v1883 = vunpack.c.h.b16 %v1718
        %v1884 = vunpack.c.l.b16 %v1719
        %v1885 = vunpack.c.h.b16 %v1719
        %v1886 = vunpack.c.l.b16 %v1720
        %v1887 = vunpack.c.h.b16 %v1720
        %v1888 = vunpack.c.l.b16 %v1721
        %v1889 = vunpack.c.h.b16 %v1721
        %v1890 = vunpack.c.l.b16 %v1722
        %v1891 = vunpack.c.h.b16 %v1722
        %v1892 = vunpack.c.l.b16 %v1723
        %v1893 = vunpack.c.h.b16 %v1723
        %v1894 = vunpack.c.l.b16 %v1724
        %v1895 = vunpack.c.h.b16 %v1724
        %v1896 = vunpack.c.l.b16 %v1725
        %v1897 = vunpack.c.h.b16 %v1725
        %v1898 = vunpack.c.l.b16 %v1726
        %v1899 = vunpack.c.h.b16 %v1726
        %v1900 = vunpack.c.l.b16 %v1727
        %v1901 = vunpack.c.h.b16 %v1727
        %v1902 = vunpack.c.l.b16 %v1728
        %v1903 = vunpack.c.h.b16 %v1728
        %v1904 = vunpack.c.l.b16 %v1729
        %v1905 = vunpack.c.h.b16 %v1729
        %v1906 = vpack.c.b16 %v1816, %v1810
        %v1907 = vpack.c.b16 %v1817, %v1811
        %v1908 = vpack.c.b16 %v1818, %v1812
        %v1909 = vpack.c.b16 %v1819, %v1813
        %v1910 = vpack.c.b16 %v1820, %v1814
        %v1911 = vpack.c.b16 %v1821, %v1815
        %v1912 = vpack.c.b16 %v1828, %v1822
        %v1913 = vpack.c.b16 %v1829, %v1823
        %v1914 = vpack.c.b16 %v1830, %v1824
        %v1915 = vpack.c.b16 %v1831, %v1825
        %v1916 = vpack.c.b16 %v1832, %v1826
        %v1917 = vpack.c.b16 %v1833, %v1827
        %v1918 = vpack.c.b16 %v1840, %v1834
        %v1919 = vpack.c.b16 %v1841, %v1835
        %v1920 = vpack.c.b16 %v1842, %v1836
        %v1921 = vpack.c.b16 %v1843, %v1837
        %v1922 = vpack.c.b16 %v1844, %v1838
        %v1923 = vpack.c.b16 %v1845, %v1839
        %v1924 = vpack.c.b16 %v1852, %v1846
        %v1925 = vpack.c.b16 %v1853, %v1847
        %v1926 = vpack.c.b16 %v1854, %v1848
        %v1927 = vpack.c.b16 %v1855, %v1849
        %v1928 = vpack.c.b16 %v1856, %v1850
        %v1929 = vpack.c.b16 %v1857, %v1851
        %v1930 = vpack.c.b16 %v1864, %v1858
        %v1931 = vpack.c.b16 %v1865, %v1859
        %v1932 = vpack.c.b16 %v1866, %v1860
        %v1933 = vpack.c.b16 %v1867, %v1861
        %v1934 = vpack.c.b16 %v1868, %v1862
        %v1935 = vpack.c.b16 %v1869, %v1863
        %v1936 = vpack.c.b16 %v1876, %v1870
        %v1937 = vpack.c.b16 %v1877, %v1871
        %v1938 = vpack.c.b16 %v1878, %v1872
        %v1939 = vpack.c.b16 %v1879, %v1873
        %v1940 = vpack.c.b16 %v1880, %v1874
        %v1941 = vpack.c.b16 %v1881, %v1875
        %v1942 = vpack.c.b16 %v1888, %v1882
        %v1943 = vpack.c.b16 %v1889, %v1883
        %v1944 = vpack.c.b16 %v1890, %v1884
        %v1945 = vpack.c.b16 %v1891, %v1885
        %v1946 = vpack.c.b16 %v1892, %v1886
        %v1947 = vpack.c.b16 %v1893, %v1887
        %v1948 = vpack.c.b16 %v1900, %v1894
        %v1949 = vpack.c.b16 %v1901, %v1895
        %v1950 = vpack.c.b16 %v1902, %v1896
        %v1951 = vpack.c.b16 %v1903, %v1897
        %v1952 = vpack.c.b16 %v1904, %v1898
        %v1953 = vpack.c.b16 %v1905, %v1899
        %2002 = vmatprep.subr.bf16.mxu0 %v1907
        %2003 = vmatpush1.bf16.msra.mxu0 %v1906
        %2004 = vmatprep.subr.bf16.mxu0 %v1913
        %2005 = vmatpush1.bf16.msra.mxu0 %v1912
        %2006 = vmatprep.subr.bf16.mxu0 %v1919
        %2007 = vmatpush1.bf16.msra.mxu0 %v1918
        %2008 = vmatprep.subr.bf16.mxu0 %v1925
        %2009 = vmatpush1.bf16.msra.mxu0 %v1924
        %2010 = vmatprep.subr.bf16.mxu0 %v1931
        %2011 = vmatpush1.bf16.msra.mxu0 %v1930
        %2012 = vmatprep.subr.bf16.mxu0 %v1937
        %2013 = vmatpush1.bf16.msra.mxu0 %v1936
        %2014 = vmatprep.subr.bf16.mxu0 %v1943
        %2015 = vmatpush1.bf16.msra.mxu0 %v1942
        %2016 = vmatprep.subr.bf16.mxu0 %v1949
        %2017 = vmatpush1.bf16.msra.mxu0 %v1948
        %2018 = vmatprep.subr.bf16.mxu0 0
        %2019 = vmatpush1.bf16.msra.mxu0 0
        %2020 = vmatprep.subr.bf16.mxu0 0
        %2021 = vmatpush1.bf16.msra.mxu0 0
        %2022 = vmatprep.subr.bf16.mxu0 0
        %2023 = vmatpush1.bf16.msra.mxu0 0
        %2024 = vmatprep.subr.bf16.mxu0 0
        %2025 = vmatpush1.bf16.msra.mxu0 0
        %2026 = vmatprep.subr.bf16.mxu0 0
        %2027 = vmatpush1.bf16.msra.mxu0 0
        %2028 = vmatprep.subr.bf16.mxu0 0
        %2029 = vmatpush1.bf16.msra.mxu0 0
        %2030 = vmatprep.subr.bf16.mxu0 0
        %2031 = vmatpush1.bf16.msra.mxu0 0
        %2032 = vmatprep.subr.bf16.mxu0 0
        %2033 = vmatpush1.bf16.msra.mxu0 0
        %2034 = vmatprep.mubr.bf16.mxu0 0
        %2035 = vmatmul.mubr.bf16.gmra.mrb[0].mxu0 %v1681
        %v2036 = vpop.f32.mrb[0].mxu0
        %v2037 = vadd.f32 %v1735, %v2036
        %v2038 = vpop.f32.mrb[0].mxu0
        %v2039 = vadd.f32 %v1739, %v2038
        %v2040 = vpop.f32.mrb[0].mxu0
        %v2041 = vadd.f32 %v1735, %v2040
        %v2042 = vpop.f32.mrb[0].mxu0
        %v2043 = vadd.f32 %v1739, %v2042
        %2044 = vdwg.mxu0
        %2045 = vmatprep.subr.bf16.mxu0 %v1909
        %2046 = vmatpush1.bf16.msra.mxu0 %v1908
        %2047 = vmatprep.subr.bf16.mxu0 %v1915
        %2048 = vmatpush1.bf16.msra.mxu0 %v1914
        %2049 = vmatprep.subr.bf16.mxu0 %v1921
        %2050 = vmatpush1.bf16.msra.mxu0 %v1920
        %2051 = vmatprep.subr.bf16.mxu0 %v1927
        %2052 = vmatpush1.bf16.msra.mxu0 %v1926
        %2053 = vmatprep.subr.bf16.mxu0 %v1933
        %2054 = vmatpush1.bf16.msra.mxu0 %v1932
        %2055 = vmatprep.subr.bf16.mxu0 %v1939
        %2056 = vmatpush1.bf16.msra.mxu0 %v1938
        %2057 = vmatprep.subr.bf16.mxu0 %v1945
        %2058 = vmatpush1.bf16.msra.mxu0 %v1944
        %2059 = vmatprep.subr.bf16.mxu0 %v1951
        %2060 = vmatpush1.bf16.msra.mxu0 %v1950
        %2061 = vmatprep.subr.bf16.mxu0 0
        %2062 = vmatpush1.bf16.msra.mxu0 0
        %2063 = vmatprep.subr.bf16.mxu0 0
        %2064 = vmatpush1.bf16.msra.mxu0 0
        %2065 = vmatprep.subr.bf16.mxu0 0
        %2066 = vmatpush1.bf16.msra.mxu0 0
        %2067 = vmatprep.subr.bf16.mxu0 0
        %2068 = vmatpush1.bf16.msra.mxu0 0
        %2069 = vmatprep.subr.bf16.mxu0 0
        %2070 = vmatpush1.bf16.msra.mxu0 0
        %2071 = vmatprep.subr.bf16.mxu0 0
        %2072 = vmatpush1.bf16.msra.mxu0 0
        %2073 = vmatprep.subr.bf16.mxu0 0
        %2074 = vmatpush1.bf16.msra.mxu0 0
        %2075 = vmatprep.subr.bf16.mxu0 0
        %2076 = vmatpush1.bf16.msra.mxu0 0
        %2077 = vmatprep.mubr.bf16.mxu0 0
        %2078 = vmatmul.mubr.bf16.gmra.mrb[0].mxu0 %v1681
        %v2079 = vpop.f32.mrb[0].mxu0
        %v2080 = vadd.f32 %v1743, %v2079
        %v2081 = vpop.f32.mrb[0].mxu0
        %v2082 = vadd.f32 %v1747, %v2081
        %v2083 = vpop.f32.mrb[0].mxu0
        %v2084 = vadd.f32 %v1743, %v2083
        %v2085 = vpop.f32.mrb[0].mxu0
        %v2086 = vadd.f32 %v1747, %v2085
        %2087 = vdwg.mxu0
        %2088 = vmatprep.subr.bf16.mxu0 %v1911
        %2089 = vmatpush1.bf16.msra.mxu0 %v1910
        %2090 = vmatprep.subr.bf16.mxu0 %v1917
        %2091 = vmatpush1.bf16.msra.mxu0 %v1916
        %2092 = vmatprep.subr.bf16.mxu0 %v1923
        %2093 = vmatpush1.bf16.msra.mxu0 %v1922
        %2094 = vmatprep.subr.bf16.mxu0 %v1929
        %2095 = vmatpush1.bf16.msra.mxu0 %v1928
        %2096 = vmatprep.subr.bf16.mxu0 %v1935
        %2097 = vmatpush1.bf16.msra.mxu0 %v1934
        %2098 = vmatprep.subr.bf16.mxu0 %v1941
        %2099 = vmatpush1.bf16.msra.mxu0 %v1940
        %2100 = vmatprep.subr.bf16.mxu0 %v1947
        %2101 = vmatpush1.bf16.msra.mxu0 %v1946
        %2102 = vmatprep.subr.bf16.mxu0 %v1953
        %2103 = vmatpush1.bf16.msra.mxu0 %v1952
        %2104 = vmatprep.subr.bf16.mxu0 0
        %2105 = vmatpush1.bf16.msra.mxu0 0
        %2106 = vmatprep.subr.bf16.mxu0 0
        %2107 = vmatpush1.bf16.msra.mxu0 0
        %2108 = vmatprep.subr.bf16.mxu0 0
        %2109 = vmatpush1.bf16.msra.mxu0 0
        %2110 = vmatprep.subr.bf16.mxu0 0
        %2111 = vmatpush1.bf16.msra.mxu0 0
        %2112 = vmatprep.subr.bf16.mxu0 0
        %2113 = vmatpush1.bf16.msra.mxu0 0
        %2114 = vmatprep.subr.bf16.mxu0 0
        %2115 = vmatpush1.bf16.msra.mxu0 0
        %2116 = vmatprep.subr.bf16.mxu0 0
        %2117 = vmatpush1.bf16.msra.mxu0 0
        %2118 = vmatprep.subr.bf16.mxu0 0
        %2119 = vmatpush1.bf16.msra.mxu0 0
        %2120 = vmatprep.mubr.bf16.mxu0 0
        %2121 = vmatmul.mubr.bf16.gmra.mrb[0].mxu0 %v1681
        %v2122 = vpop.f32.mrb[0].mxu0
        %v2123 = vadd.f32 %v1751, %v2122
        %v2124 = vpop.f32.mrb[0].mxu0
        %v2125 = vadd.f32 %v1755, %v2124
        %v2126 = vpop.f32.mrb[0].mxu0
        %v2127 = vadd.f32 %v1751, %v2126
        %v2128 = vpop.f32.mrb[0].mxu0
        %v2129 = vadd.f32 %v1755, %v2128
        %2130 = vdwg.mxu0
        %v2131 = vmax.f32 %v2037, 0.0
        %v2132 = vmax.f32 %v2039, 0.0
        %v2133 = vmax.f32 %v2080, 0.0
        %v2134 = vmax.f32 %v2041, 0.0
        %v2135 = vmax.f32 %v2043, 0.0
        %v2136 = vmax.f32 %v2084, 0.0
        %v2137 = vmin.f32 %v2131, 6.0
        %v2138 = vmin.f32 %v2132, 6.0
        %v2139 = vmin.f32 %v2133, 6.0
        %v2140 = vmin.f32 %v2134, 6.0
        %v2141 = vmin.f32 %v2135, 6.0
        %v2142 = vmin.f32 %v2136, 6.0
        %v2143 = vmul.f32 %v2137, %v2082
        %v2144 = vmul.f32 %v2138, %v2123
        %v2145 = vmul.f32 %v2139, %v2125
        %v2146 = vmul.f32 %v2140, %v2086
        %v2147 = vmul.f32 %v2141, %v2127
        %v2148 = vmul.f32 %v2142, %v2129
        %v2149 = vpack.c.bf16 %v2146, %v2143
        %v2150 = vpack.c.bf16 %v2147, %v2144
        %v2151 = vpack.c.bf16 %v2148, %v2145
        %v2152 = vld [vmem:[#allocation8] sm:$0xf]
        %v2153 = vld [vmem:[#allocation8 + $0x4] sm:$0xf]
        %v2154 = vld [vmem:[#allocation8 + $0x8] sm:$0xf]
        %v2155 = vld [vmem:[#allocation8 + $0xc] sm:$0xf]
        %v2156 = vld [vmem:[#allocation8 + $0x10] sm:$0xf]
        %v2157 = vld [vmem:[#allocation8 + $0x14] sm:$0xf]
        %v2158 = vld [vmem:[#allocation8 + $0x18] sm:$0xf]
        %v2159 = vld [vmem:[#allocation8 + $0x1c] sm:$0xf]
        %v2160 = vld [vmem:[#allocation8 + $0x20] sm:$0xf]
        %v2161 = vld [vmem:[#allocation8 + $0x24] sm:$0xf]
        %v2162 = vld [vmem:[#allocation8 + $0x28] sm:$0xf]
        %v2163 = vld [vmem:[#allocation8 + $0x2c] sm:$0xf]
        %v2164 = vld [vmem:[#allocation8 + $0x30] sm:$0xf]
        %v2165 = vld [vmem:[#allocation8 + $0x34] sm:$0xf]
        %v2166 = vld [vmem:[#allocation8 + $0x38] sm:$0xf]
        %v2167 = vld [vmem:[#allocation8 + $0x3c] sm:$0xf]
        %v2168 = vld [vmem:[#allocation8 + $0x40] sm:$0xf]
        %v2169 = vld [vmem:[#allocation8 + $0x44] sm:$0xf]
        %v2170 = vld [vmem:[#allocation8 + $0x48] sm:$0xf]
        %v2171 = vld [vmem:[#allocation8 + $0x4c] sm:$0xf]
        %v2172 = vld [vmem:[#allocation8 + $0x50] sm:$0xf]
        %v2173 = vld [vmem:[#allocation8 + $0x54] sm:$0xf]
        %v2174 = vld [vmem:[#allocation8 + $0x58] sm:$0xf]
        %v2175 = vld [vmem:[#allocation8 + $0x5c] sm:$0xf]
        %v2176 = vld [vmem:[#allocation8 + $0x60] sm:$0xf]
        %v2177 = vld [vmem:[#allocation8 + $0x64] sm:$0xf]
        %v2178 = vld [vmem:[#allocation8 + $0x68] sm:$0xf]
        %v2179 = vld [vmem:[#allocation8 + $0x6c] sm:$0xf]
        %v2180 = vld [vmem:[#allocation8 + $0x70] sm:$0xf]
        %v2181 = vld [vmem:[#allocation8 + $0x74] sm:$0xf]
        %v2182 = vld [vmem:[#allocation8 + $0x78] sm:$0xf]
        %v2183 = vld [vmem:[#allocation8 + $0x7c] sm:$0xf]
        %v2184 = vld [vmem:[#allocation8 + $0x80] sm:$0xf]
        %v2185 = vld [vmem:[#allocation8 + $0x84] sm:$0xf]
        %v2186 = vld [vmem:[#allocation8 + $0x88] sm:$0xf]
        %v2187 = vld [vmem:[#allocation8 + $0x8c] sm:$0xf]
        %v2188 = vld [vmem:[#allocation8 + $0x90] sm:$0xf]
        %v2189 = vld [vmem:[#allocation8 + $0x94] sm:$0xf]
        %v2190 = vld [vmem:[#allocation8 + $0x98] sm:$0xf]
        %v2191 = vld [vmem:[#allocation8 + $0x9c] sm:$0xf]
        %v2192 = vld [vmem:[#allocation8 + $0xa0] sm:$0xf]
        %v2193 = vld [vmem:[#allocation8 + $0xa4] sm:$0xf]
        %v2194 = vld [vmem:[#allocation8 + $0xa8] sm:$0xf]
        %v2195 = vld [vmem:[#allocation8 + $0xac] sm:$0xf]
        %v2196 = vld [vmem:[#allocation8 + $0xb0] sm:$0xf]
        %v2197 = vld [vmem:[#allocation8 + $0xb4] sm:$0xf]
        %v2198 = vld [vmem:[#allocation8 + $0xb8] sm:$0xf]
        %v2199 = vld [vmem:[#allocation8 + $0xbc] sm:$0xf]
        %v2248 = vunpack.c.l.b16 %v2152
        %v2249 = vunpack.c.l.b16 %v2153
        %v2250 = vunpack.c.l.b16 %v2154
        %v2251 = vunpack.c.l.b16 %v2155
        %v2252 = vunpack.c.l.b16 %v2156
        %v2253 = vunpack.c.l.b16 %v2157
        %v2254 = vunpack.c.l.b16 %v2158
        %v2255 = vunpack.c.l.b16 %v2159
        %v2256 = vunpack.c.l.b16 %v2160
        %v2257 = vunpack.c.l.b16 %v2161
        %v2258 = vunpack.c.l.b16 %v2162
        %v2259 = vunpack.c.l.b16 %v2163
        %v2260 = vunpack.c.l.b16 %v2164
        %v2261 = vunpack.c.l.b16 %v2165
        %v2262 = vunpack.c.l.b16 %v2166
        %v2263 = vunpack.c.l.b16 %v2167
        %v2264 = vunpack.c.l.b16 %v2168
        %v2265 = vunpack.c.l.b16 %v2169
        %v2266 = vunpack.c.l.b16 %v2170
        %v2267 = vunpack.c.l.b16 %v2171
        %v2268 = vunpack.c.l.b16 %v2172
        %v2269 = vunpack.c.l.b16 %v2173
        %v2270 = vunpack.c.l.b16 %v2174
        %v2271 = vunpack.c.l.b16 %v2175
        %v2272 = vunpack.c.l.b16 %v2176
        %v2273 = vunpack.c.l.b16 %v2177
        %v2274 = vunpack.c.l.b16 %v2178
        %v2275 = vunpack.c.l.b16 %v2179
        %v2276 = vunpack.c.l.b16 %v2180
        %v2277 = vunpack.c.l.b16 %v2181
        %v2278 = vunpack.c.l.b16 %v2182
        %v2279 = vunpack.c.l.b16 %v2183
        %v2280 = vunpack.c.l.b16 %v2184
        %v2281 = vunpack.c.l.b16 %v2185
        %v2282 = vunpack.c.l.b16 %v2186
        %v2283 = vunpack.c.l.b16 %v2187
        %v2284 = vunpack.c.l.b16 %v2188
        %v2285 = vunpack.c.l.b16 %v2189
        %v2286 = vunpack.c.l.b16 %v2190
        %v2287 = vunpack.c.l.b16 %v2191
        %v2288 = vunpack.c.l.b16 %v2192
        %v2289 = vunpack.c.l.b16 %v2193
        %v2290 = vunpack.c.l.b16 %v2194
        %v2291 = vunpack.c.l.b16 %v2195
        %v2292 = vunpack.c.l.b16 %v2196
        %v2293 = vunpack.c.l.b16 %v2197
        %v2294 = vunpack.c.l.b16 %v2198
        %v2295 = vunpack.c.l.b16 %v2199
        %v2296 = vpack.c.b16 %v2249, %v2248
        %v2297 = vpack.c.b16 %v2251, %v2250
        %v2298 = vpack.c.b16 %v2253, %v2252
        %v2299 = vpack.c.b16 %v2255, %v2254
        %v2300 = vpack.c.b16 %v2257, %v2256
        %v2301 = vpack.c.b16 %v2259, %v2258
        %v2302 = vpack.c.b16 %v2261, %v2260
        %v2303 = vpack.c.b16 %v2263, %v2262
        %v2304 = vpack.c.b16 %v2265, %v2264
        %v2305 = vpack.c.b16 %v2267, %v2266
        %v2306 = vpack.c.b16 %v2269, %v2268
        %v2307 = vpack.c.b16 %v2271, %v2270
        %v2308 = vpack.c.b16 %v2273, %v2272
        %v2309 = vpack.c.b16 %v2275, %v2274
        %v2310 = vpack.c.b16 %v2277, %v2276
        %v2311 = vpack.c.b16 %v2279, %v2278
        %v2312 = vpack.c.b16 %v2281, %v2280
        %v2313 = vpack.c.b16 %v2283, %v2282
        %v2314 = vpack.c.b16 %v2285, %v2284
        %v2315 = vpack.c.b16 %v2287, %v2286
        %v2316 = vpack.c.b16 %v2289, %v2288
        %v2317 = vpack.c.b16 %v2291, %v2290
        %v2318 = vpack.c.b16 %v2293, %v2292
        %v2319 = vpack.c.b16 %v2295, %v2294
        %2344 = vmatprep.subr.bf16.mxu0 0
        %2345 = vmatpush1.bf16.msra.mxu0 %v2296
        %2346 = vmatprep.subr.bf16.mxu0 0
        %2347 = vmatpush1.bf16.msra.mxu0 %v2297
        %2348 = vmatprep.subr.bf16.mxu0 0
        %2349 = vmatpush1.bf16.msra.mxu0 %v2298
        %2350 = vmatprep.subr.bf16.mxu0 0
        %2351 = vmatpush1.bf16.msra.mxu0 %v2299
        %2352 = vmatprep.subr.bf16.mxu0 0
        %2353 = vmatpush1.bf16.msra.mxu0 %v2300
        %2354 = vmatprep.subr.bf16.mxu0 0
        %2355 = vmatpush1.bf16.msra.mxu0 %v2301
        %2356 = vmatprep.subr.bf16.mxu0 0
        %2357 = vmatpush1.bf16.msra.mxu0 %v2302
        %2358 = vmatprep.subr.bf16.mxu0 0
        %2359 = vmatpush1.bf16.msra.mxu0 %v2303
        %2360 = vmatprep.subr.bf16.mxu0 0
        %2361 = vmatpush1.bf16.msra.mxu0 %v2304
        %2362 = vmatprep.subr.bf16.mxu0 0
        %2363 = vmatpush1.bf16.msra.mxu0 %v2305
        %2364 = vmatprep.subr.bf16.mxu0 0
        %2365 = vmatpush1.bf16.msra.mxu0 %v2306
        %2366 = vmatprep.subr.bf16.mxu0 0
        %2367 = vmatpush1.bf16.msra.mxu0 %v2307
        %2368 = vmatprep.subr.bf16.mxu0 0
        %2369 = vmatpush1.bf16.msra.mxu0 %v2308
        %2370 = vmatprep.subr.bf16.mxu0 0
        %2371 = vmatpush1.bf16.msra.mxu0 %v2309
        %2372 = vmatprep.subr.bf16.mxu0 0
        %2373 = vmatpush1.bf16.msra.mxu0 %v2310
        %2374 = vmatprep.subr.bf16.mxu0 0
        %2375 = vmatpush1.bf16.msra.mxu0 %v2311
        %2376 = vmatprep.mubr.bf16.mxu0 %v2150
        %2377 = vmatmul.mubr.bf16.gmra.mrb[0].mxu0 %v2149
        %v2378 = vpop.f32.mrb[0].mxu0
        %v2379 = vadd.f32 0.0, %v2378
        %v2380 = vpop.f32.mrb[0].mxu0
        %v2381 = vpop.f32.mrb[0].mxu0
        %v2382 = vadd.f32 0.0, %v2381
        %v2383 = vpop.f32.mrb[0].mxu0
        %2384 = vdwg.mxu0
        %2385 = vmatprep.subr.bf16.mxu0 0
        %2386 = vmatpush1.bf16.msra.mxu0 %v2312
        %2387 = vmatprep.subr.bf16.mxu0 0
        %2388 = vmatpush1.bf16.msra.mxu0 %v2313
        %2389 = vmatprep.subr.bf16.mxu0 0
        %2390 = vmatpush1.bf16.msra.mxu0 %v2314
        %2391 = vmatprep.subr.bf16.mxu0 0
        %2392 = vmatpush1.bf16.msra.mxu0 %v2315
        %2393 = vmatprep.subr.bf16.mxu0 0
        %2394 = vmatpush1.bf16.msra.mxu0 %v2316
        %2395 = vmatprep.subr.bf16.mxu0 0
        %2396 = vmatpush1.bf16.msra.mxu0 %v2317
        %2397 = vmatprep.subr.bf16.mxu0 0
        %2398 = vmatpush1.bf16.msra.mxu0 %v2318
        %2399 = vmatprep.subr.bf16.mxu0 0
        %2400 = vmatpush1.bf16.msra.mxu0 %v2319
        %2401 = vmatprep.subr.bf16.mxu0 0
        %2402 = vmatpush1.bf16.msra.mxu0 0
        %2403 = vmatprep.subr.bf16.mxu0 0
        %2404 = vmatpush1.bf16.msra.mxu0 0
        %2405 = vmatprep.subr.bf16.mxu0 0
        %2406 = vmatpush1.bf16.msra.mxu0 0
        %2407 = vmatprep.subr.bf16.mxu0 0
        %2408 = vmatpush1.bf16.msra.mxu0 0
        %2409 = vmatprep.subr.bf16.mxu0 0
        %2410 = vmatpush1.bf16.msra.mxu0 0
        %2411 = vmatprep.subr.bf16.mxu0 0
        %2412 = vmatpush1.bf16.msra.mxu0 0
        %2413 = vmatprep.subr.bf16.mxu0 0
        %2414 = vmatpush1.bf16.msra.mxu0 0
        %2415 = vmatprep.subr.bf16.mxu0 0
        %2416 = vmatpush1.bf16.msra.mxu0 0
        %2417 = vmatprep.mubr.bf16.mxu0 0
        %2418 = vmatmul.mubr.bf16.gmra.mrb[0].mxu0 %v2151
        %v2419 = vpop.f32.mrb[0].mxu0
        %v2420 = vadd.f32 %v2379, %v2419
        %v2421 = vpop.f32.mrb[0].mxu0
        %v2422 = vpop.f32.mrb[0].mxu0
        %v2423 = vadd.f32 %v2382, %v2422
        %v2424 = vpop.f32.mrb[0].mxu0
        %2425 = vdwg.mxu0
        %v2426 = vld [vmem:[%s3 + $0x2] sm:$0x1]
        %v2427 = vlaneseq
        %v2428 = vshrl.u32 %v2427, 7
        %v2429 = vsub.s32 0, %v2428
        %v2430 = vrot.slane %v2426, %v2429
        %v2431 = vmul.f32 %v2420, %v2430
        %v2432 = vmul.f32 %v2423, %v2430
        %v2433 = vld [vmem:[%s3 + $0x3] sm:$0x1]
        %v2434 = vlaneseq
        %v2435 = vshrl.u32 %v2434, 7
        %v2436 = vsub.s32 0, %v2435
        %v2437 = vrot.slane %v2433, %v2436
        %v2438 = vadd.f32 %v2431, %v2437
        %v2439 = vadd.f32 %v2432, %v2437
        %v2442 = vrot.slane %v2438, 5
        %v2443 = vrot.slane %v2439, 5
        %v2444 = vsel %vm391, %v2442, %v2443
        %2448 = vst [vmem:[#allocation2] sm:$0xf8] %v2442
        %2449 = vst [vmem:[#allocation2 + $0x10] sm:$0xff] %v2444
        %2450 = vst [vmem:[#allocation2 + $0x20] sm:$0x7] %v2443
        %v2451 = vld [vmem:[#allocation2] sm:$0xff]
        %v2452 = vld [vmem:[#allocation2 + $0x8] sm:$0xff]
        %v2453 = vld [vmem:[#allocation2 + $0x10] sm:$0xff]
        %v2454 = vld [vmem:[#allocation2 + $0x18] sm:$0xff]
        %2455 = vrot.lane.b32.xlu0 %v2451, 24
        %v2456 = vpop.permute.xlu0 %2455
        %2457 = vrot.lane.b32.xlu0 %v2453, 24
        %v2458 = vpop.permute.xlu0 %2457
        %2459 = vrot.lane.b32.xlu0 %v2452, 24
        %v2460 = vpop.permute.xlu0 %2459
        %2461 = vrot.lane.b32.xlu0 %v2454, 24
        %v2462 = vpop.permute.xlu0 %2461
        %v2463 = vsel %vm415, %v2460, %v2456
        %v2464 = vsel %vm415, %v2462, %v2458
        %v2465 = vld [vmem:[%s2] sm:$0x1]
        %v2466 = vlaneseq
        %v2467 = vshrl.u32 %v2466, 7
        %v2468 = vsub.s32 0, %v2467
        %v2469 = vrot.slane %v2465, %v2468
        %v2470 = vmul.f32 %v2463, %v2469
        %v2471 = vmul.f32 %v2464, %v2469
        %v2472 = vadd.f32 %v2470, 0.0
        %v2473 = vadd.f32 %v2471, 0.0
        %2474 = vrot.lane.b32.xlu0 %v2451, 16
        %v2475 = vpop.permute.xlu0 %2474
        %2476 = vrot.lane.b32.xlu0 %v2453, 16
        %v2477 = vpop.permute.xlu0 %2476
        %2478 = vrot.lane.b32.xlu0 %v2452, 16
        %v2479 = vpop.permute.xlu0 %2478
        %2480 = vrot.lane.b32.xlu0 %v2454, 16
        %v2481 = vpop.permute.xlu0 %2480
        %v2482 = vsel %vm435, %v2479, %v2475
        %v2483 = vsel %vm435, %v2481, %v2477
        %v2484 = vld [vmem:[%s2 + $0x1] sm:$0x1]
        %v2485 = vlaneseq
        %v2486 = vshrl.u32 %v2485, 7
        %v2487 = vsub.s32 0, %v2486
        %v2488 = vrot.slane %v2484, %v2487
        %v2489 = vmul.f32 %v2482, %v2488
        %v2490 = vmul.f32 %v2483, %v2488
        %v2491 = vadd.f32 %v2472, %v2489
        %v2492 = vadd.f32 %v2473, %v2490
        %2493 = vrot.lane.b32.xlu0 %v2451, 8
        %v2494 = vpop.permute.xlu0 %2493
        %2495 = vrot.lane.b32.xlu0 %v2453, 8
        %v2496 = vpop.permute.xlu0 %2495
        %2497 = vrot.lane.b32.xlu0 %v2452, 8
        %v2498 = vpop.permute.xlu0 %2497
        %2499 = vrot.lane.b32.xlu0 %v2454, 8
        %v2500 = vpop.permute.xlu0 %2499
        %v2501 = vsel %vm455, %v2498, %v2494
        %v2502 = vsel %vm455, %v2500, %v2496
        %v2503 = vld [vmem:[%s2 + $0x2] sm:$0x1]
        %v2504 = vlaneseq
        %v2505 = vshrl.u32 %v2504, 7
        %v2506 = vsub.s32 0, %v2505
        %v2507 = vrot.slane %v2503, %v2506
        %v2508 = vmul.f32 %v2501, %v2507
        %v2509 = vmul.f32 %v2502, %v2507
        %v2510 = vadd.f32 %v2491, %v2508
        %v2511 = vadd.f32 %v2492, %v2509
        %v2512 = vld [vmem:[%s2 + $0x3] sm:$0x1]
        %v2513 = vlaneseq
        %v2514 = vshrl.u32 %v2513, 7
        %v2515 = vsub.s32 0, %v2514
        %v2516 = vrot.slane %v2512, %v2515
        %v2517 = vmul.f32 %v2451, %v2516
        %v2518 = vmul.f32 %v2453, %v2516
        %v2519 = vadd.f32 %v2510, %v2517
        %v2520 = vadd.f32 %v2511, %v2518
        %2521 = vrot.lane.b32.xlu0 %v2451, 120
        %v2522 = vpop.permute.xlu0 %2521
        %2523 = vrot.lane.b32.xlu0 %v2453, 120
        %v2524 = vpop.permute.xlu0 %2523
        %2525 = vrot.lane.b32.xlu0 %v2452, 120
        %v2526 = vpop.permute.xlu0 %2525
        %2527 = vrot.lane.b32.xlu0 %v2454, 120
        %v2528 = vpop.permute.xlu0 %2527
        %v2529 = vsel %vm484, %v2522, %v2526
        %v2530 = vsel %vm484, %v2524, %v2528
        %v2531 = vld [vmem:[%s2 + $0x4] sm:$0x1]
        %v2532 = vlaneseq
        %v2533 = vshrl.u32 %v2532, 7
        %v2534 = vsub.s32 0, %v2533
        %v2535 = vrot.slane %v2531, %v2534
        %v2536 = vmul.f32 %v2529, %v2535
        %v2537 = vmul.f32 %v2530, %v2535
        %v2538 = vadd.f32 %v2519, %v2536
        %v2539 = vadd.f32 %v2520, %v2537
        %2540 = vrot.lane.b32.xlu0 %v2451, 112
        %v2541 = vpop.permute.xlu0 %2540
        %2542 = vrot.lane.b32.xlu0 %v2453, 112
        %v2543 = vpop.permute.xlu0 %2542
        %2544 = vrot.lane.b32.xlu0 %v2452, 112
        %v2545 = vpop.permute.xlu0 %2544
        %2546 = vrot.lane.b32.xlu0 %v2454, 112
        %v2547 = vpop.permute.xlu0 %2546
        %v2548 = vsel %vm504, %v2541, %v2545
        %v2549 = vsel %vm504, %v2543, %v2547
        %v2550 = vld [vmem:[%s2 + $0x5] sm:$0x1]
        %v2551 = vlaneseq
        %v2552 = vshrl.u32 %v2551, 7
        %v2553 = vsub.s32 0, %v2552
        %v2554 = vrot.slane %v2550, %v2553
        %v2555 = vmul.f32 %v2548, %v2554
        %v2556 = vmul.f32 %v2549, %v2554
        %v2557 = vadd.f32 %v2538, %v2555
        %v2558 = vadd.f32 %v2539, %v2556
        %2559 = vrot.lane.b32.xlu0 %v2451, 104
        %v2560 = vpop.permute.xlu0 %2559
        %2561 = vrot.lane.b32.xlu0 %v2453, 104
        %v2562 = vpop.permute.xlu0 %2561
        %2563 = vrot.lane.b32.xlu0 %v2452, 104
        %v2564 = vpop.permute.xlu0 %2563
        %2565 = vrot.lane.b32.xlu0 %v2454, 104
        %v2566 = vpop.permute.xlu0 %2565
        %v2567 = vsel %vm524, %v2560, %v2564
        %v2568 = vsel %vm524, %v2562, %v2566
        %v2569 = vld [vmem:[%s2 + $0x6] sm:$0x1]
        %v2570 = vlaneseq
        %v2571 = vshrl.u32 %v2570, 7
        %v2572 = vsub.s32 0, %v2571
        %v2573 = vrot.slane %v2569, %v2572
        %v2574 = vmul.f32 %v2567, %v2573
        %v2575 = vmul.f32 %v2568, %v2573
        %v2576 = vadd.f32 %v2557, %v2574
        %v2577 = vadd.f32 %v2558, %v2575
        %v2578 = vld [vmem:[#allocation2] sm:$0xfe]
        %v2579 = vld [vmem:[#allocation2 + $0x8] sm:$0xfe]
        %v2580 = vld [vmem:[#allocation2 + $0x10] sm:$0xff]
        %v2581 = vld [vmem:[#allocation2 + $0x18] sm:$0xff]
        %v2582 = vld [vmem:[#allocation2 + $0x20] sm:$0x1]
        %v2583 = vld [vmem:[#allocation2 + $0x28] sm:$0x1]
        %v2590 = vrot.slane %v2578, 1
        %v2591 = vrot.slane %v2580, 1
        %v2592 = vsel %vm548, %v2590, %v2591
        %v2593 = vrot.slane %v2579, 1
        %v2594 = vrot.slane %v2581, 1
        %v2595 = vsel %vm548, %v2593, %v2594
        %v2596 = vrot.slane %v2582, 1
        %v2597 = vsel %vm548, %v2591, %v2596
        %v2598 = vrot.slane %v2583, 1
        %v2599 = vsel %vm548, %v2594, %v2598
        %2604 = vrot.lane.b32.xlu0 %v2592, 24
        %v2605 = vpop.permute.xlu0 %2604
        %2606 = vrot.lane.b32.xlu0 %v2597, 24
        %v2607 = vpop.permute.xlu0 %2606
        %2608 = vrot.lane.b32.xlu0 %v2595, 24
        %v2609 = vpop.permute.xlu0 %2608
        %2610 = vrot.lane.b32.xlu0 %v2599, 24
        %v2611 = vpop.permute.xlu0 %2610
        %v2612 = vsel %vm415, %v2609, %v2605
        %v2613 = vsel %vm415, %v2611, %v2607
        %v2614 = vld [vmem:[%s2 + $0x7] sm:$0x1]
        %v2615 = vlaneseq
        %v2616 = vshrl.u32 %v2615, 7
        %v2617 = vsub.s32 0, %v2616
        %v2618 = vrot.slane %v2614, %v2617
        %v2619 = vmul.f32 %v2612, %v2618
        %v2620 = vmul.f32 %v2613, %v2618
        %v2621 = vadd.f32 %v2576, %v2619
        %v2622 = vadd.f32 %v2577, %v2620
        %2623 = vrot.lane.b32.xlu0 %v2592, 16
        %v2624 = vpop.permute.xlu0 %2623
        %2625 = vrot.lane.b32.xlu0 %v2597, 16
        %v2626 = vpop.permute.xlu0 %2625
        %2627 = vrot.lane.b32.xlu0 %v2595, 16
        %v2628 = vpop.permute.xlu0 %2627
        %2629 = vrot.lane.b32.xlu0 %v2599, 16
        %v2630 = vpop.permute.xlu0 %2629
        %v2631 = vsel %vm435, %v2628, %v2624
        %v2632 = vsel %vm435, %v2630, %v2626
        %v2633 = vld [vmem:[%s2 + $0x8] sm:$0x1]
        %v2634 = vlaneseq
        %v2635 = vshrl.u32 %v2634, 7
        %v2636 = vsub.s32 0, %v2635
        %v2637 = vrot.slane %v2633, %v2636
        %v2638 = vmul.f32 %v2631, %v2637
        %v2639 = vmul.f32 %v2632, %v2637
        %v2640 = vadd.f32 %v2621, %v2638
        %v2641 = vadd.f32 %v2622, %v2639
        %2642 = vrot.lane.b32.xlu0 %v2592, 8
        %v2643 = vpop.permute.xlu0 %2642
        %2644 = vrot.lane.b32.xlu0 %v2597, 8
        %v2645 = vpop.permute.xlu0 %2644
        %2646 = vrot.lane.b32.xlu0 %v2595, 8
        %v2647 = vpop.permute.xlu0 %2646
        %2648 = vrot.lane.b32.xlu0 %v2599, 8
        %v2649 = vpop.permute.xlu0 %2648
        %v2650 = vsel %vm455, %v2647, %v2643
        %v2651 = vsel %vm455, %v2649, %v2645
        %v2652 = vld [vmem:[%s2 + $0x9] sm:$0x1]
        %v2653 = vlaneseq
        %v2654 = vshrl.u32 %v2653, 7
        %v2655 = vsub.s32 0, %v2654
        %v2656 = vrot.slane %v2652, %v2655
        %v2657 = vmul.f32 %v2650, %v2656
        %v2658 = vmul.f32 %v2651, %v2656
        %v2659 = vadd.f32 %v2640, %v2657
        %v2660 = vadd.f32 %v2641, %v2658
        %v2661 = vld [vmem:[%s2 + $0xa] sm:$0x1]
        %v2662 = vlaneseq
        %v2663 = vshrl.u32 %v2662, 7
        %v2664 = vsub.s32 0, %v2663
        %v2665 = vrot.slane %v2661, %v2664
        %v2666 = vmul.f32 %v2578, %v2665
        %v2667 = vmul.f32 %v2580, %v2665
        %v2668 = vmul.f32 %v2582, %v2665
        %v2672 = vrot.slane %v2666, 1
        %v2673 = vrot.slane %v2667, 1
        %v2674 = vsel %vm548, %v2672, %v2673
        %v2675 = vrot.slane %v2668, 1
        %v2676 = vsel %vm548, %v2673, %v2675
        %v2679 = vadd.f32 %v2659, %v2674
        %v2680 = vadd.f32 %v2660, %v2676
        %2681 = vrot.lane.b32.xlu0 %v2592, 120
        %v2682 = vpop.permute.xlu0 %2681
        %2683 = vrot.lane.b32.xlu0 %v2597, 120
        %v2684 = vpop.permute.xlu0 %2683
        %2685 = vrot.lane.b32.xlu0 %v2595, 120
        %v2686 = vpop.permute.xlu0 %2685
        %2687 = vrot.lane.b32.xlu0 %v2599, 120
        %v2688 = vpop.permute.xlu0 %2687
        %v2689 = vsel %vm484, %v2682, %v2686
        %v2690 = vsel %vm484, %v2684, %v2688
        %v2691 = vld [vmem:[%s2 + $0xb] sm:$0x1]
        %v2692 = vlaneseq
        %v2693 = vshrl.u32 %v2692, 7
        %v2694 = vsub.s32 0, %v2693
        %v2695 = vrot.slane %v2691, %v2694
        %v2696 = vmul.f32 %v2689, %v2695
        %v2697 = vmul.f32 %v2690, %v2695
        %v2698 = vadd.f32 %v2679, %v2696
        %v2699 = vadd.f32 %v2680, %v2697
        %2700 = vrot.lane.b32.xlu0 %v2592, 112
        %v2701 = vpop.permute.xlu0 %2700
        %2702 = vrot.lane.b32.xlu0 %v2597, 112
        %v2703 = vpop.permute.xlu0 %2702
        %2704 = vrot.lane.b32.xlu0 %v2595, 112
        %v2705 = vpop.permute.xlu0 %2704
        %2706 = vrot.lane.b32.xlu0 %v2599, 112
        %v2707 = vpop.permute.xlu0 %2706
        %v2708 = vsel %vm504, %v2701, %v2705
        %v2709 = vsel %vm504, %v2703, %v2707
        %v2710 = vld [vmem:[%s2 + $0xc] sm:$0x1]
        %v2711 = vlaneseq
        %v2712 = vshrl.u32 %v2711, 7
        %v2713 = vsub.s32 0, %v2712
        %v2714 = vrot.slane %v2710, %v2713
        %v2715 = vmul.f32 %v2708, %v2714
        %v2716 = vmul.f32 %v2709, %v2714
        %v2717 = vadd.f32 %v2698, %v2715
        %v2718 = vadd.f32 %v2699, %v2716
        %2719 = vrot.lane.b32.xlu0 %v2592, 104
        %v2720 = vpop.permute.xlu0 %2719
        %2721 = vrot.lane.b32.xlu0 %v2597, 104
        %v2722 = vpop.permute.xlu0 %2721
        %2723 = vrot.lane.b32.xlu0 %v2595, 104
        %v2724 = vpop.permute.xlu0 %2723
        %2725 = vrot.lane.b32.xlu0 %v2599, 104
        %v2726 = vpop.permute.xlu0 %2725
        %v2727 = vsel %vm524, %v2720, %v2724
        %v2728 = vsel %vm524, %v2722, %v2726
        %v2729 = vld [vmem:[%s2 + $0xd] sm:$0x1]
        %v2730 = vlaneseq
        %v2731 = vshrl.u32 %v2730, 7
        %v2732 = vsub.s32 0, %v2731
        %v2733 = vrot.slane %v2729, %v2732
        %v2734 = vmul.f32 %v2727, %v2733
        %v2735 = vmul.f32 %v2728, %v2733
        %v2736 = vadd.f32 %v2717, %v2734
        %v2737 = vadd.f32 %v2718, %v2735
        %v2738 = vld [vmem:[#allocation2] sm:$0xfc]
        %v2739 = vld [vmem:[#allocation2 + $0x8] sm:$0xfc]
        %v2740 = vld [vmem:[#allocation2 + $0x20] sm:$0x3]
        %v2741 = vld [vmem:[#allocation2 + $0x28] sm:$0x3]
        %v2746 = vrot.slane %v2738, 2
        %v2747 = vrot.slane %v2580, 2
        %v2748 = vsel %vm705, %v2746, %v2747
        %v2749 = vrot.slane %v2739, 2
        %v2750 = vrot.slane %v2581, 2
        %v2751 = vsel %vm705, %v2749, %v2750
        %v2752 = vrot.slane %v2740, 2
        %v2753 = vsel %vm705, %v2747, %v2752
        %v2754 = vrot.slane %v2741, 2
        %v2755 = vsel %vm705, %v2750, %v2754
        %2760 = vrot.lane.b32.xlu0 %v2748, 24
        %v2761 = vpop.permute.xlu0 %2760
        %2762 = vrot.lane.b32.xlu0 %v2753, 24
        %v2763 = vpop.permute.xlu0 %2762
        %2764 = vrot.lane.b32.xlu0 %v2751, 24
        %v2765 = vpop.permute.xlu0 %2764
        %2766 = vrot.lane.b32.xlu0 %v2755, 24
        %v2767 = vpop.permute.xlu0 %2766
        %v2768 = vsel %vm415, %v2765, %v2761
        %v2769 = vsel %vm415, %v2767, %v2763
        %v2770 = vld [vmem:[%s2 + $0xe] sm:$0x1]
        %v2771 = vlaneseq
        %v2772 = vshrl.u32 %v2771, 7
        %v2773 = vsub.s32 0, %v2772
        %v2774 = vrot.slane %v2770, %v2773
        %v2775 = vmul.f32 %v2768, %v2774
        %v2776 = vmul.f32 %v2769, %v2774
        %v2777 = vadd.f32 %v2736, %v2775
        %v2778 = vadd.f32 %v2737, %v2776
        %2779 = vrot.lane.b32.xlu0 %v2748, 16
        %v2780 = vpop.permute.xlu0 %2779
        %2781 = vrot.lane.b32.xlu0 %v2753, 16
        %v2782 = vpop.permute.xlu0 %2781
        %2783 = vrot.lane.b32.xlu0 %v2751, 16
        %v2784 = vpop.permute.xlu0 %2783
        %2785 = vrot.lane.b32.xlu0 %v2755, 16
        %v2786 = vpop.permute.xlu0 %2785
        %v2787 = vsel %vm435, %v2784, %v2780
        %v2788 = vsel %vm435, %v2786, %v2782
        %v2789 = vld [vmem:[%s2 + $0xf] sm:$0x1]
        %v2790 = vlaneseq
        %v2791 = vshrl.u32 %v2790, 7
        %v2792 = vsub.s32 0, %v2791
        %v2793 = vrot.slane %v2789, %v2792
        %v2794 = vmul.f32 %v2787, %v2793
        %v2795 = vmul.f32 %v2788, %v2793
        %v2796 = vadd.f32 %v2777, %v2794
        %v2797 = vadd.f32 %v2778, %v2795
        %2798 = vrot.lane.b32.xlu0 %v2748, 8
        %v2799 = vpop.permute.xlu0 %2798
        %2800 = vrot.lane.b32.xlu0 %v2753, 8
        %v2801 = vpop.permute.xlu0 %2800
        %2802 = vrot.lane.b32.xlu0 %v2751, 8
        %v2803 = vpop.permute.xlu0 %2802
        %2804 = vrot.lane.b32.xlu0 %v2755, 8
        %v2805 = vpop.permute.xlu0 %2804
        %v2806 = vsel %vm455, %v2803, %v2799
        %v2807 = vsel %vm455, %v2805, %v2801
        %v2808 = vld [vmem:[%s2 + $0x10] sm:$0x1]
        %v2809 = vlaneseq
        %v2810 = vshrl.u32 %v2809, 7
        %v2811 = vsub.s32 0, %v2810
        %v2812 = vrot.slane %v2808, %v2811
        %v2813 = vmul.f32 %v2806, %v2812
        %v2814 = vmul.f32 %v2807, %v2812
        %v2815 = vadd.f32 %v2796, %v2813
        %v2816 = vadd.f32 %v2797, %v2814
        %v2817 = vld [vmem:[%s2 + $0x11] sm:$0x1]
        %v2818 = vlaneseq
        %v2819 = vshrl.u32 %v2818, 7
        %v2820 = vsub.s32 0, %v2819
        %v2821 = vrot.slane %v2817, %v2820
        %v2822 = vmul.f32 %v2738, %v2821
        %v2823 = vmul.f32 %v2580, %v2821
        %v2824 = vmul.f32 %v2740, %v2821
        %v2828 = vrot.slane %v2822, 2
        %v2829 = vrot.slane %v2823, 2
        %v2830 = vsel %vm705, %v2828, %v2829
        %v2831 = vrot.slane %v2824, 2
        %v2832 = vsel %vm705, %v2829, %v2831
        %v2835 = vadd.f32 %v2815, %v2830
        %v2836 = vadd.f32 %v2816, %v2832
        %2837 = vrot.lane.b32.xlu0 %v2748, 120
        %v2838 = vpop.permute.xlu0 %2837
        %2839 = vrot.lane.b32.xlu0 %v2753, 120
        %v2840 = vpop.permute.xlu0 %2839
        %2841 = vrot.lane.b32.xlu0 %v2751, 120
        %v2842 = vpop.permute.xlu0 %2841
        %2843 = vrot.lane.b32.xlu0 %v2755, 120
        %v2844 = vpop.permute.xlu0 %2843
        %v2845 = vsel %vm484, %v2838, %v2842
        %v2846 = vsel %vm484, %v2840, %v2844
        %v2847 = vld [vmem:[%s2 + $0x12] sm:$0x1]
        %v2848 = vlaneseq
        %v2849 = vshrl.u32 %v2848, 7
        %v2850 = vsub.s32 0, %v2849
        %v2851 = vrot.slane %v2847, %v2850
        %v2852 = vmul.f32 %v2845, %v2851
        %v2853 = vmul.f32 %v2846, %v2851
        %v2854 = vadd.f32 %v2835, %v2852
        %v2855 = vadd.f32 %v2836, %v2853
        %2856 = vrot.lane.b32.xlu0 %v2748, 112
        %v2857 = vpop.permute.xlu0 %2856
        %2858 = vrot.lane.b32.xlu0 %v2753, 112
        %v2859 = vpop.permute.xlu0 %2858
        %2860 = vrot.lane.b32.xlu0 %v2751, 112
        %v2861 = vpop.permute.xlu0 %2860
        %2862 = vrot.lane.b32.xlu0 %v2755, 112
        %v2863 = vpop.permute.xlu0 %2862
        %v2864 = vsel %vm504, %v2857, %v2861
        %v2865 = vsel %vm504, %v2859, %v2863
        %v2866 = vld [vmem:[%s2 + $0x13] sm:$0x1]
        %v2867 = vlaneseq
        %v2868 = vshrl.u32 %v2867, 7
        %v2869 = vsub.s32 0, %v2868
        %v2870 = vrot.slane %v2866, %v2869
        %v2871 = vmul.f32 %v2864, %v2870
        %v2872 = vmul.f32 %v2865, %v2870
        %v2873 = vadd.f32 %v2854, %v2871
        %v2874 = vadd.f32 %v2855, %v2872
        %2875 = vrot.lane.b32.xlu0 %v2748, 104
        %v2876 = vpop.permute.xlu0 %2875
        %2877 = vrot.lane.b32.xlu0 %v2753, 104
        %v2878 = vpop.permute.xlu0 %2877
        %2879 = vrot.lane.b32.xlu0 %v2751, 104
        %v2880 = vpop.permute.xlu0 %2879
        %2881 = vrot.lane.b32.xlu0 %v2755, 104
        %v2882 = vpop.permute.xlu0 %2881
        %v2883 = vsel %vm524, %v2876, %v2880
        %v2884 = vsel %vm524, %v2878, %v2882
        %v2885 = vld [vmem:[%s2 + $0x14] sm:$0x1]
        %v2886 = vlaneseq
        %v2887 = vshrl.u32 %v2886, 7
        %v2888 = vsub.s32 0, %v2887
        %v2889 = vrot.slane %v2885, %v2888
        %v2890 = vmul.f32 %v2883, %v2889
        %v2891 = vmul.f32 %v2884, %v2889
        %v2892 = vadd.f32 %v2873, %v2890
        %v2893 = vadd.f32 %v2874, %v2891
        %v2894 = vld [vmem:[#allocation2] sm:$0xf8]
        %v2895 = vld [vmem:[#allocation2 + $0x8] sm:$0xf8]
        %v2896 = vld [vmem:[#allocation2 + $0x20] sm:$0x7]
        %v2897 = vld [vmem:[#allocation2 + $0x28] sm:$0x7]
        %v2902 = vrot.slane %v2894, 3
        %v2903 = vrot.slane %v2580, 3
        %v2904 = vsel %vm862, %v2902, %v2903
        %v2905 = vrot.slane %v2895, 3
        %v2906 = vrot.slane %v2581, 3
        %v2907 = vsel %vm862, %v2905, %v2906
        %v2908 = vrot.slane %v2896, 3
        %v2909 = vsel %vm862, %v2903, %v2908
        %v2910 = vrot.slane %v2897, 3
        %v2911 = vsel %vm862, %v2906, %v2910
        %2916 = vrot.lane.b32.xlu0 %v2904, 24
        %v2917 = vpop.permute.xlu0 %2916
        %2918 = vrot.lane.b32.xlu0 %v2909, 24
        %v2919 = vpop.permute.xlu0 %2918
        %2920 = vrot.lane.b32.xlu0 %v2907, 24
        %v2921 = vpop.permute.xlu0 %2920
        %2922 = vrot.lane.b32.xlu0 %v2911, 24
        %v2923 = vpop.permute.xlu0 %2922
        %v2924 = vsel %vm415, %v2921, %v2917
        %v2925 = vsel %vm415, %v2923, %v2919
        %v2926 = vld [vmem:[%s2 + $0x15] sm:$0x1]
        %v2927 = vlaneseq
        %v2928 = vshrl.u32 %v2927, 7
        %v2929 = vsub.s32 0, %v2928
        %v2930 = vrot.slane %v2926, %v2929
        %v2931 = vmul.f32 %v2924, %v2930
        %v2932 = vmul.f32 %v2925, %v2930
        %v2933 = vadd.f32 %v2892, %v2931
        %v2934 = vadd.f32 %v2893, %v2932
        %2935 = vrot.lane.b32.xlu0 %v2904, 16
        %v2936 = vpop.permute.xlu0 %2935
        %2937 = vrot.lane.b32.xlu0 %v2909, 16
        %v2938 = vpop.permute.xlu0 %2937
        %2939 = vrot.lane.b32.xlu0 %v2907, 16
        %v2940 = vpop.permute.xlu0 %2939
        %2941 = vrot.lane.b32.xlu0 %v2911, 16
        %v2942 = vpop.permute.xlu0 %2941
        %v2943 = vsel %vm435, %v2940, %v2936
        %v2944 = vsel %vm435, %v2942, %v2938
        %v2945 = vld [vmem:[%s2 + $0x16] sm:$0x1]
        %v2946 = vlaneseq
        %v2947 = vshrl.u32 %v2946, 7
        %v2948 = vsub.s32 0, %v2947
        %v2949 = vrot.slane %v2945, %v2948
        %v2950 = vmul.f32 %v2943, %v2949
        %v2951 = vmul.f32 %v2944, %v2949
        %v2952 = vadd.f32 %v2933, %v2950
        %v2953 = vadd.f32 %v2934, %v2951
        %2954 = vrot.lane.b32.xlu0 %v2904, 8
        %v2955 = vpop.permute.xlu0 %2954
        %2956 = vrot.lane.b32.xlu0 %v2909, 8
        %v2957 = vpop.permute.xlu0 %2956
        %2958 = vrot.lane.b32.xlu0 %v2907, 8
        %v2959 = vpop.permute.xlu0 %2958
        %2960 = vrot.lane.b32.xlu0 %v2911, 8
        %v2961 = vpop.permute.xlu0 %2960
        %v2962 = vsel %vm455, %v2959, %v2955
        %v2963 = vsel %vm455, %v2961, %v2957
        %v2964 = vld [vmem:[%s2 + $0x17] sm:$0x1]
        %v2965 = vlaneseq
        %v2966 = vshrl.u32 %v2965, 7
        %v2967 = vsub.s32 0, %v2966
        %v2968 = vrot.slane %v2964, %v2967
        %v2969 = vmul.f32 %v2962, %v2968
        %v2970 = vmul.f32 %v2963, %v2968
        %v2971 = vadd.f32 %v2952, %v2969
        %v2972 = vadd.f32 %v2953, %v2970
        %v2973 = vld [vmem:[%s2 + $0x18] sm:$0x1]
        %v2974 = vlaneseq
        %v2975 = vshrl.u32 %v2974, 7
        %v2976 = vsub.s32 0, %v2975
        %v2977 = vrot.slane %v2973, %v2976
        %v2978 = vmul.f32 %v2894, %v2977
        %v2979 = vmul.f32 %v2580, %v2977
        %v2980 = vmul.f32 %v2896, %v2977
        %v2984 = vrot.slane %v2978, 3
        %v2985 = vrot.slane %v2979, 3
        %v2986 = vsel %vm862, %v2984, %v2985
        %v2987 = vrot.slane %v2980, 3
        %v2988 = vsel %vm862, %v2985, %v2987
        %v2991 = vadd.f32 %v2971, %v2986
        %v2992 = vadd.f32 %v2972, %v2988
        %2993 = vrot.lane.b32.xlu0 %v2904, 120
        %v2994 = vpop.permute.xlu0 %2993
        %2995 = vrot.lane.b32.xlu0 %v2909, 120
        %v2996 = vpop.permute.xlu0 %2995
        %2997 = vrot.lane.b32.xlu0 %v2907, 120
        %v2998 = vpop.permute.xlu0 %2997
        %2999 = vrot.lane.b32.xlu0 %v2911, 120
        %v3000 = vpop.permute.xlu0 %2999
        %v3001 = vsel %vm484, %v2994, %v2998
        %v3002 = vsel %vm484, %v2996, %v3000
        %v3003 = vld [vmem:[%s2 + $0x19] sm:$0x1]
        %v3004 = vlaneseq
        %v3005 = vshrl.u32 %v3004, 7
        %v3006 = vsub.s32 0, %v3005
        %v3007 = vrot.slane %v3003, %v3006
        %v3008 = vmul.f32 %v3001, %v3007
        %v3009 = vmul.f32 %v3002, %v3007
        %v3010 = vadd.f32 %v2991, %v3008
        %v3011 = vadd.f32 %v2992, %v3009
        %3012 = vrot.lane.b32.xlu0 %v2904, 112
        %v3013 = vpop.permute.xlu0 %3012
        %3014 = vrot.lane.b32.xlu0 %v2909, 112
        %v3015 = vpop.permute.xlu0 %3014
        %3016 = vrot.lane.b32.xlu0 %v2907, 112
        %v3017 = vpop.permute.xlu0 %3016
        %3018 = vrot.lane.b32.xlu0 %v2911, 112
        %v3019 = vpop.permute.xlu0 %3018
        %v3020 = vsel %vm504, %v3013, %v3017
        %v3021 = vsel %vm504, %v3015, %v3019
        %v3022 = vld [vmem:[%s2 + $0x1a] sm:$0x1]
        %v3023 = vlaneseq
        %v3024 = vshrl.u32 %v3023, 7
        %v3025 = vsub.s32 0, %v3024
        %v3026 = vrot.slane %v3022, %v3025
        %v3027 = vmul.f32 %v3020, %v3026
        %v3028 = vmul.f32 %v3021, %v3026
        %v3029 = vadd.f32 %v3010, %v3027
        %v3030 = vadd.f32 %v3011, %v3028
        %3031 = vrot.lane.b32.xlu0 %v2904, 104
        %v3032 = vpop.permute.xlu0 %3031
        %3033 = vrot.lane.b32.xlu0 %v2909, 104
        %v3034 = vpop.permute.xlu0 %3033
        %3035 = vrot.lane.b32.xlu0 %v2907, 104
        %v3036 = vpop.permute.xlu0 %3035
        %3037 = vrot.lane.b32.xlu0 %v2911, 104
        %v3038 = vpop.permute.xlu0 %3037
        %v3039 = vsel %vm524, %v3032, %v3036
        %v3040 = vsel %vm524, %v3034, %v3038
        %v3041 = vld [vmem:[%s2 + $0x1b] sm:$0x1]
        %v3042 = vlaneseq
        %v3043 = vshrl.u32 %v3042, 7
        %v3044 = vsub.s32 0, %v3043
        %v3045 = vrot.slane %v3041, %v3044
        %v3046 = vmul.f32 %v3039, %v3045
        %v3047 = vmul.f32 %v3040, %v3045
        %v3048 = vadd.f32 %v3029, %v3046
        %v3049 = vadd.f32 %v3030, %v3047
        %v3050 = vld [vmem:[#allocation2] sm:$0xf0]
        %v3051 = vld [vmem:[#allocation2 + $0x8] sm:$0xf0]
        %v3052 = vld [vmem:[#allocation2 + $0x20] sm:$0xf]
        %v3053 = vld [vmem:[#allocation2 + $0x28] sm:$0xf]
        %v3058 = vrot.slane %v3050, 4
        %v3059 = vrot.slane %v2580, 4
        %v3060 = vsel %vm1019, %v3058, %v3059
        %v3061 = vrot.slane %v3051, 4
        %v3062 = vrot.slane %v2581, 4
        %v3063 = vsel %vm1019, %v3061, %v3062
        %v3064 = vrot.slane %v3052, 4
        %v3065 = vsel %vm1019, %v3059, %v3064
        %v3066 = vrot.slane %v3053, 4
        %v3067 = vsel %vm1019, %v3062, %v3066
        %3072 = vrot.lane.b32.xlu0 %v3060, 24
        %v3073 = vpop.permute.xlu0 %3072
        %3074 = vrot.lane.b32.xlu0 %v3065, 24
        %v3075 = vpop.permute.xlu0 %3074
        %3076 = vrot.lane.b32.xlu0 %v3063, 24
        %v3077 = vpop.permute.xlu0 %3076
        %3078 = vrot.lane.b32.xlu0 %v3067, 24
        %v3079 = vpop.permute.xlu0 %3078
        %v3080 = vsel %vm415, %v3077, %v3073
        %v3081 = vsel %vm415, %v3079, %v3075
        %v3082 = vld [vmem:[%s2 + $0x1c] sm:$0x1]
        %v3083 = vlaneseq
        %v3084 = vshrl.u32 %v3083, 7
        %v3085 = vsub.s32 0, %v3084
        %v3086 = vrot.slane %v3082, %v3085
        %v3087 = vmul.f32 %v3080, %v3086
        %v3088 = vmul.f32 %v3081, %v3086
        %v3089 = vadd.f32 %v3048, %v3087
        %v3090 = vadd.f32 %v3049, %v3088
        %3091 = vrot.lane.b32.xlu0 %v3060, 16
        %v3092 = vpop.permute.xlu0 %3091
        %3093 = vrot.lane.b32.xlu0 %v3065, 16
        %v3094 = vpop.permute.xlu0 %3093
        %3095 = vrot.lane.b32.xlu0 %v3063, 16
        %v3096 = vpop.permute.xlu0 %3095
        %3097 = vrot.lane.b32.xlu0 %v3067, 16
        %v3098 = vpop.permute.xlu0 %3097
        %v3099 = vsel %vm435, %v3096, %v3092
        %v3100 = vsel %vm435, %v3098, %v3094
        %v3101 = vld [vmem:[%s2 + $0x1d] sm:$0x1]
        %v3102 = vlaneseq
        %v3103 = vshrl.u32 %v3102, 7
        %v3104 = vsub.s32 0, %v3103
        %v3105 = vrot.slane %v3101, %v3104
        %v3106 = vmul.f32 %v3099, %v3105
        %v3107 = vmul.f32 %v3100, %v3105
        %v3108 = vadd.f32 %v3089, %v3106
        %v3109 = vadd.f32 %v3090, %v3107
        %3110 = vrot.lane.b32.xlu0 %v3060, 8
        %v3111 = vpop.permute.xlu0 %3110
        %3112 = vrot.lane.b32.xlu0 %v3065, 8
        %v3113 = vpop.permute.xlu0 %3112
        %3114 = vrot.lane.b32.xlu0 %v3063, 8
        %v3115 = vpop.permute.xlu0 %3114
        %3116 = vrot.lane.b32.xlu0 %v3067, 8
        %v3117 = vpop.permute.xlu0 %3116
        %v3118 = vsel %vm455, %v3115, %v3111
        %v3119 = vsel %vm455, %v3117, %v3113
        %v3120 = vld [vmem:[%s2 + $0x1e] sm:$0x1]
        %v3121 = vlaneseq
        %v3122 = vshrl.u32 %v3121, 7
        %v3123 = vsub.s32 0, %v3122
        %v3124 = vrot.slane %v3120, %v3123
        %v3125 = vmul.f32 %v3118, %v3124
        %v3126 = vmul.f32 %v3119, %v3124
        %v3127 = vadd.f32 %v3108, %v3125
        %v3128 = vadd.f32 %v3109, %v3126
        %v3129 = vld [vmem:[%s2 + $0x1f] sm:$0x1]
        %v3130 = vlaneseq
        %v3131 = vshrl.u32 %v3130, 7
        %v3132 = vsub.s32 0, %v3131
        %v3133 = vrot.slane %v3129, %v3132
        %v3134 = vmul.f32 %v3050, %v3133
        %v3135 = vmul.f32 %v2580, %v3133
        %v3136 = vmul.f32 %v3052, %v3133
        %v3140 = vrot.slane %v3134, 4
        %v3141 = vrot.slane %v3135, 4
        %v3142 = vsel %vm1019, %v3140, %v3141
        %v3143 = vrot.slane %v3136, 4
        %v3144 = vsel %vm1019, %v3141, %v3143
        %v3147 = vadd.f32 %v3127, %v3142
        %v3148 = vadd.f32 %v3128, %v3144
        %3149 = vrot.lane.b32.xlu0 %v3060, 120
        %v3150 = vpop.permute.xlu0 %3149
        %3151 = vrot.lane.b32.xlu0 %v3065, 120
        %v3152 = vpop.permute.xlu0 %3151
        %3153 = vrot.lane.b32.xlu0 %v3063, 120
        %v3154 = vpop.permute.xlu0 %3153
        %3155 = vrot.lane.b32.xlu0 %v3067, 120
        %v3156 = vpop.permute.xlu0 %3155
        %v3157 = vsel %vm484, %v3150, %v3154
        %v3158 = vsel %vm484, %v3152, %v3156
        %v3159 = vld [vmem:[%s2 + $0x20] sm:$0x1]
        %v3160 = vlaneseq
        %v3161 = vshrl.u32 %v3160, 7
        %v3162 = vsub.s32 0, %v3161
        %v3163 = vrot.slane %v3159, %v3162
        %v3164 = vmul.f32 %v3157, %v3163
        %v3165 = vmul.f32 %v3158, %v3163
        %v3166 = vadd.f32 %v3147, %v3164
        %v3167 = vadd.f32 %v3148, %v3165
        %3168 = vrot.lane.b32.xlu0 %v3060, 112
        %v3169 = vpop.permute.xlu0 %3168
        %3170 = vrot.lane.b32.xlu0 %v3065, 112
        %v3171 = vpop.permute.xlu0 %3170
        %3172 = vrot.lane.b32.xlu0 %v3063, 112
        %v3173 = vpop.permute.xlu0 %3172
        %3174 = vrot.lane.b32.xlu0 %v3067, 112
        %v3175 = vpop.permute.xlu0 %3174
        %v3176 = vsel %vm504, %v3169, %v3173
        %v3177 = vsel %vm504, %v3171, %v3175
        %v3178 = vld [vmem:[%s2 + $0x21] sm:$0x1]
        %v3179 = vlaneseq
        %v3180 = vshrl.u32 %v3179, 7
        %v3181 = vsub.s32 0, %v3180
        %v3182 = vrot.slane %v3178, %v3181
        %v3183 = vmul.f32 %v3176, %v3182
        %v3184 = vmul.f32 %v3177, %v3182
        %v3185 = vadd.f32 %v3166, %v3183
        %v3186 = vadd.f32 %v3167, %v3184
        %3187 = vrot.lane.b32.xlu0 %v3060, 104
        %v3188 = vpop.permute.xlu0 %3187
        %3189 = vrot.lane.b32.xlu0 %v3065, 104
        %v3190 = vpop.permute.xlu0 %3189
        %3191 = vrot.lane.b32.xlu0 %v3063, 104
        %v3192 = vpop.permute.xlu0 %3191
        %3193 = vrot.lane.b32.xlu0 %v3067, 104
        %v3194 = vpop.permute.xlu0 %3193
        %v3195 = vsel %vm524, %v3188, %v3192
        %v3196 = vsel %vm524, %v3190, %v3194
        %v3197 = vld [vmem:[%s2 + $0x22] sm:$0x1]
        %v3198 = vlaneseq
        %v3199 = vshrl.u32 %v3198, 7
        %v3200 = vsub.s32 0, %v3199
        %v3201 = vrot.slane %v3197, %v3200
        %v3202 = vmul.f32 %v3195, %v3201
        %v3203 = vmul.f32 %v3196, %v3201
        %v3204 = vadd.f32 %v3185, %v3202
        %v3205 = vadd.f32 %v3186, %v3203
        %v3206 = vld [vmem:[#allocation2] sm:$0xe0]
        %v3207 = vld [vmem:[#allocation2 + $0x8] sm:$0xe0]
        %v3208 = vld [vmem:[#allocation2 + $0x20] sm:$0x1f]
        %v3209 = vld [vmem:[#allocation2 + $0x28] sm:$0x1f]
        %v3214 = vrot.slane %v3206, 5
        %v3215 = vrot.slane %v2580, 5
        %v3216 = vsel %vm391, %v3214, %v3215
        %v3217 = vrot.slane %v3207, 5
        %v3218 = vrot.slane %v2581, 5
        %v3219 = vsel %vm391, %v3217, %v3218
        %v3220 = vrot.slane %v3208, 5
        %v3221 = vsel %vm391, %v3215, %v3220
        %v3222 = vrot.slane %v3209, 5
        %v3223 = vsel %vm391, %v3218, %v3222
        %3228 = vrot.lane.b32.xlu0 %v3216, 24
        %v3229 = vpop.permute.xlu0 %3228
        %3230 = vrot.lane.b32.xlu0 %v3221, 24
        %v3231 = vpop.permute.xlu0 %3230
        %3232 = vrot.lane.b32.xlu0 %v3219, 24
        %v3233 = vpop.permute.xlu0 %3232
        %3234 = vrot.lane.b32.xlu0 %v3223, 24
        %v3235 = vpop.permute.xlu0 %3234
        %v3236 = vsel %vm415, %v3233, %v3229
        %v3237 = vsel %vm415, %v3235, %v3231
        %v3238 = vld [vmem:[%s2 + $0x23] sm:$0x1]
        %v3239 = vlaneseq
        %v3240 = vshrl.u32 %v3239, 7
        %v3241 = vsub.s32 0, %v3240
        %v3242 = vrot.slane %v3238, %v3241
        %v3243 = vmul.f32 %v3236, %v3242
        %v3244 = vmul.f32 %v3237, %v3242
        %v3245 = vadd.f32 %v3204, %v3243
        %v3246 = vadd.f32 %v3205, %v3244
        %3247 = vrot.lane.b32.xlu0 %v3216, 16
        %v3248 = vpop.permute.xlu0 %3247
        %3249 = vrot.lane.b32.xlu0 %v3221, 16
        %v3250 = vpop.permute.xlu0 %3249
        %3251 = vrot.lane.b32.xlu0 %v3219, 16
        %v3252 = vpop.permute.xlu0 %3251
        %3253 = vrot.lane.b32.xlu0 %v3223, 16
        %v3254 = vpop.permute.xlu0 %3253
        %v3255 = vsel %vm435, %v3252, %v3248
        %v3256 = vsel %vm435, %v3254, %v3250
        %v3257 = vld [vmem:[%s2 + $0x24] sm:$0x1]
        %v3258 = vlaneseq
        %v3259 = vshrl.u32 %v3258, 7
        %v3260 = vsub.s32 0, %v3259
        %v3261 = vrot.slane %v3257, %v3260
        %v3262 = vmul.f32 %v3255, %v3261
        %v3263 = vmul.f32 %v3256, %v3261
        %v3264 = vadd.f32 %v3245, %v3262
        %v3265 = vadd.f32 %v3246, %v3263
        %3266 = vrot.lane.b32.xlu0 %v3216, 8
        %v3267 = vpop.permute.xlu0 %3266
        %3268 = vrot.lane.b32.xlu0 %v3221, 8
        %v3269 = vpop.permute.xlu0 %3268
        %3270 = vrot.lane.b32.xlu0 %v3219, 8
        %v3271 = vpop.permute.xlu0 %3270
        %3272 = vrot.lane.b32.xlu0 %v3223, 8
        %v3273 = vpop.permute.xlu0 %3272
        %v3274 = vsel %vm455, %v3271, %v3267
        %v3275 = vsel %vm455, %v3273, %v3269
        %v3276 = vld [vmem:[%s2 + $0x25] sm:$0x1]
        %v3277 = vlaneseq
        %v3278 = vshrl.u32 %v3277, 7
        %v3279 = vsub.s32 0, %v3278
        %v3280 = vrot.slane %v3276, %v3279
        %v3281 = vmul.f32 %v3274, %v3280
        %v3282 = vmul.f32 %v3275, %v3280
        %v3283 = vadd.f32 %v3264, %v3281
        %v3284 = vadd.f32 %v3265, %v3282
        %v3285 = vld [vmem:[%s2 + $0x26] sm:$0x1]
        %v3286 = vlaneseq
        %v3287 = vshrl.u32 %v3286, 7
        %v3288 = vsub.s32 0, %v3287
        %v3289 = vrot.slane %v3285, %v3288
        %v3290 = vmul.f32 %v3206, %v3289
        %v3291 = vmul.f32 %v2580, %v3289
        %v3292 = vmul.f32 %v3208, %v3289
        %v3296 = vrot.slane %v3290, 5
        %v3297 = vrot.slane %v3291, 5
        %v3298 = vsel %vm391, %v3296, %v3297
        %v3299 = vrot.slane %v3292, 5
        %v3300 = vsel %vm391, %v3297, %v3299
        %v3303 = vadd.f32 %v3283, %v3298
        %v3304 = vadd.f32 %v3284, %v3300
        %3305 = vrot.lane.b32.xlu0 %v3216, 120
        %v3306 = vpop.permute.xlu0 %3305
        %3307 = vrot.lane.b32.xlu0 %v3221, 120
        %v3308 = vpop.permute.xlu0 %3307
        %3309 = vrot.lane.b32.xlu0 %v3219, 120
        %v3310 = vpop.permute.xlu0 %3309
        %3311 = vrot.lane.b32.xlu0 %v3223, 120
        %v3312 = vpop.permute.xlu0 %3311
        %v3313 = vsel %vm484, %v3306, %v3310
        %v3314 = vsel %vm484, %v3308, %v3312
        %v3315 = vld [vmem:[%s2 + $0x27] sm:$0x1]
        %v3316 = vlaneseq
        %v3317 = vshrl.u32 %v3316, 7
        %v3318 = vsub.s32 0, %v3317
        %v3319 = vrot.slane %v3315, %v3318
        %v3320 = vmul.f32 %v3313, %v3319
        %v3321 = vmul.f32 %v3314, %v3319
        %v3322 = vadd.f32 %v3303, %v3320
        %v3323 = vadd.f32 %v3304, %v3321
        %3324 = vrot.lane.b32.xlu0 %v3216, 112
        %v3325 = vpop.permute.xlu0 %3324
        %3326 = vrot.lane.b32.xlu0 %v3221, 112
        %v3327 = vpop.permute.xlu0 %3326
        %3328 = vrot.lane.b32.xlu0 %v3219, 112
        %v3329 = vpop.permute.xlu0 %3328
        %3330 = vrot.lane.b32.xlu0 %v3223, 112
        %v3331 = vpop.permute.xlu0 %3330
        %v3332 = vsel %vm504, %v3325, %v3329
        %v3333 = vsel %vm504, %v3327, %v3331
        %v3334 = vld [vmem:[%s2 + $0x28] sm:$0x1]
        %v3335 = vlaneseq
        %v3336 = vshrl.u32 %v3335, 7
        %v3337 = vsub.s32 0, %v3336
        %v3338 = vrot.slane %v3334, %v3337
        %v3339 = vmul.f32 %v3332, %v3338
        %v3340 = vmul.f32 %v3333, %v3338
        %v3341 = vadd.f32 %v3322, %v3339
        %v3342 = vadd.f32 %v3323, %v3340
        %3343 = vrot.lane.b32.xlu0 %v3216, 104
        %v3344 = vpop.permute.xlu0 %3343
        %3345 = vrot.lane.b32.xlu0 %v3221, 104
        %v3346 = vpop.permute.xlu0 %3345
        %3347 = vrot.lane.b32.xlu0 %v3219, 104
        %v3348 = vpop.permute.xlu0 %3347
        %3349 = vrot.lane.b32.xlu0 %v3223, 104
        %v3350 = vpop.permute.xlu0 %3349
        %v3351 = vsel %vm524, %v3344, %v3348
        %v3352 = vsel %vm524, %v3346, %v3350
        %v3353 = vld [vmem:[%s2 + $0x29] sm:$0x1]
        %v3354 = vlaneseq
        %v3355 = vshrl.u32 %v3354, 7
        %v3356 = vsub.s32 0, %v3355
        %v3357 = vrot.slane %v3353, %v3356
        %v3358 = vmul.f32 %v3351, %v3357
        %v3359 = vmul.f32 %v3352, %v3357
        %v3360 = vadd.f32 %v3341, %v3358
        %v3361 = vadd.f32 %v3342, %v3359
        %v3362 = vld [vmem:[#allocation2] sm:$0xc0]
        %v3363 = vld [vmem:[#allocation2 + $0x8] sm:$0xc0]
        %v3364 = vld [vmem:[#allocation2 + $0x20] sm:$0x3f]
        %v3365 = vld [vmem:[#allocation2 + $0x28] sm:$0x3f]
        %v3370 = vrot.slane %v3362, 6
        %v3371 = vrot.slane %v2580, 6
        %v3372 = vsel %vm1332, %v3370, %v3371
        %v3373 = vrot.slane %v3363, 6
        %v3374 = vrot.slane %v2581, 6
        %v3375 = vsel %vm1332, %v3373, %v3374
        %v3376 = vrot.slane %v3364, 6
        %v3377 = vsel %vm1332, %v3371, %v3376
        %v3378 = vrot.slane %v3365, 6
        %v3379 = vsel %vm1332, %v3374, %v3378
        %3384 = vrot.lane.b32.xlu0 %v3372, 24
        %v3385 = vpop.permute.xlu0 %3384
        %3386 = vrot.lane.b32.xlu0 %v3377, 24
        %v3387 = vpop.permute.xlu0 %3386
        %3388 = vrot.lane.b32.xlu0 %v3375, 24
        %v3389 = vpop.permute.xlu0 %3388
        %3390 = vrot.lane.b32.xlu0 %v3379, 24
        %v3391 = vpop.permute.xlu0 %3390
        %v3392 = vsel %vm415, %v3389, %v3385
        %v3393 = vsel %vm415, %v3391, %v3387
        %v3394 = vld [vmem:[%s2 + $0x2a] sm:$0x1]
        %v3395 = vlaneseq
        %v3396 = vshrl.u32 %v3395, 7
        %v3397 = vsub.s32 0, %v3396
        %v3398 = vrot.slane %v3394, %v3397
        %v3399 = vmul.f32 %v3392, %v3398
        %v3400 = vmul.f32 %v3393, %v3398
        %v3401 = vadd.f32 %v3360, %v3399
        %v3402 = vadd.f32 %v3361, %v3400
        %3403 = vrot.lane.b32.xlu0 %v3372, 16
        %v3404 = vpop.permute.xlu0 %3403
        %3405 = vrot.lane.b32.xlu0 %v3377, 16
        %v3406 = vpop.permute.xlu0 %3405
        %3407 = vrot.lane.b32.xlu0 %v3375, 16
        %v3408 = vpop.permute.xlu0 %3407
        %3409 = vrot.lane.b32.xlu0 %v3379, 16
        %v3410 = vpop.permute.xlu0 %3409
        %v3411 = vsel %vm435, %v3408, %v3404
        %v3412 = vsel %vm435, %v3410, %v3406
        %v3413 = vld [vmem:[%s2 + $0x2b] sm:$0x1]
        %v3414 = vlaneseq
        %v3415 = vshrl.u32 %v3414, 7
        %v3416 = vsub.s32 0, %v3415
        %v3417 = vrot.slane %v3413, %v3416
        %v3418 = vmul.f32 %v3411, %v3417
        %v3419 = vmul.f32 %v3412, %v3417
        %v3420 = vadd.f32 %v3401, %v3418
        %v3421 = vadd.f32 %v3402, %v3419
        %3422 = vrot.lane.b32.xlu0 %v3372, 8
        %v3423 = vpop.permute.xlu0 %3422
        %3424 = vrot.lane.b32.xlu0 %v3377, 8
        %v3425 = vpop.permute.xlu0 %3424
        %3426 = vrot.lane.b32.xlu0 %v3375, 8
        %v3427 = vpop.permute.xlu0 %3426
        %3428 = vrot.lane.b32.xlu0 %v3379, 8
        %v3429 = vpop.permute.xlu0 %3428
        %v3430 = vsel %vm455, %v3427, %v3423
        %v3431 = vsel %vm455, %v3429, %v3425
        %v3432 = vld [vmem:[%s2 + $0x2c] sm:$0x1]
        %v3433 = vlaneseq
        %v3434 = vshrl.u32 %v3433, 7
        %v3435 = vsub.s32 0, %v3434
        %v3436 = vrot.slane %v3432, %v3435
        %v3437 = vmul.f32 %v3430, %v3436
        %v3438 = vmul.f32 %v3431, %v3436
        %v3439 = vadd.f32 %v3420, %v3437
        %v3440 = vadd.f32 %v3421, %v3438
        %v3441 = vld [vmem:[%s2 + $0x2d] sm:$0x1]
        %v3442 = vlaneseq
        %v3443 = vshrl.u32 %v3442, 7
        %v3444 = vsub.s32 0, %v3443
        %v3445 = vrot.slane %v3441, %v3444
        %v3446 = vmul.f32 %v3362, %v3445
        %v3447 = vmul.f32 %v2580, %v3445
        %v3448 = vmul.f32 %v3364, %v3445
        %v3452 = vrot.slane %v3446, 6
        %v3453 = vrot.slane %v3447, 6
        %v3454 = vsel %vm1332, %v3452, %v3453
        %v3455 = vrot.slane %v3448, 6
        %v3456 = vsel %vm1332, %v3453, %v3455
        %v3459 = vadd.f32 %v3439, %v3454
        %v3460 = vadd.f32 %v3440, %v3456
        %3461 = vrot.lane.b32.xlu0 %v3372, 120
        %v3462 = vpop.permute.xlu0 %3461
        %3463 = vrot.lane.b32.xlu0 %v3377, 120
        %v3464 = vpop.permute.xlu0 %3463
        %3465 = vrot.lane.b32.xlu0 %v3375, 120
        %v3466 = vpop.permute.xlu0 %3465
        %3467 = vrot.lane.b32.xlu0 %v3379, 120
        %v3468 = vpop.permute.xlu0 %3467
        %v3469 = vsel %vm484, %v3462, %v3466
        %v3470 = vsel %vm484, %v3464, %v3468
        %v3471 = vld [vmem:[%s2 + $0x2e] sm:$0x1]
        %v3472 = vlaneseq
        %v3473 = vshrl.u32 %v3472, 7
        %v3474 = vsub.s32 0, %v3473
        %v3475 = vrot.slane %v3471, %v3474
        %v3476 = vmul.f32 %v3469, %v3475
        %v3477 = vmul.f32 %v3470, %v3475
        %v3478 = vadd.f32 %v3459, %v3476
        %v3479 = vadd.f32 %v3460, %v3477
        %3480 = vrot.lane.b32.xlu0 %v3372, 112
        %v3481 = vpop.permute.xlu0 %3480
        %3482 = vrot.lane.b32.xlu0 %v3377, 112
        %v3483 = vpop.permute.xlu0 %3482
        %3484 = vrot.lane.b32.xlu0 %v3375, 112
        %v3485 = vpop.permute.xlu0 %3484
        %3486 = vrot.lane.b32.xlu0 %v3379, 112
        %v3487 = vpop.permute.xlu0 %3486
        %v3488 = vsel %vm504, %v3481, %v3485
        %v3489 = vsel %vm504, %v3483, %v3487
        %v3490 = vld [vmem:[%s2 + $0x2f] sm:$0x1]
        %v3491 = vlaneseq
        %v3492 = vshrl.u32 %v3491, 7
        %v3493 = vsub.s32 0, %v3492
        %v3494 = vrot.slane %v3490, %v3493
        %v3495 = vmul.f32 %v3488, %v3494
        %v3496 = vmul.f32 %v3489, %v3494
        %v3497 = vadd.f32 %v3478, %v3495
        %v3498 = vadd.f32 %v3479, %v3496
        %3499 = vrot.lane.b32.xlu0 %v3372, 104
        %v3500 = vpop.permute.xlu0 %3499
        %3501 = vrot.lane.b32.xlu0 %v3377, 104
        %v3502 = vpop.permute.xlu0 %3501
        %3503 = vrot.lane.b32.xlu0 %v3375, 104
        %v3504 = vpop.permute.xlu0 %3503
        %3505 = vrot.lane.b32.xlu0 %v3379, 104
        %v3506 = vpop.permute.xlu0 %3505
        %v3507 = vsel %vm524, %v3500, %v3504
        %v3508 = vsel %vm524, %v3502, %v3506
        %v3509 = vld [vmem:[%s2 + $0x30] sm:$0x1]
        %v3510 = vlaneseq
        %v3511 = vshrl.u32 %v3510, 7
        %v3512 = vsub.s32 0, %v3511
        %v3513 = vrot.slane %v3509, %v3512
        %v3514 = vmul.f32 %v3507, %v3513
        %v3515 = vmul.f32 %v3508, %v3513
        %v3516 = vadd.f32 %v3497, %v3514
        %v3517 = vadd.f32 %v3498, %v3515
        %v3518 = vld [vmem:[%s3 + $0x4] sm:$0x1]
        %v3519 = vlaneseq
        %v3520 = vshrl.u32 %v3519, 7
        %v3521 = vsub.s32 0, %v3520
        %v3522 = vrot.slane %v3518, %v3521
        %v3523 = vadd.f32 %v3516, %v3522
        %v3524 = vadd.f32 %v3517, %v3522
        %v3525 = vld [vmem:[%s3 + $0x5] sm:$0x1]
        %v3526 = vlaneseq
        %v3527 = vshrl.u32 %v3526, 7
        %v3528 = vsub.s32 0, %v3527
        %v3529 = vrot.slane %v3525, %v3528
        %v3530 = vmul.f32 %v3523, %v3529
        %v3531 = vmul.f32 %v3524, %v3529
        %v3532 = vadd.f32 %v381, %v3530
        %v3533 = vadd.f32 %v382, %v3531
        %3534 = vst [vmem:[%s379] sm:$0xff] %v3532
        %3535 = vst [vmem:[%s379 + $0x8] sm:$0xff] %v3533
        %s3536 = sand.u32 %s229, 1
        %s3537 = scalar_lea.sflag [#allocation5], %s3536
        %s3538 = sand.u32 %s229, 1
        %s3539 = smul.addr %s3538, 16
        %s3540 = scalar_lea.vmem [#allocation9], %s3539
        // Predicated region
        $region69: #{tpu_custom_call.1} parent=55 // pred_check
          %p3541 = pneg %p239
        $region70: #{tpu_custom_call.1} parent=55 // pred_check_branch
          %3543 = sbr.rel (%p3541) target = $region72
        $region71: #{tpu_custom_call.1} parent=55 // pred_region
          %s3545 = ssub.s32 256, 256
          %3546 = vsyncadd %s3537, %s3545
          %s3547 = smul.addr %s27, 2
          %s3548 = smul.addr %s3547, 128
          %s3549 = scalar_lea.hbm %s9, %s3548
          %s3550 = sshll.u32 %s3540, 4
          %s3551 = int_to_ptr.vmem [resolvable:$true] %s3550
          %3556 = dma.vmem_to_hbm [thread:$0]  %s3551, 256, %s3549, %s3537, 128, 128, 8
        $region72: #{tpu_custom_call.1} parent=55 // pred_fallthru
          _
      $region56: #{tpu_custom_call.1} parent=5 // pred_fallthru
        _
      %p3557 = scmp.le.s32.totalorder 2, %s22
      // Predicated region
      $region73: #{tpu_custom_call.1} parent=5 // pred_check
        %p3558 = pneg %p3557
      $region74: #{tpu_custom_call.1} parent=5 // pred_check_branch
        %3560 = sbr.rel (%p3558) target = $region76
      $region75: #{tpu_custom_call.1} parent=5 // pred_region
        %s3561 = ssub.s32 %s22, 2
        // Predicated region
        $region77: #{tpu_custom_call.1} parent=75 // pred_check
          %p3562 = pneg %p245
        $region78: #{tpu_custom_call.1} parent=75 // pred_check_branch
          %3564 = sbr.rel (%p3562) target = $region80
        $region79: #{tpu_custom_call.1} parent=75 // pred_region
          %s3565 = sand.u32 %s230, 1
          %s3566 = scalar_lea.sflag [#allocation5], %s3565
          %s3567 = sand.u32 %s230, 1
          %s3568 = smul.addr %s3567, 16
          %s3569 = scalar_lea.vmem [#allocation9], %s3568
          %3570 = dma.done %s3566, 256
        $region80: #{tpu_custom_call.1} parent=75 // pred_fallthru
          _
      $region76: #{tpu_custom_call.1} parent=5 // pred_fallthru
        _
    $region6: #{tpu_custom_call.1} parent=1 // loop_footer
      %s26 = sadd.s32 1, %s22
    $region7: #{tpu_custom_call.1} parent=1 // loop_footer_branch
      %21 = sbr.rel target = $region3
    $region8: #{tpu_custom_call.1} parent=1 // loop_exit
      _
    %3571 = vsyncpa [#allocation4], 1
    %s3572 = scalar_lea.sflag [#allocation4], 1
    %3573 = vsyncpa %s3572, 1
    %3574 = vsyncpa [#allocation7], 1
    %3575 = vsyncpa [#allocation5], 1
    %s3576 = scalar_lea.sflag [#allocation5], 1
    %3577 = vsyncpa %s3576, 1

</llo_original>
